<compile_context>
chip_gen: v6e
topology: v6e:2x2x1
jax: 0.10.0
libtpu: 0.0.40
codegen_flags: <defaults>
</compile_context>

<pallas_src>
import math

import jax
import jax.numpy as jnp
from jax import lax
from jax.experimental import pallas as pl
from jax.experimental.pallas import tpu as pltpu

# fp32-exact matmuls everywhere (matches the fp32 torch reference; trivial cost at this size)
jax.config.update("jax_default_matmul_precision", "highest")

# ---- model hyper-parameters (small, consistent with the module) ----
BATCH = 2
SEQ = 8
D_MODEL = 32
D_FF = 64
H = 4
D_K = D_MODEL // H
BS = BATCH * SEQ          # 16 folded (batch, seq) rows
HBS = H * BS              # 64 stacked (head, batch, seq) score columns
EPS = 1e-6                # LayerNormalization eps = 10**-6
SCALE = 1.0 / math.sqrt(D_K)
PREC = jax.lax.Precision.HIGHEST


def _layernorm(x):
    # Matches LayerNormalization: mean / *unbiased* std over last dim,
    # (x - mean) / (std + eps), alpha = 1, bias = 0.  Exact divide (accuracy first).
    mean = jnp.mean(x, axis=-1, keepdims=True)
    var = jnp.sum((x - mean) ** 2, axis=-1, keepdims=True) / (x.shape[-1] - 1)
    return (x - mean) / (jnp.sqrt(var) + EPS)


def _mm(a, b):
    return jnp.dot(a, b, precision=PREC, preferred_element_type=jnp.float32)


def encoder_block_kernel(x_ref, bias_ref, ca_ref, cb_ref, cbias_ref, o_ref):
    x = x_ref[...]                                   # (B*S, D)      folded activations
    bias = bias_ref[...]                             # (B*S, H*B*S)  additive mask bias
    ca = ca_ref[...]                                 # (D, 192)   [Wqkv^T | Wo^T | W1^T]
    cb = cb_ref[...]                                 # (64, 128)  [W2^T | head sel | sum mask]
    cbias = cbias_ref[...]                           # (1, 128)   [b1 | b2 | pad]

    # static (compile-time) slicing of the packed constant slabs
    wqkv = ca[:, :3 * D_MODEL]                       # (D, 3D)
    wo_t = ca[:, 3 * D_MODEL:4 * D_MODEL]            # (D, D)
    w1_t = ca[:, 4 * D_MODEL:4 * D_MODEL + D_FF]     # (D, D_FF)
    w2_t = cb[:, :D_MODEL]                           # (D_FF, D)
    vsel = cb[:, D_MODEL:2 * D_MODEL]                # (H*B*S, D) head selector (0/1)
    sum_mask = cb[:, 2 * D_MODEL:]                   # (H*B*S, H*B*S) block-membership
    b1 = cbias[:, :D_FF]                             # (1, D_FF)
    b2 = cbias[:, D_FF:D_FF + D_MODEL]               # (1, D)

    # ---------- residual connection 0: pre-LN + multi-head self-attention ----------
    xn = _layernorm(x)
    qkv = _mm(xn, wqkv)                              # (B*S, 3D) fused Q|K|V projection
    q = qkv[:, :D_MODEL]
    k = qkv[:, D_MODEL:2 * D_MODEL]
    v = qkv[:, 2 * D_MODEL:]

    # Batch-and-head block-diagonal trick: replicate K/V once per head along sublanes and
    # zero everything outside each head's D_K column slice.  One matmul then yields every
    # (head, batch) score block side by side; cross-batch blocks are garbage and are killed
    # by the precomputed -1e9 additive bias.
    kbd = jnp.tile(k, (H, 1)) * vsel                 # (H*B*S, D)
    vbd = jnp.tile(v, (H, 1)) * vsel                 # (H*B*S, D)

    scores = lax.dot_general(q, kbd, (((1,), (1,)), ((), ())),
                             precision=PREC, preferred_element_type=jnp.float32)
    scores = scores * SCALE + bias                   # (B*S, H*B*S)

    # Softmax per (head, batch) block.  A global row max is a valid shift (shift-invariant;
    # masked entries sit at ~-1e9 and underflow to exactly 0); per-block denominators come
    # from one matmul with the block-membership matrix.  Exact divide (no approx recip).
    m = jnp.max(scores, axis=-1, keepdims=True)
    p = jnp.exp(scores - m)
    denom = _mm(p, sum_mask)                         # per-block row sums, replicated
    p = p / denom

    attn = _mm(p, vbd)                               # (B*S, D) heads already concatenated
    x1 = x + _mm(attn, wo_t)                         # dropout == identity (eval mode)

    # ---------- residual connection 1: pre-LN + feed-forward ----------
    # TODO(synk): the PyTorch module passes `lambda x: self.feed_forward` (module object,
    # never applied) which would crash at runtime; we implement the intended FFN sublayer.
    xn2 = _layernorm(x1)
    h1 = jnp.maximum(_mm(xn2, w1_t) + b1, 0.0)
    o_ref[...] = x1 + _mm(h1, w2_t) + b2             # plain (B*S, D) store


def prepare_encoder_params(params):
    """One-time packing of all call-invariant operands into 3 lane-dense VMEM slabs.
    Call ONCE at init; do not re-run per forward call."""
    wq, wk, wv, wo, w1, b1, w2, b2 = params
    assert D_FF == HBS, "packing of const_b relies on D_FF == H*B*S"

    wqkv = jnp.concatenate([wq.T, wk.T, wv.T], axis=1)                 # (D, 3D)

    row_head = jnp.arange(HBS) // BS                                   # head of stacked row
    col_head = jnp.arange(D_MODEL) // D_K                              # head of model column
    vsel = (row_head[:, None] == col_head[None, :]).astype(jnp.float32)       # (H*B*S, D)
    sum_mask = (row_head[:, None] == row_head[None, :]).astype(jnp.float32)   # (H*B*S, H*B*S)

    const_a = jnp.concatenate([wqkv, wo.T, w1.T], axis=1)              # (32, 192)
    const_b = jnp.concatenate([w2.T, vsel, sum_mask], axis=1)          # (64, 128)
    const_bias = jnp.concatenate(
        [b1.reshape(1, D_FF), b2.reshape(1, D_MODEL),
         jnp.zeros((1, 128 - D_FF - D_MODEL), jnp.float32)], axis=1)   # (1, 128)
    return const_a, const_b, const_bias


def _attention_bias(mask, B, S):
    """(B,1,S,S) multiplicative src_mask -> (B*S, H*B*S) additive bias: -1e9 on masked
    keys and on every cross-batch block (required because batch is folded)."""
    same_key = mask[:, 0] != 0                                          # (B, S, S)
    same_batch = jnp.eye(B, dtype=bool)                                 # (B, B)
    valid = same_batch[:, None, :, None] & same_key[:, :, None, :]      # (B, S, B, S)
    bias_bb = jnp.where(valid.reshape(B * S, B * S), 0.0, -1e9).astype(jnp.float32)
    return jnp.tile(bias_bb, (1, H))                                    # (B*S, H*B*S)


@jax.jit
def encoder_block(x, mask, prepared):
    const_a, const_b, const_bias = prepared
    B, S, D = x.shape
    x_flat = x.reshape(B * S, D)
    bias = _attention_bias(mask, B, S)

    vmem = pl.BlockSpec(memory_space=pltpu.MemorySpace.VMEM)   # whole array, VMEM resident
    out = pl.pallas_call(
        encoder_block_kernel,
        out_shape=jax.ShapeDtypeStruct((B * S, D), jnp.float32),
        in_specs=[vmem, vmem, vmem, vmem, vmem],
        out_specs=vmem,
    )(x_flat, bias, const_a, const_b, const_bias)
    return out.reshape(B, S, D)


def reference(x, mask, params):
    """Pure-JAX mirror of the PyTorch forward (eval mode) for validation."""
    wq, wk, wv, wo, w1, b1, w2, b2 = params
    B, S, D = x.shape

    def ln(t):
        mean = t.mean(-1, keepdims=True)
        std = jnp.sqrt(((t - mean) ** 2).sum(-1, keepdims=True) / (t.shape[-1] - 1))
        return (t - mean) / (std + EPS)

    def split(t):
        return t.reshape(B, S, H, D_K).transpose(0, 2, 1, 3)

    xn = ln(x)
    qh, kh, vh = split(xn @ wq.T), split(xn @ wk.T), split(xn @ wv.T)
    scores = (qh @ kh.transpose(0, 1, 3, 2)) / math.sqrt(D_K)
    scores = jnp.where(mask == 0, -1e9, scores)            # (B,1,S,S) broadcasts over heads
    p = jax.nn.softmax(scores, axis=-1)
    o = (p @ vh).transpose(0, 2, 1, 3).reshape(B, S, D)
    x1 = x + o @ wo.T
    ff = jnp.maximum(ln(x1) @ w1.T + b1, 0.0) @ w2.T + b2
    return x1 + ff


if __name__ == "__main__":
    key = jax.random.PRNGKey(0)
    ks = jax.random.split(key, 8)

    x = jax.random.normal(ks[0], (BATCH, SEQ, D_MODEL), jnp.float32)

    # key-padding style src_mask: batch 0 uses all 8 tokens, batch 1 only 6.
    lengths = jnp.array([SEQ, SEQ - 2])
    key_valid = (jnp.arange(SEQ)[None, :] < lengths[:, None]).astype(jnp.float32)
    mask = jnp.broadcast_to(key_valid[:, None, None, :], (BATCH, 1, SEQ, SEQ))
    mask = jnp.asarray(mask, jnp.float32)

    def init(k, shape, fan_in):
        return jax.random.normal(k, shape, jnp.float32) / math.sqrt(fan_in)

    params = (
        init(ks[1], (D_MODEL, D_MODEL), D_MODEL),   # w_q
        init(ks[2], (D_MODEL, D_MODEL), D_MODEL),   # w_k
        init(ks[3], (D_MODEL, D_MODEL), D_MODEL),   # w_v
        init(ks[4], (D_MODEL, D_MODEL), D_MODEL),   # w_o
        init(ks[5], (D_FF, D_MODEL), D_MODEL),      # fc1.weight
        jnp.zeros((D_FF,), jnp.float32),            # fc1.bias
        init(ks[6], (D_MODEL, D_FF), D_FF),         # fc2.weight
        jnp.zeros((D_MODEL,), jnp.float32),         # fc2.bias
    )

    prepared = prepare_encoder_params(params)       # one-time, not per call

    out = encoder_block(x, mask, prepared)
    out = jax.block_until_ready(out)

    ref = reference(x, mask, params)
    assert out.shape == (BATCH, SEQ, D_MODEL)
    err = float(jnp.max(jnp.abs(out - ref)))
    assert jnp.allclose(out, ref, atol=1e-3, rtol=1e-3), f"max abs err {err}"

    print("KERNEL_OK")
</pallas_src>

<mosaic_0001>
module attributes {stable_mosaic.version = 11 : i64} {
  func.func @encoder_block_kernel(%arg0: memref<16x32xf32, #tpu.memory_space<vmem>>, %arg1: memref<16x64xf32, #tpu.memory_space<vmem>>, %arg2: memref<32x192xf32, #tpu.memory_space<vmem>>, %arg3: memref<64x128xf32, #tpu.memory_space<vmem>>, %arg4: memref<1x128xf32, #tpu.memory_space<vmem>>, %arg5: memref<16x32xf32, #tpu.memory_space<vmem>>) attributes {dimension_semantics = [], scalar_prefetch = 0 : i64, scratch_operands = 0 : i64, tpu.core_type = #tpu.core_type<tc>} {
    %c0 = arith.constant 0 : index
    %c0_0 = arith.constant 0 : index
    %0 = vector.load %arg0[%c0, %c0_0] : memref<16x32xf32, #tpu.memory_space<vmem>>, vector<16x32xf32>
    %c0_1 = arith.constant 0 : index
    %c0_2 = arith.constant 0 : index
    %1 = vector.load %arg1[%c0_1, %c0_2] : memref<16x64xf32, #tpu.memory_space<vmem>>, vector<16x64xf32>
    %c0_3 = arith.constant 0 : index
    %c0_4 = arith.constant 0 : index
    %2 = vector.load %arg2[%c0_3, %c0_4] : memref<32x192xf32, #tpu.memory_space<vmem>>, vector<32x192xf32>
    %c0_5 = arith.constant 0 : index
    %c0_6 = arith.constant 0 : index
    %3 = vector.load %arg3[%c0_5, %c0_6] : memref<64x128xf32, #tpu.memory_space<vmem>>, vector<64x128xf32>
    %c0_7 = arith.constant 0 : index
    %c0_8 = arith.constant 0 : index
    %4 = vector.load %arg4[%c0_7, %c0_8] : memref<1x128xf32, #tpu.memory_space<vmem>>, vector<1x128xf32>
    %5 = vector.extract_strided_slice %2 {offsets = [0, 0], sizes = [32, 96], strides = [1, 1]} : vector<32x192xf32> to vector<32x96xf32>
    %6 = vector.extract_strided_slice %2 {offsets = [0, 96], sizes = [32, 32], strides = [1, 1]} : vector<32x192xf32> to vector<32x32xf32>
    %7 = vector.extract_strided_slice %2 {offsets = [0, 128], sizes = [32, 64], strides = [1, 1]} : vector<32x192xf32> to vector<32x64xf32>
    %8 = vector.extract_strided_slice %3 {offsets = [0, 0], sizes = [64, 32], strides = [1, 1]} : vector<64x128xf32> to vector<64x32xf32>
    %9 = vector.extract_strided_slice %3 {offsets = [0, 32], sizes = [64, 32], strides = [1, 1]} : vector<64x128xf32> to vector<64x32xf32>
    %10 = vector.extract_strided_slice %3 {offsets = [0, 64], sizes = [64, 64], strides = [1, 1]} : vector<64x128xf32> to vector<64x64xf32>
    %11 = vector.extract_strided_slice %4 {offsets = [0, 0], sizes = [1, 64], strides = [1, 1]} : vector<1x128xf32> to vector<1x64xf32>
    %12 = vector.extract_strided_slice %4 {offsets = [0, 64], sizes = [1, 32], strides = [1, 1]} : vector<1x128xf32> to vector<1x32xf32>
    %cst = arith.constant dense<0.000000e+00> : vector<16xf32>
    %13 = vector.multi_reduction <add>, %0, %cst [1] : vector<16x32xf32> to vector<16xf32>
    %14 = vector.shape_cast %13 : vector<16xf32> to vector<16x1xf32>
    %cst_9 = arith.constant 3.200000e+01 : f32
    %15 = vector.broadcast %cst_9 : f32 to vector<16x1xf32>
    %16 = arith.divf %14, %15 : vector<16x1xf32>
    %17 = vector.broadcast %16 : vector<16x1xf32> to vector<16x32xf32>
    %18 = arith.subf %0, %17 : vector<16x32xf32>
    %19 = arith.mulf %18, %18 : vector<16x32xf32>
    %cst_10 = arith.constant dense<0.000000e+00> : vector<16xf32>
    %20 = vector.multi_reduction <add>, %19, %cst_10 [1] : vector<16x32xf32> to vector<16xf32>
    %21 = vector.shape_cast %20 : vector<16xf32> to vector<16x1xf32>
    %cst_11 = arith.constant 3.100000e+01 : f32
    %22 = vector.broadcast %cst_11 : f32 to vector<16x1xf32>
    %23 = arith.divf %21, %22 : vector<16x1xf32>
    %24 = vector.broadcast %16 : vector<16x1xf32> to vector<16x32xf32>
    %25 = arith.subf %0, %24 : vector<16x32xf32>
    %26 = math.sqrt %23 : vector<16x1xf32>
    %cst_12 = arith.constant 9.99999997E-7 : f32
    %27 = vector.broadcast %cst_12 : f32 to vector<16x1xf32>
    %28 = arith.addf %26, %27 : vector<16x1xf32>
    %29 = vector.broadcast %28 : vector<16x1xf32> to vector<16x32xf32>
    %30 = arith.divf %25, %29 : vector<16x32xf32>
    %cst_13 = arith.constant dense<0.000000e+00> : vector<16x96xf32>
    %31 = tpu.matmul %30, %5, %cst_13 {dimension_numbers = #tpu.dot_dimension_numbers<[1], [0], [0], [1], [0, 0, 1, 1], [], []>, precision = #tpu.contract_precision<fp32>} : vector<16x32xf32>, vector<32x96xf32>, vector<16x96xf32> -> vector<16x96xf32>
    %32 = vector.extract_strided_slice %31 {offsets = [0, 0], sizes = [16, 32], strides = [1, 1]} : vector<16x96xf32> to vector<16x32xf32>
    %33 = vector.extract_strided_slice %31 {offsets = [0, 32], sizes = [16, 32], strides = [1, 1]} : vector<16x96xf32> to vector<16x32xf32>
    %34 = vector.extract_strided_slice %31 {offsets = [0, 64], sizes = [16, 32], strides = [1, 1]} : vector<16x96xf32> to vector<16x32xf32>
    %35 = tpu.concatenate %33, %33, %33, %33 in 0 : vector<16x32xf32>, vector<16x32xf32>, vector<16x32xf32>, vector<16x32xf32> -> vector<64x32xf32>
    %36 = arith.mulf %35, %9 : vector<64x32xf32>
    %37 = tpu.concatenate %34, %34, %34, %34 in 0 : vector<16x32xf32>, vector<16x32xf32>, vector<16x32xf32>, vector<16x32xf32> -> vector<64x32xf32>
    %38 = arith.mulf %37, %9 : vector<64x32xf32>
    %cst_14 = arith.constant dense<0.000000e+00> : vector<16x64xf32>
    %39 = tpu.matmul %32, %36, %cst_14 {dimension_numbers = #tpu.dot_dimension_numbers<[1], [1], [0], [0], [0, 0, 1, 0], [], []>, precision = #tpu.contract_precision<fp32>} : vector<16x32xf32>, vector<64x32xf32>, vector<16x64xf32> -> vector<16x64xf32>
    %cst_15 = arith.constant 0.353553385 : f32
    %40 = vector.broadcast %cst_15 : f32 to vector<16x64xf32>
    %41 = arith.mulf %39, %40 : vector<16x64xf32>
    %42 = arith.addf %41, %1 : vector<16x64xf32>
    %cst_16 = arith.constant dense<0xFF800000> : vector<16xf32>
    %43 = vector.multi_reduction <maximumf>, %42, %cst_16 [1] : vector<16x64xf32> to vector<16xf32>
    %44 = vector.shape_cast %43 : vector<16xf32> to vector<16x1xf32>
    %45 = vector.broadcast %44 : vector<16x1xf32> to vector<16x64xf32>
    %46 = arith.subf %42, %45 : vector<16x64xf32>
    %47 = math.exp %46 : vector<16x64xf32>
    %cst_17 = arith.constant dense<0.000000e+00> : vector<16x64xf32>
    %48 = tpu.matmul %47, %10, %cst_17 {dimension_numbers = #tpu.dot_dimension_numbers<[1], [0], [0], [1], [0, 0, 1, 1], [], []>, precision = #tpu.contract_precision<fp32>} : vector<16x64xf32>, vector<64x64xf32>, vector<16x64xf32> -> vector<16x64xf32>
    %49 = arith.divf %47, %48 : vector<16x64xf32>
    %cst_18 = arith.constant dense<0.000000e+00> : vector<16x32xf32>
    %50 = tpu.matmul %49, %38, %cst_18 {dimension_numbers = #tpu.dot_dimension_numbers<[1], [0], [0], [1], [0, 0, 1, 1], [], []>, precision = #tpu.contract_precision<fp32>} : vector<16x64xf32>, vector<64x32xf32>, vector<16x32xf32> -> vector<16x32xf32>
    %cst_19 = arith.constant dense<0.000000e+00> : vector<16x32xf32>
    %51 = tpu.matmul %50, %6, %cst_19 {dimension_numbers = #tpu.dot_dimension_numbers<[1], [0], [0], [1], [0, 0, 1, 1], [], []>, precision = #tpu.contract_precision<fp32>} : vector<16x32xf32>, vector<32x32xf32>, vector<16x32xf32> -> vector<16x32xf32>
    %52 = arith.addf %0, %51 : vector<16x32xf32>
    %cst_20 = arith.constant dense<0.000000e+00> : vector<16xf32>
    %53 = vector.multi_reduction <add>, %52, %cst_20 [1] : vector<16x32xf32> to vector<16xf32>
    %54 = vector.shape_cast %53 : vector<16xf32> to vector<16x1xf32>
    %cst_21 = arith.constant 3.200000e+01 : f32
    %55 = vector.broadcast %cst_21 : f32 to vector<16x1xf32>
    %56 = arith.divf %54, %55 : vector<16x1xf32>
    %57 = vector.broadcast %56 : vector<16x1xf32> to vector<16x32xf32>
    %58 = arith.subf %52, %57 : vector<16x32xf32>
    %59 = arith.mulf %58, %58 : vector<16x32xf32>
    %cst_22 = arith.constant dense<0.000000e+00> : vector<16xf32>
    %60 = vector.multi_reduction <add>, %59, %cst_22 [1] : vector<16x32xf32> to vector<16xf32>
    %61 = vector.shape_cast %60 : vector<16xf32> to vector<16x1xf32>
    %cst_23 = arith.constant 3.100000e+01 : f32
    %62 = vector.broadcast %cst_23 : f32 to vector<16x1xf32>
    %63 = arith.divf %61, %62 : vector<16x1xf32>
    %64 = vector.broadcast %56 : vector<16x1xf32> to vector<16x32xf32>
    %65 = arith.subf %52, %64 : vector<16x32xf32>
    %66 = math.sqrt %63 : vector<16x1xf32>
    %cst_24 = arith.constant 9.99999997E-7 : f32
    %67 = vector.broadcast %cst_24 : f32 to vector<16x1xf32>
    %68 = arith.addf %66, %67 : vector<16x1xf32>
    %69 = vector.broadcast %68 : vector<16x1xf32> to vector<16x32xf32>
    %70 = arith.divf %65, %69 : vector<16x32xf32>
    %cst_25 = arith.constant dense<0.000000e+00> : vector<16x64xf32>
    %71 = tpu.matmul %70, %7, %cst_25 {dimension_numbers = #tpu.dot_dimension_numbers<[1], [0], [0], [1], [0, 0, 1, 1], [], []>, precision = #tpu.contract_precision<fp32>} : vector<16x32xf32>, vector<32x64xf32>, vector<16x64xf32> -> vector<16x64xf32>
    %72 = vector.broadcast %11 : vector<1x64xf32> to vector<16x64xf32>
    %73 = arith.addf %71, %72 : vector<16x64xf32>
    %cst_26 = arith.constant 0.000000e+00 : f32
    %74 = vector.broadcast %cst_26 : f32 to vector<16x64xf32>
    %75 = arith.maximumf %73, %74 : vector<16x64xf32>
    %cst_27 = arith.constant dense<0.000000e+00> : vector<16x32xf32>
    %76 = tpu.matmul %75, %8, %cst_27 {dimension_numbers = #tpu.dot_dimension_numbers<[1], [0], [0], [1], [0, 0, 1, 1], [], []>, precision = #tpu.contract_precision<fp32>} : vector<16x64xf32>, vector<64x32xf32>, vector<16x32xf32> -> vector<16x32xf32>
    %77 = arith.addf %52, %76 : vector<16x32xf32>
    %78 = vector.broadcast %12 : vector<1x32xf32> to vector<16x32xf32>
    %79 = arith.addf %77, %78 : vector<16x32xf32>
    %c0_28 = arith.constant 0 : index
    %c0_29 = arith.constant 0 : index
    %80 = vector.load %arg5[%c0_28, %c0_29] : memref<16x32xf32, #tpu.memory_space<vmem>>, vector<16x32xf32>
    tpu.vector_store %arg5[%c0_28, %c0_29], %79 {strides = array<i32>} : memref<16x32xf32, #tpu.memory_space<vmem>>, vector<16x32xf32>,
    return
  }
}

</mosaic_0001>

<llo_original>
// kernel: tile.9
$region0: #{tile.9}
  %s0 = inlined_call_operand.vmem [shape: f32[16,4,16], index: 0, kind: input, shape index: {}]
  %s1 = inlined_call_operand.vmem [shape: f32[16,64], index: 1, kind: output, shape index: {}]
  $region1: #{tile.9} parent=0
    #allocation0 [shape = 'u8[65536]{0}', space=vmem, size = 0x10000, scoped, tag = 'scoped mem for input reshape']
    %s3 = sshll.u32 1, 4
    %s4 = ssub.s32 %s3, 1
    %s5 = smul.addr 4, 15
    %s6 = scalar_lea.vmem %s0, %s5
    %v7 = vld [vmem:[%s6] sm:%s4]
    %s8 = scalar_lea.vmem [#allocation0], 120
    %9 = vst [vmem:[%s8] sm:%s4] %v7
    %s10 = smul.addr 4, 14
    %s11 = scalar_lea.vmem %s0, %s10
    %v12 = vld [vmem:[%s11] sm:%s4]
    %s13 = scalar_lea.vmem [#allocation0], 112
    %14 = vst [vmem:[%s13] sm:%s4] %v12
    %s15 = smul.addr 4, 13
    %s16 = scalar_lea.vmem %s0, %s15
    %v17 = vld [vmem:[%s16] sm:%s4]
    %s18 = scalar_lea.vmem [#allocation0], 104
    %19 = vst [vmem:[%s18] sm:%s4] %v17
    %s20 = smul.addr 4, 12
    %s21 = scalar_lea.vmem %s0, %s20
    %v22 = vld [vmem:[%s21] sm:%s4]
    %s23 = scalar_lea.vmem [#allocation0], 96
    %24 = vst [vmem:[%s23] sm:%s4] %v22
    %s25 = smul.addr 4, 11
    %s26 = scalar_lea.vmem %s0, %s25
    %v27 = vld [vmem:[%s26] sm:%s4]
    %s28 = scalar_lea.vmem [#allocation0], 88
    %29 = vst [vmem:[%s28] sm:%s4] %v27
    %s30 = smul.addr 4, 10
    %s31 = scalar_lea.vmem %s0, %s30
    %v32 = vld [vmem:[%s31] sm:%s4]
    %s33 = scalar_lea.vmem [#allocation0], 80
    %34 = vst [vmem:[%s33] sm:%s4] %v32
    %s35 = smul.addr 4, 9
    %s36 = scalar_lea.vmem %s0, %s35
    %v37 = vld [vmem:[%s36] sm:%s4]
    %s38 = scalar_lea.vmem [#allocation0], 72
    %39 = vst [vmem:[%s38] sm:%s4] %v37
    %s40 = smul.addr 4, 8
    %s41 = scalar_lea.vmem %s0, %s40
    %v42 = vld [vmem:[%s41] sm:%s4]
    %s43 = scalar_lea.vmem [#allocation0], 64
    %44 = vst [vmem:[%s43] sm:%s4] %v42
    %s45 = smul.addr 4, 7
    %s46 = scalar_lea.vmem %s0, %s45
    %v47 = vld [vmem:[%s46] sm:%s4]
    %s48 = scalar_lea.vmem [#allocation0], 56
    %49 = vst [vmem:[%s48] sm:%s4] %v47
    %s50 = smul.addr 4, 6
    %s51 = scalar_lea.vmem %s0, %s50
    %v52 = vld [vmem:[%s51] sm:%s4]
    %s53 = scalar_lea.vmem [#allocation0], 48
    %54 = vst [vmem:[%s53] sm:%s4] %v52
    %s55 = smul.addr 4, 5
    %s56 = scalar_lea.vmem %s0, %s55
    %v57 = vld [vmem:[%s56] sm:%s4]
    %s58 = scalar_lea.vmem [#allocation0], 40
    %59 = vst [vmem:[%s58] sm:%s4] %v57
    %s60 = smul.addr 4, 4
    %s61 = scalar_lea.vmem %s0, %s60
    %v62 = vld [vmem:[%s61] sm:%s4]
    %s63 = scalar_lea.vmem [#allocation0], 32
    %64 = vst [vmem:[%s63] sm:%s4] %v62
    %s65 = smul.addr 4, 3
    %s66 = scalar_lea.vmem %s0, %s65
    %v67 = vld [vmem:[%s66] sm:%s4]
    %s68 = scalar_lea.vmem [#allocation0], 24
    %69 = vst [vmem:[%s68] sm:%s4] %v67
    %s70 = smul.addr 4, 2
    %s71 = scalar_lea.vmem %s0, %s70
    %v72 = vld [vmem:[%s71] sm:%s4]
    %s73 = scalar_lea.vmem [#allocation0], 16
    %74 = vst [vmem:[%s73] sm:%s4] %v72
    %s75 = scalar_lea.vmem %s0, 4
    %v76 = vld [vmem:[%s75] sm:%s4]
    %s77 = scalar_lea.vmem [#allocation0], 8
    %78 = vst [vmem:[%s77] sm:%s4] %v76
    %v79 = vld [vmem:[%s0] sm:%s4]
    %80 = vst [vmem:[#allocation0] sm:%s4] %v79
    %v81 = vld [vmem:[#allocation0] ss:$8 sm:$0xf]
    %v82 = vld [vmem:[#allocation0] ss:$8 sm:$0xf0]
    %vm83 = vcmask 1047556
    %v84 = vsel %vm83, %v82, %v81
    %vm85 = vcmask 130048
    %86 = vst.msk [vmem:[%s1] sm:$0xff] %vm85, %v84
    %s87 = scalar_lea.vmem [#allocation0], 64
    %v88 = vld [vmem:[%s87] ss:$8 sm:$0xf]
    %s89 = scalar_lea.vmem [#allocation0], 64
    %v90 = vld [vmem:[%s89] ss:$8 sm:$0xf0]
    %vm91 = vcmask 1047556
    %v92 = vsel %vm91, %v90, %v88
    %vm93 = vcmask 130048
    %s94 = scalar_lea.vmem %s1, 8
    %95 = vst.msk [vmem:[%s94] sm:$0xff] %vm93, %v92
    %s96 = scalar_lea.vmem [#allocation0], 3
    %v97 = vld [vmem:[%s96] ss:$8 sm:$0xf]
    %s98 = scalar_lea.vmem [#allocation0], 3
    %v99 = vld [vmem:[%s98] ss:$8 sm:$0xf0]
    %vm100 = vcmask 1047556
    %v101 = vsel %vm100, %v99, %v97
    %102 = vrot.lane.b32.xlu0 %v101, 48
    %v103 = vpop.permute.xlu0 %102
    %vm104 = vcmask 523648
    %105 = vst.msk [vmem:[%s1] sm:$0xff] %vm104, %v103
    %s106 = scalar_lea.vmem [#allocation0], 67
    %v107 = vld [vmem:[%s106] ss:$8 sm:$0xf]
    %s108 = scalar_lea.vmem [#allocation0], 67
    %v109 = vld [vmem:[%s108] ss:$8 sm:$0xf0]
    %vm110 = vcmask 1047556
    %v111 = vsel %vm110, %v109, %v107
    %112 = vrot.lane.b32.xlu0 %v111, 48
    %v113 = vpop.permute.xlu0 %112
    %vm114 = vcmask 523648
    %s115 = scalar_lea.vmem %s1, 8
    %116 = vst.msk [vmem:[%s115] sm:$0xff] %vm114, %v113
    %s117 = scalar_lea.vmem [#allocation0], 2
    %v118 = vld [vmem:[%s117] ss:$8 sm:$0xf]
    %s119 = scalar_lea.vmem [#allocation0], 2
    %v120 = vld [vmem:[%s119] ss:$8 sm:$0xf0]
    %vm121 = vcmask 1047556
    %v122 = vsel %vm121, %v120, %v118
    %123 = vrot.lane.b32.xlu0 %v122, 32
    %v124 = vpop.permute.xlu0 %123
    %vm125 = vcmask 392448
    %126 = vst.msk [vmem:[%s1] sm:$0xff] %vm125, %v124
    %s127 = scalar_lea.vmem [#allocation0], 66
    %v128 = vld [vmem:[%s127] ss:$8 sm:$0xf]
    %s129 = scalar_lea.vmem [#allocation0], 66
    %v130 = vld [vmem:[%s129] ss:$8 sm:$0xf0]
    %vm131 = vcmask 1047556
    %v132 = vsel %vm131, %v130, %v128
    %133 = vrot.lane.b32.xlu0 %v132, 32
    %v134 = vpop.permute.xlu0 %133
    %vm135 = vcmask 392448
    %s136 = scalar_lea.vmem %s1, 8
    %137 = vst.msk [vmem:[%s136] sm:$0xff] %vm135, %v134
    %s138 = scalar_lea.vmem [#allocation0], 1
    %v139 = vld [vmem:[%s138] ss:$8 sm:$0xf]
    %s140 = scalar_lea.vmem [#allocation0], 1
    %v141 = vld [vmem:[%s140] ss:$8 sm:$0xf0]
    %vm142 = vcmask 1047556
    %v143 = vsel %vm142, %v141, %v139
    %144 = vrot.lane.b32.xlu0 %v143, 16
    %v145 = vpop.permute.xlu0 %144
    %vm146 = vcmask 261248
    %147 = vst.msk [vmem:[%s1] sm:$0xff] %vm146, %v145
    %s148 = scalar_lea.vmem [#allocation0], 65
    %v149 = vld [vmem:[%s148] ss:$8 sm:$0xf]
    %s150 = scalar_lea.vmem [#allocation0], 65
    %v151 = vld [vmem:[%s150] ss:$8 sm:$0xf0]
    %vm152 = vcmask 1047556
    %v153 = vsel %vm152, %v151, %v149
    %154 = vrot.lane.b32.xlu0 %v153, 16
    %v155 = vpop.permute.xlu0 %154
    %vm156 = vcmask 261248
    %s157 = scalar_lea.vmem %s1, 8
    %158 = vst.msk [vmem:[%s157] sm:$0xff] %vm156, %v155

// kernel: encoder_block.1
$region0: #{encoder_block.1}
  #allocation0 [shape = 'u32[]', space=smem, size = 0x4, offset = 0x4, fixed_abs, tag = 'smem constant byte address 0x4 - core index']
  #allocation1 [shape = 'u32[144,128]{1,0:T(1,128)}', space=vmem, size = 0x12000, scoped, tag = 'internal scratch']
  %s0 = inlined_call_operand.vmem [shape: f32[16,32], index: 0, kind: input, shape index: {}]
  %s1 = inlined_call_operand.vmem [shape: f32[16,64], index: 1, kind: input, shape index: {}]
  %s2 = inlined_call_operand.vmem [shape: f32[32,192], index: 2, kind: input, shape index: {}]
  %s3 = inlined_call_operand.vmem [shape: f32[64,128], index: 3, kind: input, shape index: {}]
  %s4 = inlined_call_operand.vmem [shape: f32[1,128], index: 4, kind: input, shape index: {}]
  %s5 = inlined_call_operand.hbm [shape: f32[16,32], index: 5, kind: output, shape index: {}]
  %s6 = sld [smem:[#allocation0]]
  $region30: #{encoder_block.1} parent=0
    _
  %s8 = ssub.s32 1, %s6
  %s9 = scalar_select 0, %s8, %s6
  $region1: #{encoder_block.1} parent=0
    #allocation2 [shape = 'u8[8192]{0}', space=vmem, size = 0x2000, scoped, tag = 'output window, operand 0, single buffered']
    #allocation3 [shape = 's32[1]{0}', space=sflag, size = 0x4, scoped, tag = 'scoped memory for encoder_block.1']
    %10 = vsyncpa [#allocation3], 0
    // Predicated region
    $region2: #{encoder_block.1} parent=1 // pred_check
      _
    $region3: #{encoder_block.1} parent=1 // pred_check_branch
      %12 = sbr.rel (0) target = $region5
    $region4: #{encoder_block.1} parent=1 // pred_region
      _
    $region5: #{encoder_block.1} parent=1 // pred_fallthru
      _
    // Predicated region
    $region6: #{encoder_block.1} parent=1 // pred_check
      _
    $region7: #{encoder_block.1} parent=1 // pred_check_branch
      %14 = sbr.rel (0) target = $region9
    $region8: #{encoder_block.1} parent=1 // pred_region
      _
    $region9: #{encoder_block.1} parent=1 // pred_fallthru
      _
    // Predicated region
    $region10: #{encoder_block.1} parent=1 // pred_check
      _
    $region11: #{encoder_block.1} parent=1 // pred_check_branch
      %16 = sbr.rel (0) target = $region13
    $region12: #{encoder_block.1} parent=1 // pred_region
      _
    $region13: #{encoder_block.1} parent=1 // pred_fallthru
      _
    // Predicated region
    $region14: #{encoder_block.1} parent=1 // pred_check
      _
    $region15: #{encoder_block.1} parent=1 // pred_check_branch
      %18 = sbr.rel (0) target = $region17
    $region16: #{encoder_block.1} parent=1 // pred_region
      _
    $region17: #{encoder_block.1} parent=1 // pred_fallthru
      _
    // Predicated region
    $region18: #{encoder_block.1} parent=1 // pred_check
      _
    $region19: #{encoder_block.1} parent=1 // pred_check_branch
      %20 = sbr.rel (0) target = $region21
    $region20: #{encoder_block.1} parent=1 // pred_region
      _
    $region21: #{encoder_block.1} parent=1 // pred_fallthru
      _
    %v21 = vld [vmem:[%s0] sm:$0xff]
    %v22 = vld [vmem:[%s0 + $0x8] sm:$0xff]
    %v23 = vld [vmem:[%s1] sm:$0xff]
    %v24 = vld [vmem:[%s1 + $0x8] sm:$0xff]
    %v25 = vld [vmem:[%s2] sm:$0xff]
    %v26 = vld [vmem:[%s2 + $0x8] sm:$0xff]
    %v27 = vld [vmem:[%s2 + $0x10] sm:$0xff]
    %v28 = vld [vmem:[%s2 + $0x18] sm:$0xff]
    %v29 = vld [vmem:[%s2 + $0x20] sm:$0xff]
    %v30 = vld [vmem:[%s2 + $0x28] sm:$0xff]
    %v31 = vld [vmem:[%s2 + $0x30] sm:$0xff]
    %v32 = vld [vmem:[%s2 + $0x38] sm:$0xff]
    %v33 = vld [vmem:[%s3] sm:$0xff]
    %v34 = vld [vmem:[%s3 + $0x8] sm:$0xff]
    %v35 = vld [vmem:[%s3 + $0x10] sm:$0xff]
    %v36 = vld [vmem:[%s3 + $0x18] sm:$0xff]
    %v37 = vld [vmem:[%s3 + $0x20] sm:$0xff]
    %v38 = vld [vmem:[%s3 + $0x28] sm:$0xff]
    %v39 = vld [vmem:[%s3 + $0x30] sm:$0xff]
    %v40 = vld [vmem:[%s3 + $0x38] sm:$0xff]
    %v41 = vld [vmem:[%s4] sm:$0x1]
    %vm42 = vcmask 261120
    %v43 = vsel %vm42, %v21, 0.0
    %44 = vadd.xlane.f32.xlu0 %v43
    %v45 = vpop.xlane.xlu0 %44
    %v46 = vsel %vm42, %v22, 0.0
    %47 = vadd.xlane.f32.xlu0 %v46
    %v48 = vpop.xlane.xlu0 %47
    %v49 = vrcp.pop 32.0
    %v50 = vmul.f32 %v45, %v49
    %v51 = vmul.f32 %v48, %v49
    %v52 = vsub.f32 %v21, %v50
    %v53 = vsub.f32 %v22, %v51
    %v54 = vmul.f32 %v52, %v52
    %v55 = vmul.f32 %v53, %v53
    %v56 = vsel %vm42, %v54, 0.0
    %57 = vadd.xlane.f32.xlu0 %v56
    %v58 = vpop.xlane.xlu0 %57
    %v59 = vsel %vm42, %v55, 0.0
    %60 = vadd.xlane.f32.xlu0 %v59
    %v61 = vpop.xlane.xlu0 %60
    %v62 = vrcp.pop 31.0
    %v63 = vmul.f32 %v58, %v62
    %v64 = vmul.f32 %v61, %v62
    %v65 = vrsqrt.pop %v63
    %v66 = vmul.f32 %v63, %v65
    %vm67 = vcmp.eq.f32.partialorder %v63, inf
    %v68 = vsel %vm67, %v63, %v66
    %vm69 = vcmp.eq.f32.partialorder %v63, 0.0
    %v70 = vand.u32 %v63, 2147483648
    %v71 = vsel %vm69, %v70, %v68
    %v72 = vrsqrt.pop %v64
    %v73 = vmul.f32 %v64, %v72
    %vm74 = vcmp.eq.f32.partialorder %v64, inf
    %v75 = vsel %vm74, %v64, %v73
    %vm76 = vcmp.eq.f32.partialorder %v64, 0.0
    %v77 = vand.u32 %v64, 2147483648
    %v78 = vsel %vm76, %v77, %v75
    %v79 = vadd.f32 %v71, 1e-06
    %v80 = vadd.f32 %v78, 1e-06
    %v81 = vrcp.pop %v79
    %v82 = vmul.f32 %v52, %v81
    %v83 = vrcp.pop %v80
    %v84 = vmul.f32 %v53, %v83
    %v86 = vsel %vm42, %v82, 0
    %v89 = vsel %vm42, %v84, 0
    %91 = vmatprep.subr.mxu0 0.0
    %92 = vmatpush1.msra.mxu0 0.0
    %93 = vmatprep.subr.mxu0 0.0
    %94 = vmatpush1.msra.mxu0 0.0
    %95 = vmatprep.subr.mxu0 0.0
    %96 = vmatpush1.msra.mxu0 0.0
    %97 = vmatprep.subr.mxu0 0.0
    %98 = vmatpush1.msra.mxu0 0.0
    %99 = vmatprep.subr.mxu0 0.0
    %100 = vmatpush1.msra.mxu0 0.0
    %101 = vmatprep.subr.mxu0 0.0
    %102 = vmatpush1.msra.mxu0 0.0
    %103 = vmatprep.subr.mxu0 0.0
    %104 = vmatpush1.msra.mxu0 0.0
    %105 = vmatprep.subr.mxu0 0.0
    %106 = vmatpush1.msra.mxu0 0.0
    %107 = vmatprep.subr.mxu0 0.0
    %108 = vmatpush1.msra.mxu0 0.0
    %109 = vmatprep.subr.mxu0 0.0
    %110 = vmatpush1.msra.mxu0 0.0
    %111 = vmatprep.subr.mxu0 0.0
    %112 = vmatpush1.msra.mxu0 0.0
    %113 = vmatprep.subr.mxu0 0.0
    %114 = vmatpush1.msra.mxu0 0.0
    %115 = vmatprep.subr.mxu0 0.0
    %v116 = vand.u32 %v31, 4294901760
    %117 = vmatpush1.msra.mxu0 %v116
    %118 = vmatprep.subr.mxu0 0.0
    %v119 = vand.u32 %v29, 4294901760
    %120 = vmatpush1.msra.mxu0 %v119
    %121 = vmatprep.subr.mxu0 0.0
    %v122 = vand.u32 %v27, 4294901760
    %123 = vmatpush1.msra.mxu0 %v122
    %124 = vmatprep.subr.mxu0 0.0
    %v125 = vand.u32 %v25, 4294901760
    %126 = vmatpush1.msra.mxu0 %v125
    %127 = vmatprep.subr.mxu0 0.0
    %128 = vmatpush2.msra.mxu0 0.0
    %129 = vmatprep.subr.mxu0 0.0
    %130 = vmatpush2.msra.mxu0 0.0
    %131 = vmatprep.subr.mxu0 0.0
    %132 = vmatpush2.msra.mxu0 0.0
    %133 = vmatprep.subr.mxu0 0.0
    %134 = vmatpush2.msra.mxu0 0.0
    %135 = vmatprep.subr.mxu0 0.0
    %136 = vmatpush2.msra.mxu0 0.0
    %137 = vmatprep.subr.mxu0 0.0
    %138 = vmatpush2.msra.mxu0 0.0
    %139 = vmatprep.subr.mxu0 0.0
    %140 = vmatpush2.msra.mxu0 0.0
    %141 = vmatprep.subr.mxu0 0.0
    %142 = vmatpush2.msra.mxu0 0.0
    %143 = vmatprep.subr.mxu0 0.0
    %144 = vmatpush2.msra.mxu0 0.0
    %145 = vmatprep.subr.mxu0 0.0
    %146 = vmatpush2.msra.mxu0 0.0
    %147 = vmatprep.subr.mxu0 0.0
    %148 = vmatpush2.msra.mxu0 0.0
    %149 = vmatprep.subr.mxu0 0.0
    %150 = vmatpush2.msra.mxu0 0.0
    %151 = vmatprep.subr.mxu0 0.0
    %152 = vmatpush2.msra.mxu0 0.0
    %153 = vmatprep.subr.mxu0 0.0
    %154 = vmatpush2.msra.mxu0 0.0
    %155 = vmatprep.subr.mxu0 0.0
    %156 = vmatpush2.msra.mxu0 0.0
    %157 = vmatprep.subr.mxu0 0.0
    %158 = vmatpush2.msra.mxu0 0.0
    %159 = vmatprep.mubr.f32.mxu0 0.0
    %v160 = vand.u32 %v86, 4294901760
    %v161 = vsub.f32 %v86, %v160
    %v162 = vand.u32 %v161, 4294901760
    %v163 = vsub.f32 %v161, %v162
    %v164 = vand.u32 %v163, 4294901760
    %165 = vmatmul.mubr.f32.gmra.mxu0 %v164
    %v166 = vpop.f32.mrf.mxu0
    %v167 = vadd.f32 0.0, %v166
    %v168 = vpop.f32.mrf.mxu0
    %169 = vmatprep.mubr.f32.mxu0 0.0
    %v170 = vand.u32 %v89, 4294901760
    %v171 = vsub.f32 %v89, %v170
    %v172 = vand.u32 %v171, 4294901760
    %v173 = vsub.f32 %v171, %v172
    %v174 = vand.u32 %v173, 4294901760
    %175 = vmatmul.mubr.f32.gmra.mxu0 %v174
    %v176 = vpop.f32.mrf.mxu0
    %v177 = vadd.f32 0.0, %v176
    %v178 = vpop.f32.mrf.mxu0
    %179 = vdwg.mxu0
    %180 = vmatprep.subr.mxu0 0.0
    %181 = vmatpush1.msra.mxu0 0.0
    %182 = vmatprep.subr.mxu0 0.0
    %183 = vmatpush1.msra.mxu0 0.0
    %184 = vmatprep.subr.mxu0 0.0
    %185 = vmatpush1.msra.mxu0 0.0
    %186 = vmatprep.subr.mxu0 0.0
    %187 = vmatpush1.msra.mxu0 0.0
    %188 = vmatprep.subr.mxu0 0.0
    %189 = vmatpush1.msra.mxu0 0.0
    %190 = vmatprep.subr.mxu0 0.0
    %191 = vmatpush1.msra.mxu0 0.0
    %192 = vmatprep.subr.mxu0 0.0
    %193 = vmatpush1.msra.mxu0 0.0
    %194 = vmatprep.subr.mxu0 0.0
    %195 = vmatpush1.msra.mxu0 0.0
    %196 = vmatprep.subr.mxu0 0.0
    %197 = vmatpush1.msra.mxu0 0.0
    %198 = vmatprep.subr.mxu0 0.0
    %199 = vmatpush1.msra.mxu0 0.0
    %200 = vmatprep.subr.mxu0 0.0
    %201 = vmatpush1.msra.mxu0 0.0
    %202 = vmatprep.subr.mxu0 0.0
    %203 = vmatpush1.msra.mxu0 0.0
    %204 = vmatprep.subr.mxu0 0.0
    %v205 = vand.u32 %v31, 4294901760
    %v206 = vsub.f32 %v31, %v205
    %v207 = vand.u32 %v206, 4294901760
    %v208 = vsub.f32 %v206, %v207
    %v209 = vand.u32 %v208, 4294901760
    %210 = vmatpush1.msra.mxu0 %v209
    %211 = vmatprep.subr.mxu0 0.0
    %v212 = vand.u32 %v29, 4294901760
    %v213 = vsub.f32 %v29, %v212
    %v214 = vand.u32 %v213, 4294901760
    %v215 = vsub.f32 %v213, %v214
    %v216 = vand.u32 %v215, 4294901760
    %217 = vmatpush1.msra.mxu0 %v216
    %218 = vmatprep.subr.mxu0 0.0
    %v219 = vand.u32 %v27, 4294901760
    %v220 = vsub.f32 %v27, %v219
    %v221 = vand.u32 %v220, 4294901760
    %v222 = vsub.f32 %v220, %v221
    %v223 = vand.u32 %v222, 4294901760
    %224 = vmatpush1.msra.mxu0 %v223
    %225 = vmatprep.subr.mxu0 0.0
    %v226 = vand.u32 %v25, 4294901760
    %v227 = vsub.f32 %v25, %v226
    %v228 = vand.u32 %v227, 4294901760
    %v229 = vsub.f32 %v227, %v228
    %v230 = vand.u32 %v229, 4294901760
    %231 = vmatpush1.msra.mxu0 %v230
    %232 = vmatprep.subr.mxu0 0.0
    %233 = vmatpush2.msra.mxu0 0.0
    %234 = vmatprep.subr.mxu0 0.0
    %235 = vmatpush2.msra.mxu0 0.0
    %236 = vmatprep.subr.mxu0 0.0
    %237 = vmatpush2.msra.mxu0 0.0
    %238 = vmatprep.subr.mxu0 0.0
    %239 = vmatpush2.msra.mxu0 0.0
    %240 = vmatprep.subr.mxu0 0.0
    %241 = vmatpush2.msra.mxu0 0.0
    %242 = vmatprep.subr.mxu0 0.0
    %243 = vmatpush2.msra.mxu0 0.0
    %244 = vmatprep.subr.mxu0 0.0
    %245 = vmatpush2.msra.mxu0 0.0
    %246 = vmatprep.subr.mxu0 0.0
    %247 = vmatpush2.msra.mxu0 0.0
    %248 = vmatprep.subr.mxu0 0.0
    %249 = vmatpush2.msra.mxu0 0.0
    %250 = vmatprep.subr.mxu0 0.0
    %251 = vmatpush2.msra.mxu0 0.0
    %252 = vmatprep.subr.mxu0 0.0
    %253 = vmatpush2.msra.mxu0 0.0
    %254 = vmatprep.subr.mxu0 0.0
    %255 = vmatpush2.msra.mxu0 0.0
    %256 = vmatprep.subr.mxu0 0.0
    %257 = vmatpush2.msra.mxu0 0.0
    %258 = vmatprep.subr.mxu0 0.0
    %259 = vmatpush2.msra.mxu0 0.0
    %260 = vmatprep.subr.mxu0 0.0
    %261 = vmatpush2.msra.mxu0 0.0
    %262 = vmatprep.subr.mxu0 0.0
    %263 = vmatpush2.msra.mxu0 0.0
    %264 = vmatprep.mubr.f32.mxu0 0.0
    %v265 = vand.u32 %v86, 4294901760
    %266 = vmatmul.mubr.f32.gmra.mxu0 %v265
    %v267 = vpop.f32.mrf.mxu0
    %v268 = vadd.f32 %v167, %v267
    %v269 = vpop.f32.mrf.mxu0
    %270 = vmatprep.mubr.f32.mxu0 0.0
    %v271 = vand.u32 %v89, 4294901760
    %272 = vmatmul.mubr.f32.gmra.mxu0 %v271
    %v273 = vpop.f32.mrf.mxu0
    %v274 = vadd.f32 %v177, %v273
    %v275 = vpop.f32.mrf.mxu0
    %276 = vdwg.mxu0
    %277 = vmatprep.subr.mxu0 0.0
    %278 = vmatpush1.msra.mxu0 0.0
    %279 = vmatprep.subr.mxu0 0.0
    %280 = vmatpush1.msra.mxu0 0.0
    %281 = vmatprep.subr.mxu0 0.0
    %282 = vmatpush1.msra.mxu0 0.0
    %283 = vmatprep.subr.mxu0 0.0
    %284 = vmatpush1.msra.mxu0 0.0
    %285 = vmatprep.subr.mxu0 0.0
    %286 = vmatpush1.msra.mxu0 0.0
    %287 = vmatprep.subr.mxu0 0.0
    %288 = vmatpush1.msra.mxu0 0.0
    %289 = vmatprep.subr.mxu0 0.0
    %290 = vmatpush1.msra.mxu0 0.0
    %291 = vmatprep.subr.mxu0 0.0
    %292 = vmatpush1.msra.mxu0 0.0
    %293 = vmatprep.subr.mxu0 0.0
    %294 = vmatpush1.msra.mxu0 0.0
    %295 = vmatprep.subr.mxu0 0.0
    %296 = vmatpush1.msra.mxu0 0.0
    %297 = vmatprep.subr.mxu0 0.0
    %298 = vmatpush1.msra.mxu0 0.0
    %299 = vmatprep.subr.mxu0 0.0
    %300 = vmatpush1.msra.mxu0 0.0
    %301 = vmatprep.subr.mxu0 0.0
    %v302 = vand.u32 %v31, 4294901760
    %v303 = vsub.f32 %v31, %v302
    %304 = vmatpush1.msra.mxu0 %v303
    %305 = vmatprep.subr.mxu0 0.0
    %v306 = vand.u32 %v29, 4294901760
    %v307 = vsub.f32 %v29, %v306
    %308 = vmatpush1.msra.mxu0 %v307
    %309 = vmatprep.subr.mxu0 0.0
    %v310 = vand.u32 %v27, 4294901760
    %v311 = vsub.f32 %v27, %v310
    %312 = vmatpush1.msra.mxu0 %v311
    %313 = vmatprep.subr.mxu0 0.0
    %v314 = vand.u32 %v25, 4294901760
    %v315 = vsub.f32 %v25, %v314
    %316 = vmatpush1.msra.mxu0 %v315
    %317 = vmatprep.subr.mxu0 0.0
    %318 = vmatpush2.msra.mxu0 0.0
    %319 = vmatprep.subr.mxu0 0.0
    %320 = vmatpush2.msra.mxu0 0.0
    %321 = vmatprep.subr.mxu0 0.0
    %322 = vmatpush2.msra.mxu0 0.0
    %323 = vmatprep.subr.mxu0 0.0
    %324 = vmatpush2.msra.mxu0 0.0
    %325 = vmatprep.subr.mxu0 0.0
    %326 = vmatpush2.msra.mxu0 0.0
    %327 = vmatprep.subr.mxu0 0.0
    %328 = vmatpush2.msra.mxu0 0.0
    %329 = vmatprep.subr.mxu0 0.0
    %330 = vmatpush2.msra.mxu0 0.0
    %331 = vmatprep.subr.mxu0 0.0
    %332 = vmatpush2.msra.mxu0 0.0
    %333 = vmatprep.subr.mxu0 0.0
    %334 = vmatpush2.msra.mxu0 0.0
    %335 = vmatprep.subr.mxu0 0.0
    %336 = vmatpush2.msra.mxu0 0.0
    %337 = vmatprep.subr.mxu0 0.0
    %338 = vmatpush2.msra.mxu0 0.0
    %339 = vmatprep.subr.mxu0 0.0
    %340 = vmatpush2.msra.mxu0 0.0
    %341 = vmatprep.subr.mxu0 0.0
    %342 = vmatpush2.msra.mxu0 0.0
    %343 = vmatprep.subr.mxu0 0.0
    %344 = vmatpush2.msra.mxu0 0.0
    %345 = vmatprep.subr.mxu0 0.0
    %346 = vmatpush2.msra.mxu0 0.0
    %347 = vmatprep.subr.mxu0 0.0
    %348 = vmatpush2.msra.mxu0 0.0
    %349 = vmatprep.mubr.f32.mxu0 0.0
    %v350 = vand.u32 %v86, 4294901760
    %v351 = vsub.f32 %v86, %v350
    %352 = vmatmul.mubr.f32.gmra.mxu0 %v351
    %v353 = vpop.f32.mrf.mxu0
    %v354 = vadd.f32 %v268, %v353
    %v355 = vpop.f32.mrf.mxu0
    %356 = vmatprep.mubr.f32.mxu0 0.0
    %v357 = vand.u32 %v89, 4294901760
    %v358 = vsub.f32 %v89, %v357
    %359 = vmatmul.mubr.f32.gmra.mxu0 %v358
    %v360 = vpop.f32.mrf.mxu0
    %v361 = vadd.f32 %v274, %v360
    %v362 = vpop.f32.mrf.mxu0
    %363 = vdwg.mxu0
    %364 = vmatprep.subr.mxu0 0.0
    %365 = vmatpush1.msra.mxu0 0.0
    %366 = vmatprep.subr.mxu0 0.0
    %367 = vmatpush1.msra.mxu0 0.0
    %368 = vmatprep.subr.mxu0 0.0
    %369 = vmatpush1.msra.mxu0 0.0
    %370 = vmatprep.subr.mxu0 0.0
    %371 = vmatpush1.msra.mxu0 0.0
    %372 = vmatprep.subr.mxu0 0.0
    %373 = vmatpush1.msra.mxu0 0.0
    %374 = vmatprep.subr.mxu0 0.0
    %375 = vmatpush1.msra.mxu0 0.0
    %376 = vmatprep.subr.mxu0 0.0
    %377 = vmatpush1.msra.mxu0 0.0
    %378 = vmatprep.subr.mxu0 0.0
    %379 = vmatpush1.msra.mxu0 0.0
    %380 = vmatprep.subr.mxu0 0.0
    %381 = vmatpush1.msra.mxu0 0.0
    %382 = vmatprep.subr.mxu0 0.0
    %383 = vmatpush1.msra.mxu0 0.0
    %384 = vmatprep.subr.mxu0 0.0
    %385 = vmatpush1.msra.mxu0 0.0
    %386 = vmatprep.subr.mxu0 0.0
    %387 = vmatpush1.msra.mxu0 0.0
    %388 = vmatprep.subr.mxu0 0.0
    %v389 = vand.u32 %v31, 4294901760
    %390 = vmatpush1.msra.mxu0 %v389
    %391 = vmatprep.subr.mxu0 0.0
    %v392 = vand.u32 %v29, 4294901760
    %393 = vmatpush1.msra.mxu0 %v392
    %394 = vmatprep.subr.mxu0 0.0
    %v395 = vand.u32 %v27, 4294901760
    %396 = vmatpush1.msra.mxu0 %v395
    %397 = vmatprep.subr.mxu0 0.0
    %v398 = vand.u32 %v25, 4294901760
    %399 = vmatpush1.msra.mxu0 %v398
    %400 = vmatprep.subr.mxu0 0.0
    %401 = vmatpush2.msra.mxu0 0.0
    %402 = vmatprep.subr.mxu0 0.0
    %403 = vmatpush2.msra.mxu0 0.0
    %404 = vmatprep.subr.mxu0 0.0
    %405 = vmatpush2.msra.mxu0 0.0
    %406 = vmatprep.subr.mxu0 0.0
    %407 = vmatpush2.msra.mxu0 0.0
    %408 = vmatprep.subr.mxu0 0.0
    %409 = vmatpush2.msra.mxu0 0.0
    %410 = vmatprep.subr.mxu0 0.0
    %411 = vmatpush2.msra.mxu0 0.0
    %412 = vmatprep.subr.mxu0 0.0
    %413 = vmatpush2.msra.mxu0 0.0
    %414 = vmatprep.subr.mxu0 0.0
    %415 = vmatpush2.msra.mxu0 0.0
    %416 = vmatprep.subr.mxu0 0.0
    %417 = vmatpush2.msra.mxu0 0.0
    %418 = vmatprep.subr.mxu0 0.0
    %419 = vmatpush2.msra.mxu0 0.0
    %420 = vmatprep.subr.mxu0 0.0
    %421 = vmatpush2.msra.mxu0 0.0
    %422 = vmatprep.subr.mxu0 0.0
    %423 = vmatpush2.msra.mxu0 0.0
    %424 = vmatprep.subr.mxu0 0.0
    %425 = vmatpush2.msra.mxu0 0.0
    %426 = vmatprep.subr.mxu0 0.0
    %427 = vmatpush2.msra.mxu0 0.0
    %428 = vmatprep.subr.mxu0 0.0
    %429 = vmatpush2.msra.mxu0 0.0
    %430 = vmatprep.subr.mxu0 0.0
    %431 = vmatpush2.msra.mxu0 0.0
    %432 = vmatprep.mubr.f32.mxu0 0.0
    %v433 = vand.u32 %v86, 4294901760
    %v434 = vsub.f32 %v86, %v433
    %v435 = vand.u32 %v434, 4294901760
    %436 = vmatmul.mubr.f32.gmra.mxu0 %v435
    %v437 = vpop.f32.mrf.mxu0
    %v438 = vadd.f32 %v354, %v437
    %v439 = vpop.f32.mrf.mxu0
    %440 = vmatprep.mubr.f32.mxu0 0.0
    %v441 = vand.u32 %v89, 4294901760
    %v442 = vsub.f32 %v89, %v441
    %v443 = vand.u32 %v442, 4294901760
    %444 = vmatmul.mubr.f32.gmra.mxu0 %v443
    %v445 = vpop.f32.mrf.mxu0
    %v446 = vadd.f32 %v361, %v445
    %v447 = vpop.f32.mrf.mxu0
    %448 = vdwg.mxu0
    %449 = vmatprep.subr.mxu0 0.0
    %450 = vmatpush1.msra.mxu0 0.0
    %451 = vmatprep.subr.mxu0 0.0
    %452 = vmatpush1.msra.mxu0 0.0
    %453 = vmatprep.subr.mxu0 0.0
    %454 = vmatpush1.msra.mxu0 0.0
    %455 = vmatprep.subr.mxu0 0.0
    %456 = vmatpush1.msra.mxu0 0.0
    %457 = vmatprep.subr.mxu0 0.0
    %458 = vmatpush1.msra.mxu0 0.0
    %459 = vmatprep.subr.mxu0 0.0
    %460 = vmatpush1.msra.mxu0 0.0
    %461 = vmatprep.subr.mxu0 0.0
    %462 = vmatpush1.msra.mxu0 0.0
    %463 = vmatprep.subr.mxu0 0.0
    %464 = vmatpush1.msra.mxu0 0.0
    %465 = vmatprep.subr.mxu0 0.0
    %466 = vmatpush1.msra.mxu0 0.0
    %467 = vmatprep.subr.mxu0 0.0
    %468 = vmatpush1.msra.mxu0 0.0
    %469 = vmatprep.subr.mxu0 0.0
    %470 = vmatpush1.msra.mxu0 0.0
    %471 = vmatprep.subr.mxu0 0.0
    %472 = vmatpush1.msra.mxu0 0.0
    %473 = vmatprep.subr.mxu0 0.0
    %v474 = vand.u32 %v31, 4294901760
    %v475 = vsub.f32 %v31, %v474
    %v476 = vand.u32 %v475, 4294901760
    %477 = vmatpush1.msra.mxu0 %v476
    %478 = vmatprep.subr.mxu0 0.0
    %v479 = vand.u32 %v29, 4294901760
    %v480 = vsub.f32 %v29, %v479
    %v481 = vand.u32 %v480, 4294901760
    %482 = vmatpush1.msra.mxu0 %v481
    %483 = vmatprep.subr.mxu0 0.0
    %v484 = vand.u32 %v27, 4294901760
    %v485 = vsub.f32 %v27, %v484
    %v486 = vand.u32 %v485, 4294901760
    %487 = vmatpush1.msra.mxu0 %v486
    %488 = vmatprep.subr.mxu0 0.0
    %v489 = vand.u32 %v25, 4294901760
    %v490 = vsub.f32 %v25, %v489
    %v491 = vand.u32 %v490, 4294901760
    %492 = vmatpush1.msra.mxu0 %v491
    %493 = vmatprep.subr.mxu0 0.0
    %494 = vmatpush2.msra.mxu0 0.0
    %495 = vmatprep.subr.mxu0 0.0
    %496 = vmatpush2.msra.mxu0 0.0
    %497 = vmatprep.subr.mxu0 0.0
    %498 = vmatpush2.msra.mxu0 0.0
    %499 = vmatprep.subr.mxu0 0.0
    %500 = vmatpush2.msra.mxu0 0.0
    %501 = vmatprep.subr.mxu0 0.0
    %502 = vmatpush2.msra.mxu0 0.0
    %503 = vmatprep.subr.mxu0 0.0
    %504 = vmatpush2.msra.mxu0 0.0
    %505 = vmatprep.subr.mxu0 0.0
    %506 = vmatpush2.msra.mxu0 0.0
    %507 = vmatprep.subr.mxu0 0.0
    %508 = vmatpush2.msra.mxu0 0.0
    %509 = vmatprep.subr.mxu0 0.0
    %510 = vmatpush2.msra.mxu0 0.0
    %511 = vmatprep.subr.mxu0 0.0
    %512 = vmatpush2.msra.mxu0 0.0
    %513 = vmatprep.subr.mxu0 0.0
    %514 = vmatpush2.msra.mxu0 0.0
    %515 = vmatprep.subr.mxu0 0.0
    %516 = vmatpush2.msra.mxu0 0.0
    %517 = vmatprep.subr.mxu0 0.0
    %518 = vmatpush2.msra.mxu0 0.0
    %519 = vmatprep.subr.mxu0 0.0
    %520 = vmatpush2.msra.mxu0 0.0
    %521 = vmatprep.subr.mxu0 0.0
    %522 = vmatpush2.msra.mxu0 0.0
    %523 = vmatprep.subr.mxu0 0.0
    %524 = vmatpush2.msra.mxu0 0.0
    %525 = vmatprep.mubr.f32.mxu0 0.0
    %v526 = vand.u32 %v86, 4294901760
    %527 = vmatmul.mubr.f32.gmra.mxu0 %v526
    %v528 = vpop.f32.mrf.mxu0
    %v529 = vadd.f32 %v438, %v528
    %v530 = vpop.f32.mrf.mxu0
    %531 = vmatprep.mubr.f32.mxu0 0.0
    %v532 = vand.u32 %v89, 4294901760
    %533 = vmatmul.mubr.f32.gmra.mxu0 %v532
    %v534 = vpop.f32.mrf.mxu0
    %v535 = vadd.f32 %v446, %v534
    %v536 = vpop.f32.mrf.mxu0
    %537 = vdwg.mxu0
    %538 = vmatprep.subr.mxu0 0.0
    %539 = vmatpush1.msra.mxu0 0.0
    %540 = vmatprep.subr.mxu0 0.0
    %541 = vmatpush1.msra.mxu0 0.0
    %542 = vmatprep.subr.mxu0 0.0
    %543 = vmatpush1.msra.mxu0 0.0
    %544 = vmatprep.subr.mxu0 0.0
    %545 = vmatpush1.msra.mxu0 0.0
    %546 = vmatprep.subr.mxu0 0.0
    %547 = vmatpush1.msra.mxu0 0.0
    %548 = vmatprep.subr.mxu0 0.0
    %549 = vmatpush1.msra.mxu0 0.0
    %550 = vmatprep.subr.mxu0 0.0
    %551 = vmatpush1.msra.mxu0 0.0
    %552 = vmatprep.subr.mxu0 0.0
    %553 = vmatpush1.msra.mxu0 0.0
    %554 = vmatprep.subr.mxu0 0.0
    %555 = vmatpush1.msra.mxu0 0.0
    %556 = vmatprep.subr.mxu0 0.0
    %557 = vmatpush1.msra.mxu0 0.0
    %558 = vmatprep.subr.mxu0 0.0
    %559 = vmatpush1.msra.mxu0 0.0
    %560 = vmatprep.subr.mxu0 0.0
    %561 = vmatpush1.msra.mxu0 0.0
    %562 = vmatprep.subr.mxu0 0.0
    %v563 = vand.u32 %v31, 4294901760
    %564 = vmatpush1.msra.mxu0 %v563
    %565 = vmatprep.subr.mxu0 0.0
    %v566 = vand.u32 %v29, 4294901760
    %567 = vmatpush1.msra.mxu0 %v566
    %568 = vmatprep.subr.mxu0 0.0
    %v569 = vand.u32 %v27, 4294901760
    %570 = vmatpush1.msra.mxu0 %v569
    %571 = vmatprep.subr.mxu0 0.0
    %v572 = vand.u32 %v25, 4294901760
    %573 = vmatpush1.msra.mxu0 %v572
    %574 = vmatprep.subr.mxu0 0.0
    %575 = vmatpush2.msra.mxu0 0.0
    %576 = vmatprep.subr.mxu0 0.0
    %577 = vmatpush2.msra.mxu0 0.0
    %578 = vmatprep.subr.mxu0 0.0
    %579 = vmatpush2.msra.mxu0 0.0
    %580 = vmatprep.subr.mxu0 0.0
    %581 = vmatpush2.msra.mxu0 0.0
    %582 = vmatprep.subr.mxu0 0.0
    %583 = vmatpush2.msra.mxu0 0.0
    %584 = vmatprep.subr.mxu0 0.0
    %585 = vmatpush2.msra.mxu0 0.0
    %586 = vmatprep.subr.mxu0 0.0
    %587 = vmatpush2.msra.mxu0 0.0
    %588 = vmatprep.subr.mxu0 0.0
    %589 = vmatpush2.msra.mxu0 0.0
    %590 = vmatprep.subr.mxu0 0.0
    %591 = vmatpush2.msra.mxu0 0.0
    %592 = vmatprep.subr.mxu0 0.0
    %593 = vmatpush2.msra.mxu0 0.0
    %594 = vmatprep.subr.mxu0 0.0
    %595 = vmatpush2.msra.mxu0 0.0
    %596 = vmatprep.subr.mxu0 0.0
    %597 = vmatpush2.msra.mxu0 0.0
    %598 = vmatprep.subr.mxu0 0.0
    %599 = vmatpush2.msra.mxu0 0.0
    %600 = vmatprep.subr.mxu0 0.0
    %601 = vmatpush2.msra.mxu0 0.0
    %602 = vmatprep.subr.mxu0 0.0
    %603 = vmatpush2.msra.mxu0 0.0
    %604 = vmatprep.subr.mxu0 0.0
    %605 = vmatpush2.msra.mxu0 0.0
    %606 = vmatprep.mubr.f32.mxu0 0.0
    %v607 = vand.u32 %v86, 4294901760
    %608 = vmatmul.mubr.f32.gmra.mxu0 %v607
    %v609 = vpop.f32.mrf.mxu0
    %v610 = vadd.f32 %v529, %v609
    %v611 = vpop.f32.mrf.mxu0
    %612 = vmatprep.mubr.f32.mxu0 0.0
    %v613 = vand.u32 %v89, 4294901760
    %614 = vmatmul.mubr.f32.gmra.mxu0 %v613
    %v615 = vpop.f32.mrf.mxu0
    %v616 = vadd.f32 %v535, %v615
    %v617 = vpop.f32.mrf.mxu0
    %618 = vdwg.mxu0
    %v619 = vmul.f32 %v610, %v33
    %v620 = vmul.f32 %v616, %v34
    %v621 = vmul.f32 %v610, %v35
    %v622 = vmul.f32 %v616, %v36
    %v623 = vmul.f32 %v610, %v37
    %v624 = vmul.f32 %v616, %v38
    %v625 = vmul.f32 %v610, %v39
    %v626 = vmul.f32 %v616, %v40
    %635 = vrot.lane.b32.xlu0 %v33, 32
    %v636 = vpop.permute.xlu0 %635
    %637 = vrot.lane.b32.xlu0 %v34, 32
    %v638 = vpop.permute.xlu0 %637
    %639 = vrot.lane.b32.xlu0 %v35, 32
    %v640 = vpop.permute.xlu0 %639
    %641 = vrot.lane.b32.xlu0 %v36, 32
    %v642 = vpop.permute.xlu0 %641
    %643 = vrot.lane.b32.xlu0 %v37, 32
    %v644 = vpop.permute.xlu0 %643
    %645 = vrot.lane.b32.xlu0 %v38, 32
    %v646 = vpop.permute.xlu0 %645
    %647 = vrot.lane.b32.xlu0 %v39, 32
    %v648 = vpop.permute.xlu0 %647
    %649 = vrot.lane.b32.xlu0 %v40, 32
    %v650 = vpop.permute.xlu0 %649
    %v659 = vmul.f32 %v610, %v636
    %v660 = vmul.f32 %v616, %v638
    %v661 = vmul.f32 %v610, %v640
    %v662 = vmul.f32 %v616, %v642
    %v663 = vmul.f32 %v610, %v644
    %v664 = vmul.f32 %v616, %v646
    %v665 = vmul.f32 %v610, %v648
    %v666 = vmul.f32 %v616, %v650
    %675 = vrot.lane.b32.xlu0 %v619, 96
    %v676 = vpop.permute.xlu0 %675
    %677 = vrot.lane.b32.xlu0 %v620, 96
    %v678 = vpop.permute.xlu0 %677
    %679 = vrot.lane.b32.xlu0 %v621, 96
    %v680 = vpop.permute.xlu0 %679
    %681 = vrot.lane.b32.xlu0 %v622, 96
    %v682 = vpop.permute.xlu0 %681
    %683 = vrot.lane.b32.xlu0 %v623, 96
    %v684 = vpop.permute.xlu0 %683
    %685 = vrot.lane.b32.xlu0 %v624, 96
    %v686 = vpop.permute.xlu0 %685
    %687 = vrot.lane.b32.xlu0 %v625, 96
    %v688 = vpop.permute.xlu0 %687
    %689 = vrot.lane.b32.xlu0 %v626, 96
    %v690 = vpop.permute.xlu0 %689
    %v692 = vsel %vm42, %v610, 0
    %v695 = vsel %vm42, %v616, 0
    %v697 = vsel %vm42, %v676, 0
    %v699 = vsel %vm42, %v678, 0
    %v701 = vsel %vm42, %v680, 0
    %v703 = vsel %vm42, %v682, 0
    %v705 = vsel %vm42, %v684, 0
    %v707 = vsel %vm42, %v686, 0
    %v709 = vsel %vm42, %v688, 0
    %v711 = vsel %vm42, %v690, 0
    %713 = vmatprep.subr.mxu0 0.0
    %714 = vmatpush1.xpose.msra.mxu0 0.0
    %715 = vmatprep.subr.mxu0 0.0
    %716 = vmatpush1.xpose.msra.mxu0 0.0
    %717 = vmatprep.subr.mxu0 0.0
    %718 = vmatpush1.xpose.msra.mxu0 0.0
    %719 = vmatprep.subr.mxu0 0.0
    %720 = vmatpush1.xpose.msra.mxu0 0.0
    %721 = vmatprep.subr.mxu0 0.0
    %722 = vmatpush1.xpose.msra.mxu0 0.0
    %723 = vmatprep.subr.mxu0 0.0
    %724 = vmatpush1.xpose.msra.mxu0 0.0
    %725 = vmatprep.subr.mxu0 0.0
    %726 = vmatpush1.xpose.msra.mxu0 0.0
    %727 = vmatprep.subr.mxu0 0.0
    %728 = vmatpush1.xpose.msra.mxu0 0.0
    %729 = vmatprep.subr.mxu0 0.0
    %v730 = vand.u32 %v711, 4294901760
    %731 = vmatpush1.xpose.msra.mxu0 %v730
    %732 = vmatprep.subr.mxu0 0.0
    %v733 = vand.u32 %v709, 4294901760
    %734 = vmatpush1.xpose.msra.mxu0 %v733
    %735 = vmatprep.subr.mxu0 0.0
    %v736 = vand.u32 %v707, 4294901760
    %737 = vmatpush1.xpose.msra.mxu0 %v736
    %738 = vmatprep.subr.mxu0 0.0
    %v739 = vand.u32 %v705, 4294901760
    %740 = vmatpush1.xpose.msra.mxu0 %v739
    %741 = vmatprep.subr.mxu0 0.0
    %v742 = vand.u32 %v703, 4294901760
    %743 = vmatpush1.xpose.msra.mxu0 %v742
    %744 = vmatprep.subr.mxu0 0.0
    %v745 = vand.u32 %v701, 4294901760
    %746 = vmatpush1.xpose.msra.mxu0 %v745
    %747 = vmatprep.subr.mxu0 0.0
    %v748 = vand.u32 %v699, 4294901760
    %749 = vmatpush1.xpose.msra.mxu0 %v748
    %750 = vmatprep.subr.mxu0 0.0
    %v751 = vand.u32 %v697, 4294901760
    %752 = vmatpush1.xpose.msra.mxu0 %v751
    %753 = vmatprep.subr.mxu0 0.0
    %754 = vmatpush2.xpose.msra.mxu0 0.0
    %755 = vmatprep.subr.mxu0 0.0
    %756 = vmatpush2.xpose.msra.mxu0 0.0
    %757 = vmatprep.subr.mxu0 0.0
    %758 = vmatpush2.xpose.msra.mxu0 0.0
    %759 = vmatprep.subr.mxu0 0.0
    %760 = vmatpush2.xpose.msra.mxu0 0.0
    %761 = vmatprep.subr.mxu0 0.0
    %762 = vmatpush2.xpose.msra.mxu0 0.0
    %763 = vmatprep.subr.mxu0 0.0
    %764 = vmatpush2.xpose.msra.mxu0 0.0
    %765 = vmatprep.subr.mxu0 0.0
    %766 = vmatpush2.xpose.msra.mxu0 0.0
    %767 = vmatprep.subr.mxu0 0.0
    %768 = vmatpush2.xpose.msra.mxu0 0.0
    %769 = vmatprep.subr.mxu0 0.0
    %770 = vmatpush2.xpose.msra.mxu0 0.0
    %771 = vmatprep.subr.mxu0 0.0
    %772 = vmatpush2.xpose.msra.mxu0 0.0
    %773 = vmatprep.subr.mxu0 0.0
    %774 = vmatpush2.xpose.msra.mxu0 0.0
    %775 = vmatprep.subr.mxu0 0.0
    %776 = vmatpush2.xpose.msra.mxu0 0.0
    %777 = vmatprep.subr.mxu0 0.0
    %778 = vmatpush2.xpose.msra.mxu0 0.0
    %779 = vmatprep.subr.mxu0 0.0
    %780 = vmatpush2.xpose.msra.mxu0 0.0
    %781 = vmatprep.subr.mxu0 0.0
    %782 = vmatpush2.xpose.msra.mxu0 0.0
    %783 = vmatprep.subr.mxu0 0.0
    %784 = vmatpush2.xpose.msra.mxu0 0.0
    %785 = vmatprep.mubr.f32.mxu0 0.0
    %v786 = vand.u32 %v692, 4294901760
    %v787 = vsub.f32 %v692, %v786
    %v788 = vand.u32 %v787, 4294901760
    %v789 = vsub.f32 %v787, %v788
    %v790 = vand.u32 %v789, 4294901760
    %791 = vmatmul.mubr.f32.gmra.mxu0 %v790
    %v792 = vpop.f32.mrf.mxu0
    %v793 = vadd.f32 0.0, %v792
    %v794 = vpop.f32.mrf.mxu0
    %795 = vmatprep.mubr.f32.mxu0 0.0
    %v796 = vand.u32 %v695, 4294901760
    %v797 = vsub.f32 %v695, %v796
    %v798 = vand.u32 %v797, 4294901760
    %v799 = vsub.f32 %v797, %v798
    %v800 = vand.u32 %v799, 4294901760
    %801 = vmatmul.mubr.f32.gmra.mxu0 %v800
    %v802 = vpop.f32.mrf.mxu0
    %v803 = vadd.f32 0.0, %v802
    %v804 = vpop.f32.mrf.mxu0
    %805 = vdwg.mxu0
    %806 = vmatprep.subr.mxu0 0.0
    %807 = vmatpush1.xpose.msra.mxu0 0.0
    %808 = vmatprep.subr.mxu0 0.0
    %809 = vmatpush1.xpose.msra.mxu0 0.0
    %810 = vmatprep.subr.mxu0 0.0
    %811 = vmatpush1.xpose.msra.mxu0 0.0
    %812 = vmatprep.subr.mxu0 0.0
    %813 = vmatpush1.xpose.msra.mxu0 0.0
    %814 = vmatprep.subr.mxu0 0.0
    %815 = vmatpush1.xpose.msra.mxu0 0.0
    %816 = vmatprep.subr.mxu0 0.0
    %817 = vmatpush1.xpose.msra.mxu0 0.0
    %818 = vmatprep.subr.mxu0 0.0
    %819 = vmatpush1.xpose.msra.mxu0 0.0
    %820 = vmatprep.subr.mxu0 0.0
    %821 = vmatpush1.xpose.msra.mxu0 0.0
    %822 = vmatprep.subr.mxu0 0.0
    %v823 = vand.u32 %v711, 4294901760
    %v824 = vsub.f32 %v711, %v823
    %v825 = vand.u32 %v824, 4294901760
    %v826 = vsub.f32 %v824, %v825
    %v827 = vand.u32 %v826, 4294901760
    %828 = vmatpush1.xpose.msra.mxu0 %v827
    %829 = vmatprep.subr.mxu0 0.0
    %v830 = vand.u32 %v709, 4294901760
    %v831 = vsub.f32 %v709, %v830
    %v832 = vand.u32 %v831, 4294901760
    %v833 = vsub.f32 %v831, %v832
    %v834 = vand.u32 %v833, 4294901760
    %835 = vmatpush1.xpose.msra.mxu0 %v834
    %836 = vmatprep.subr.mxu0 0.0
    %v837 = vand.u32 %v707, 4294901760
    %v838 = vsub.f32 %v707, %v837
    %v839 = vand.u32 %v838, 4294901760
    %v840 = vsub.f32 %v838, %v839
    %v841 = vand.u32 %v840, 4294901760
    %842 = vmatpush1.xpose.msra.mxu0 %v841
    %843 = vmatprep.subr.mxu0 0.0
    %v844 = vand.u32 %v705, 4294901760
    %v845 = vsub.f32 %v705, %v844
    %v846 = vand.u32 %v845, 4294901760
    %v847 = vsub.f32 %v845, %v846
    %v848 = vand.u32 %v847, 4294901760
    %849 = vmatpush1.xpose.msra.mxu0 %v848
    %850 = vmatprep.subr.mxu0 0.0
    %v851 = vand.u32 %v703, 4294901760
    %v852 = vsub.f32 %v703, %v851
    %v853 = vand.u32 %v852, 4294901760
    %v854 = vsub.f32 %v852, %v853
    %v855 = vand.u32 %v854, 4294901760
    %856 = vmatpush1.xpose.msra.mxu0 %v855
    %857 = vmatprep.subr.mxu0 0.0
    %v858 = vand.u32 %v701, 4294901760
    %v859 = vsub.f32 %v701, %v858
    %v860 = vand.u32 %v859, 4294901760
    %v861 = vsub.f32 %v859, %v860
    %v862 = vand.u32 %v861, 4294901760
    %863 = vmatpush1.xpose.msra.mxu0 %v862
    %864 = vmatprep.subr.mxu0 0.0
    %v865 = vand.u32 %v699, 4294901760
    %v866 = vsub.f32 %v699, %v865
    %v867 = vand.u32 %v866, 4294901760
    %v868 = vsub.f32 %v866, %v867
    %v869 = vand.u32 %v868, 4294901760
    %870 = vmatpush1.xpose.msra.mxu0 %v869
    %871 = vmatprep.subr.mxu0 0.0
    %v872 = vand.u32 %v697, 4294901760
    %v873 = vsub.f32 %v697, %v872
    %v874 = vand.u32 %v873, 4294901760
    %v875 = vsub.f32 %v873, %v874
    %v876 = vand.u32 %v875, 4294901760
    %877 = vmatpush1.xpose.msra.mxu0 %v876
    %878 = vmatprep.subr.mxu0 0.0
    %879 = vmatpush2.xpose.msra.mxu0 0.0
    %880 = vmatprep.subr.mxu0 0.0
    %881 = vmatpush2.xpose.msra.mxu0 0.0
    %882 = vmatprep.subr.mxu0 0.0
    %883 = vmatpush2.xpose.msra.mxu0 0.0
    %884 = vmatprep.subr.mxu0 0.0
    %885 = vmatpush2.xpose.msra.mxu0 0.0
    %886 = vmatprep.subr.mxu0 0.0
    %887 = vmatpush2.xpose.msra.mxu0 0.0
    %888 = vmatprep.subr.mxu0 0.0
    %889 = vmatpush2.xpose.msra.mxu0 0.0
    %890 = vmatprep.subr.mxu0 0.0
    %891 = vmatpush2.xpose.msra.mxu0 0.0
    %892 = vmatprep.subr.mxu0 0.0
    %893 = vmatpush2.xpose.msra.mxu0 0.0
    %894 = vmatprep.subr.mxu0 0.0
    %895 = vmatpush2.xpose.msra.mxu0 0.0
    %896 = vmatprep.subr.mxu0 0.0
    %897 = vmatpush2.xpose.msra.mxu0 0.0
    %898 = vmatprep.subr.mxu0 0.0
    %899 = vmatpush2.xpose.msra.mxu0 0.0
    %900 = vmatprep.subr.mxu0 0.0
    %901 = vmatpush2.xpose.msra.mxu0 0.0
    %902 = vmatprep.subr.mxu0 0.0
    %903 = vmatpush2.xpose.msra.mxu0 0.0
    %904 = vmatprep.subr.mxu0 0.0
    %905 = vmatpush2.xpose.msra.mxu0 0.0
    %906 = vmatprep.subr.mxu0 0.0
    %907 = vmatpush2.xpose.msra.mxu0 0.0
    %908 = vmatprep.subr.mxu0 0.0
    %909 = vmatpush2.xpose.msra.mxu0 0.0
    %910 = vmatprep.mubr.f32.mxu0 0.0
    %v911 = vand.u32 %v692, 4294901760
    %912 = vmatmul.mubr.f32.gmra.mxu0 %v911
    %v913 = vpop.f32.mrf.mxu0
    %v914 = vadd.f32 %v793, %v913
    %v915 = vpop.f32.mrf.mxu0
    %916 = vmatprep.mubr.f32.mxu0 0.0
    %v917 = vand.u32 %v695, 4294901760
    %918 = vmatmul.mubr.f32.gmra.mxu0 %v917
    %v919 = vpop.f32.mrf.mxu0
    %v920 = vadd.f32 %v803, %v919
    %v921 = vpop.f32.mrf.mxu0
    %922 = vdwg.mxu0
    %923 = vmatprep.subr.mxu0 0.0
    %924 = vmatpush1.xpose.msra.mxu0 0.0
    %925 = vmatprep.subr.mxu0 0.0
    %926 = vmatpush1.xpose.msra.mxu0 0.0
    %927 = vmatprep.subr.mxu0 0.0
    %928 = vmatpush1.xpose.msra.mxu0 0.0
    %929 = vmatprep.subr.mxu0 0.0
    %930 = vmatpush1.xpose.msra.mxu0 0.0
    %931 = vmatprep.subr.mxu0 0.0
    %932 = vmatpush1.xpose.msra.mxu0 0.0
    %933 = vmatprep.subr.mxu0 0.0
    %934 = vmatpush1.xpose.msra.mxu0 0.0
    %935 = vmatprep.subr.mxu0 0.0
    %936 = vmatpush1.xpose.msra.mxu0 0.0
    %937 = vmatprep.subr.mxu0 0.0
    %938 = vmatpush1.xpose.msra.mxu0 0.0
    %939 = vmatprep.subr.mxu0 0.0
    %v940 = vand.u32 %v711, 4294901760
    %v941 = vsub.f32 %v711, %v940
    %942 = vmatpush1.xpose.msra.mxu0 %v941
    %943 = vmatprep.subr.mxu0 0.0
    %v944 = vand.u32 %v709, 4294901760
    %v945 = vsub.f32 %v709, %v944
    %946 = vmatpush1.xpose.msra.mxu0 %v945
    %947 = vmatprep.subr.mxu0 0.0
    %v948 = vand.u32 %v707, 4294901760
    %v949 = vsub.f32 %v707, %v948
    %950 = vmatpush1.xpose.msra.mxu0 %v949
    %951 = vmatprep.subr.mxu0 0.0
    %v952 = vand.u32 %v705, 4294901760
    %v953 = vsub.f32 %v705, %v952
    %954 = vmatpush1.xpose.msra.mxu0 %v953
    %955 = vmatprep.subr.mxu0 0.0
    %v956 = vand.u32 %v703, 4294901760
    %v957 = vsub.f32 %v703, %v956
    %958 = vmatpush1.xpose.msra.mxu0 %v957
    %959 = vmatprep.subr.mxu0 0.0
    %v960 = vand.u32 %v701, 4294901760
    %v961 = vsub.f32 %v701, %v960
    %962 = vmatpush1.xpose.msra.mxu0 %v961
    %963 = vmatprep.subr.mxu0 0.0
    %v964 = vand.u32 %v699, 4294901760
    %v965 = vsub.f32 %v699, %v964
    %966 = vmatpush1.xpose.msra.mxu0 %v965
    %967 = vmatprep.subr.mxu0 0.0
    %v968 = vand.u32 %v697, 4294901760
    %v969 = vsub.f32 %v697, %v968
    %970 = vmatpush1.xpose.msra.mxu0 %v969
    %971 = vmatprep.subr.mxu0 0.0
    %972 = vmatpush2.xpose.msra.mxu0 0.0
    %973 = vmatprep.subr.mxu0 0.0
    %974 = vmatpush2.xpose.msra.mxu0 0.0
    %975 = vmatprep.subr.mxu0 0.0
    %976 = vmatpush2.xpose.msra.mxu0 0.0
    %977 = vmatprep.subr.mxu0 0.0
    %978 = vmatpush2.xpose.msra.mxu0 0.0
    %979 = vmatprep.subr.mxu0 0.0
    %980 = vmatpush2.xpose.msra.mxu0 0.0
    %981 = vmatprep.subr.mxu0 0.0
    %982 = vmatpush2.xpose.msra.mxu0 0.0
    %983 = vmatprep.subr.mxu0 0.0
    %984 = vmatpush2.xpose.msra.mxu0 0.0
    %985 = vmatprep.subr.mxu0 0.0
    %986 = vmatpush2.xpose.msra.mxu0 0.0
    %987 = vmatprep.subr.mxu0 0.0
    %988 = vmatpush2.xpose.msra.mxu0 0.0
    %989 = vmatprep.subr.mxu0 0.0
    %990 = vmatpush2.xpose.msra.mxu0 0.0
    %991 = vmatprep.subr.mxu0 0.0
    %992 = vmatpush2.xpose.msra.mxu0 0.0
    %993 = vmatprep.subr.mxu0 0.0
    %994 = vmatpush2.xpose.msra.mxu0 0.0
    %995 = vmatprep.subr.mxu0 0.0
    %996 = vmatpush2.xpose.msra.mxu0 0.0
    %997 = vmatprep.subr.mxu0 0.0
    %998 = vmatpush2.xpose.msra.mxu0 0.0
    %999 = vmatprep.subr.mxu0 0.0
    %1000 = vmatpush2.xpose.msra.mxu0 0.0
    %1001 = vmatprep.subr.mxu0 0.0
    %1002 = vmatpush2.xpose.msra.mxu0 0.0
    %1003 = vmatprep.mubr.f32.mxu0 0.0
    %v1004 = vand.u32 %v692, 4294901760
    %v1005 = vsub.f32 %v692, %v1004
    %1006 = vmatmul.mubr.f32.gmra.mxu0 %v1005
    %v1007 = vpop.f32.mrf.mxu0
    %v1008 = vadd.f32 %v914, %v1007
    %v1009 = vpop.f32.mrf.mxu0
    %1010 = vmatprep.mubr.f32.mxu0 0.0
    %v1011 = vand.u32 %v695, 4294901760
    %v1012 = vsub.f32 %v695, %v1011
    %1013 = vmatmul.mubr.f32.gmra.mxu0 %v1012
    %v1014 = vpop.f32.mrf.mxu0
    %v1015 = vadd.f32 %v920, %v1014
    %v1016 = vpop.f32.mrf.mxu0
    %1017 = vdwg.mxu0
    %1018 = vmatprep.subr.mxu0 0.0
    %1019 = vmatpush1.xpose.msra.mxu0 0.0
    %1020 = vmatprep.subr.mxu0 0.0
    %1021 = vmatpush1.xpose.msra.mxu0 0.0
    %1022 = vmatprep.subr.mxu0 0.0
    %1023 = vmatpush1.xpose.msra.mxu0 0.0
    %1024 = vmatprep.subr.mxu0 0.0
    %1025 = vmatpush1.xpose.msra.mxu0 0.0
    %1026 = vmatprep.subr.mxu0 0.0
    %1027 = vmatpush1.xpose.msra.mxu0 0.0
    %1028 = vmatprep.subr.mxu0 0.0
    %1029 = vmatpush1.xpose.msra.mxu0 0.0
    %1030 = vmatprep.subr.mxu0 0.0
    %1031 = vmatpush1.xpose.msra.mxu0 0.0
    %1032 = vmatprep.subr.mxu0 0.0
    %1033 = vmatpush1.xpose.msra.mxu0 0.0
    %1034 = vmatprep.subr.mxu0 0.0
    %v1035 = vand.u32 %v711, 4294901760
    %1036 = vmatpush1.xpose.msra.mxu0 %v1035
    %1037 = vmatprep.subr.mxu0 0.0
    %v1038 = vand.u32 %v709, 4294901760
    %1039 = vmatpush1.xpose.msra.mxu0 %v1038
    %1040 = vmatprep.subr.mxu0 0.0
    %v1041 = vand.u32 %v707, 4294901760
    %1042 = vmatpush1.xpose.msra.mxu0 %v1041
    %1043 = vmatprep.subr.mxu0 0.0
    %v1044 = vand.u32 %v705, 4294901760
    %1045 = vmatpush1.xpose.msra.mxu0 %v1044
    %1046 = vmatprep.subr.mxu0 0.0
    %v1047 = vand.u32 %v703, 4294901760
    %1048 = vmatpush1.xpose.msra.mxu0 %v1047
    %1049 = vmatprep.subr.mxu0 0.0
    %v1050 = vand.u32 %v701, 4294901760
    %1051 = vmatpush1.xpose.msra.mxu0 %v1050
    %1052 = vmatprep.subr.mxu0 0.0
    %v1053 = vand.u32 %v699, 4294901760
    %1054 = vmatpush1.xpose.msra.mxu0 %v1053
    %1055 = vmatprep.subr.mxu0 0.0
    %v1056 = vand.u32 %v697, 4294901760
    %1057 = vmatpush1.xpose.msra.mxu0 %v1056
    %1058 = vmatprep.subr.mxu0 0.0
    %1059 = vmatpush2.xpose.msra.mxu0 0.0
    %1060 = vmatprep.subr.mxu0 0.0
    %1061 = vmatpush2.xpose.msra.mxu0 0.0
    %1062 = vmatprep.subr.mxu0 0.0
    %1063 = vmatpush2.xpose.msra.mxu0 0.0
    %1064 = vmatprep.subr.mxu0 0.0
    %1065 = vmatpush2.xpose.msra.mxu0 0.0
    %1066 = vmatprep.subr.mxu0 0.0
    %1067 = vmatpush2.xpose.msra.mxu0 0.0
    %1068 = vmatprep.subr.mxu0 0.0
    %1069 = vmatpush2.xpose.msra.mxu0 0.0
    %1070 = vmatprep.subr.mxu0 0.0
    %1071 = vmatpush2.xpose.msra.mxu0 0.0
    %1072 = vmatprep.subr.mxu0 0.0
    %1073 = vmatpush2.xpose.msra.mxu0 0.0
    %1074 = vmatprep.subr.mxu0 0.0
    %1075 = vmatpush2.xpose.msra.mxu0 0.0
    %1076 = vmatprep.subr.mxu0 0.0
    %1077 = vmatpush2.xpose.msra.mxu0 0.0
    %1078 = vmatprep.subr.mxu0 0.0
    %1079 = vmatpush2.xpose.msra.mxu0 0.0
    %1080 = vmatprep.subr.mxu0 0.0
    %1081 = vmatpush2.xpose.msra.mxu0 0.0
    %1082 = vmatprep.subr.mxu0 0.0
    %1083 = vmatpush2.xpose.msra.mxu0 0.0
    %1084 = vmatprep.subr.mxu0 0.0
    %1085 = vmatpush2.xpose.msra.mxu0 0.0
    %1086 = vmatprep.subr.mxu0 0.0
    %1087 = vmatpush2.xpose.msra.mxu0 0.0
    %1088 = vmatprep.subr.mxu0 0.0
    %1089 = vmatpush2.xpose.msra.mxu0 0.0
    %1090 = vmatprep.mubr.f32.mxu0 0.0
    %v1091 = vand.u32 %v692, 4294901760
    %v1092 = vsub.f32 %v692, %v1091
    %v1093 = vand.u32 %v1092, 4294901760
    %1094 = vmatmul.mubr.f32.gmra.mxu0 %v1093
    %v1095 = vpop.f32.mrf.mxu0
    %v1096 = vadd.f32 %v1008, %v1095
    %v1097 = vpop.f32.mrf.mxu0
    %1098 = vmatprep.mubr.f32.mxu0 0.0
    %v1099 = vand.u32 %v695, 4294901760
    %v1100 = vsub.f32 %v695, %v1099
    %v1101 = vand.u32 %v1100, 4294901760
    %1102 = vmatmul.mubr.f32.gmra.mxu0 %v1101
    %v1103 = vpop.f32.mrf.mxu0
    %v1104 = vadd.f32 %v1015, %v1103
    %v1105 = vpop.f32.mrf.mxu0
    %1106 = vdwg.mxu0
    %1107 = vmatprep.subr.mxu0 0.0
    %1108 = vmatpush1.xpose.msra.mxu0 0.0
    %1109 = vmatprep.subr.mxu0 0.0
    %1110 = vmatpush1.xpose.msra.mxu0 0.0
    %1111 = vmatprep.subr.mxu0 0.0
    %1112 = vmatpush1.xpose.msra.mxu0 0.0
    %1113 = vmatprep.subr.mxu0 0.0
    %1114 = vmatpush1.xpose.msra.mxu0 0.0
    %1115 = vmatprep.subr.mxu0 0.0
    %1116 = vmatpush1.xpose.msra.mxu0 0.0
    %1117 = vmatprep.subr.mxu0 0.0
    %1118 = vmatpush1.xpose.msra.mxu0 0.0
    %1119 = vmatprep.subr.mxu0 0.0
    %1120 = vmatpush1.xpose.msra.mxu0 0.0
    %1121 = vmatprep.subr.mxu0 0.0
    %1122 = vmatpush1.xpose.msra.mxu0 0.0
    %1123 = vmatprep.subr.mxu0 0.0
    %v1124 = vand.u32 %v711, 4294901760
    %v1125 = vsub.f32 %v711, %v1124
    %v1126 = vand.u32 %v1125, 4294901760
    %1127 = vmatpush1.xpose.msra.mxu0 %v1126
    %1128 = vmatprep.subr.mxu0 0.0
    %v1129 = vand.u32 %v709, 4294901760
    %v1130 = vsub.f32 %v709, %v1129
    %v1131 = vand.u32 %v1130, 4294901760
    %1132 = vmatpush1.xpose.msra.mxu0 %v1131
    %1133 = vmatprep.subr.mxu0 0.0
    %v1134 = vand.u32 %v707, 4294901760
    %v1135 = vsub.f32 %v707, %v1134
    %v1136 = vand.u32 %v1135, 4294901760
    %1137 = vmatpush1.xpose.msra.mxu0 %v1136
    %1138 = vmatprep.subr.mxu0 0.0
    %v1139 = vand.u32 %v705, 4294901760
    %v1140 = vsub.f32 %v705, %v1139
    %v1141 = vand.u32 %v1140, 4294901760
    %1142 = vmatpush1.xpose.msra.mxu0 %v1141
    %1143 = vmatprep.subr.mxu0 0.0
    %v1144 = vand.u32 %v703, 4294901760
    %v1145 = vsub.f32 %v703, %v1144
    %v1146 = vand.u32 %v1145, 4294901760
    %1147 = vmatpush1.xpose.msra.mxu0 %v1146
    %1148 = vmatprep.subr.mxu0 0.0
    %v1149 = vand.u32 %v701, 4294901760
    %v1150 = vsub.f32 %v701, %v1149
    %v1151 = vand.u32 %v1150, 4294901760
    %1152 = vmatpush1.xpose.msra.mxu0 %v1151
    %1153 = vmatprep.subr.mxu0 0.0
    %v1154 = vand.u32 %v699, 4294901760
    %v1155 = vsub.f32 %v699, %v1154
    %v1156 = vand.u32 %v1155, 4294901760
    %1157 = vmatpush1.xpose.msra.mxu0 %v1156
    %1158 = vmatprep.subr.mxu0 0.0
    %v1159 = vand.u32 %v697, 4294901760
    %v1160 = vsub.f32 %v697, %v1159
    %v1161 = vand.u32 %v1160, 4294901760
    %1162 = vmatpush1.xpose.msra.mxu0 %v1161
    %1163 = vmatprep.subr.mxu0 0.0
    %1164 = vmatpush2.xpose.msra.mxu0 0.0
    %1165 = vmatprep.subr.mxu0 0.0
    %1166 = vmatpush2.xpose.msra.mxu0 0.0
    %1167 = vmatprep.subr.mxu0 0.0
    %1168 = vmatpush2.xpose.msra.mxu0 0.0
    %1169 = vmatprep.subr.mxu0 0.0
    %1170 = vmatpush2.xpose.msra.mxu0 0.0
    %1171 = vmatprep.subr.mxu0 0.0
    %1172 = vmatpush2.xpose.msra.mxu0 0.0
    %1173 = vmatprep.subr.mxu0 0.0
    %1174 = vmatpush2.xpose.msra.mxu0 0.0
    %1175 = vmatprep.subr.mxu0 0.0
    %1176 = vmatpush2.xpose.msra.mxu0 0.0
    %1177 = vmatprep.subr.mxu0 0.0
    %1178 = vmatpush2.xpose.msra.mxu0 0.0
    %1179 = vmatprep.subr.mxu0 0.0
    %1180 = vmatpush2.xpose.msra.mxu0 0.0
    %1181 = vmatprep.subr.mxu0 0.0
    %1182 = vmatpush2.xpose.msra.mxu0 0.0
    %1183 = vmatprep.subr.mxu0 0.0
    %1184 = vmatpush2.xpose.msra.mxu0 0.0
    %1185 = vmatprep.subr.mxu0 0.0
    %1186 = vmatpush2.xpose.msra.mxu0 0.0
    %1187 = vmatprep.subr.mxu0 0.0
    %1188 = vmatpush2.xpose.msra.mxu0 0.0
    %1189 = vmatprep.subr.mxu0 0.0
    %1190 = vmatpush2.xpose.msra.mxu0 0.0
    %1191 = vmatprep.subr.mxu0 0.0
    %1192 = vmatpush2.xpose.msra.mxu0 0.0
    %1193 = vmatprep.subr.mxu0 0.0
    %1194 = vmatpush2.xpose.msra.mxu0 0.0
    %1195 = vmatprep.mubr.f32.mxu0 0.0
    %v1196 = vand.u32 %v692, 4294901760
    %1197 = vmatmul.mubr.f32.gmra.mxu0 %v1196
    %v1198 = vpop.f32.mrf.mxu0
    %v1199 = vadd.f32 %v1096, %v1198
    %v1200 = vpop.f32.mrf.mxu0
    %1201 = vmatprep.mubr.f32.mxu0 0.0
    %v1202 = vand.u32 %v695, 4294901760
    %1203 = vmatmul.mubr.f32.gmra.mxu0 %v1202
    %v1204 = vpop.f32.mrf.mxu0
    %v1205 = vadd.f32 %v1104, %v1204
    %v1206 = vpop.f32.mrf.mxu0
    %1207 = vdwg.mxu0
    %1208 = vmatprep.subr.mxu0 0.0
    %1209 = vmatpush1.xpose.msra.mxu0 0.0
    %1210 = vmatprep.subr.mxu0 0.0
    %1211 = vmatpush1.xpose.msra.mxu0 0.0
    %1212 = vmatprep.subr.mxu0 0.0
    %1213 = vmatpush1.xpose.msra.mxu0 0.0
    %1214 = vmatprep.subr.mxu0 0.0
    %1215 = vmatpush1.xpose.msra.mxu0 0.0
    %1216 = vmatprep.subr.mxu0 0.0
    %1217 = vmatpush1.xpose.msra.mxu0 0.0
    %1218 = vmatprep.subr.mxu0 0.0
    %1219 = vmatpush1.xpose.msra.mxu0 0.0
    %1220 = vmatprep.subr.mxu0 0.0
    %1221 = vmatpush1.xpose.msra.mxu0 0.0
    %1222 = vmatprep.subr.mxu0 0.0
    %1223 = vmatpush1.xpose.msra.mxu0 0.0
    %1224 = vmatprep.subr.mxu0 0.0
    %v1225 = vand.u32 %v711, 4294901760
    %1226 = vmatpush1.xpose.msra.mxu0 %v1225
    %1227 = vmatprep.subr.mxu0 0.0
    %v1228 = vand.u32 %v709, 4294901760
    %1229 = vmatpush1.xpose.msra.mxu0 %v1228
    %1230 = vmatprep.subr.mxu0 0.0
    %v1231 = vand.u32 %v707, 4294901760
    %1232 = vmatpush1.xpose.msra.mxu0 %v1231
    %1233 = vmatprep.subr.mxu0 0.0
    %v1234 = vand.u32 %v705, 4294901760
    %1235 = vmatpush1.xpose.msra.mxu0 %v1234
    %1236 = vmatprep.subr.mxu0 0.0
    %v1237 = vand.u32 %v703, 4294901760
    %1238 = vmatpush1.xpose.msra.mxu0 %v1237
    %1239 = vmatprep.subr.mxu0 0.0
    %v1240 = vand.u32 %v701, 4294901760
    %1241 = vmatpush1.xpose.msra.mxu0 %v1240
    %1242 = vmatprep.subr.mxu0 0.0
    %v1243 = vand.u32 %v699, 4294901760
    %1244 = vmatpush1.xpose.msra.mxu0 %v1243
    %1245 = vmatprep.subr.mxu0 0.0
    %v1246 = vand.u32 %v697, 4294901760
    %1247 = vmatpush1.xpose.msra.mxu0 %v1246
    %1248 = vmatprep.subr.mxu0 0.0
    %1249 = vmatpush2.xpose.msra.mxu0 0.0
    %1250 = vmatprep.subr.mxu0 0.0
    %1251 = vmatpush2.xpose.msra.mxu0 0.0
    %1252 = vmatprep.subr.mxu0 0.0
    %1253 = vmatpush2.xpose.msra.mxu0 0.0
    %1254 = vmatprep.subr.mxu0 0.0
    %1255 = vmatpush2.xpose.msra.mxu0 0.0
    %1256 = vmatprep.subr.mxu0 0.0
    %1257 = vmatpush2.xpose.msra.mxu0 0.0
    %1258 = vmatprep.subr.mxu0 0.0
    %1259 = vmatpush2.xpose.msra.mxu0 0.0
    %1260 = vmatprep.subr.mxu0 0.0
    %1261 = vmatpush2.xpose.msra.mxu0 0.0
    %1262 = vmatprep.subr.mxu0 0.0
    %1263 = vmatpush2.xpose.msra.mxu0 0.0
    %1264 = vmatprep.subr.mxu0 0.0
    %1265 = vmatpush2.xpose.msra.mxu0 0.0
    %1266 = vmatprep.subr.mxu0 0.0
    %1267 = vmatpush2.xpose.msra.mxu0 0.0
    %1268 = vmatprep.subr.mxu0 0.0
    %1269 = vmatpush2.xpose.msra.mxu0 0.0
    %1270 = vmatprep.subr.mxu0 0.0
    %1271 = vmatpush2.xpose.msra.mxu0 0.0
    %1272 = vmatprep.subr.mxu0 0.0
    %1273 = vmatpush2.xpose.msra.mxu0 0.0
    %1274 = vmatprep.subr.mxu0 0.0
    %1275 = vmatpush2.xpose.msra.mxu0 0.0
    %1276 = vmatprep.subr.mxu0 0.0
    %1277 = vmatpush2.xpose.msra.mxu0 0.0
    %1278 = vmatprep.subr.mxu0 0.0
    %1279 = vmatpush2.xpose.msra.mxu0 0.0
    %1280 = vmatprep.mubr.f32.mxu0 0.0
    %v1281 = vand.u32 %v692, 4294901760
    %1282 = vmatmul.mubr.f32.gmra.mxu0 %v1281
    %v1283 = vpop.f32.mrf.mxu0
    %v1284 = vadd.f32 %v1199, %v1283
    %v1285 = vpop.f32.mrf.mxu0
    %1286 = vmatprep.mubr.f32.mxu0 0.0
    %v1287 = vand.u32 %v695, 4294901760
    %1288 = vmatmul.mubr.f32.gmra.mxu0 %v1287
    %v1289 = vpop.f32.mrf.mxu0
    %v1290 = vadd.f32 %v1205, %v1289
    %v1291 = vpop.f32.mrf.mxu0
    %1292 = vdwg.mxu0
    %v1293 = vmul.f32 %v1284, 0.35355338
    %v1294 = vmul.f32 %v1290, 0.35355338
    %v1295 = vadd.f32 %v1293, %v23
    %v1296 = vadd.f32 %v1294, %v24
    %vm1297 = vcmask 523264
    %v1298 = vsel %vm1297, %v1295, -inf
    %1299 = vmax.xlane.f32.xlu0 %v1298
    %v1300 = vpop.xlane.xlu0 %1299
    %v1301 = vsel %vm1297, %v1296, -inf
    %1302 = vmax.xlane.f32.xlu0 %v1301
    %v1303 = vpop.xlane.xlu0 %1302
    %v1304 = vsub.f32 %v1295, %v1300
    %v1305 = vsub.f32 %v1296, %v1303
    %v1306 = vmul.f32 %v1304, 1.442695
    %v1307 = vpow.pop %v1306
    %v1308 = vmul.f32 %v1305, 1.442695
    %v1309 = vpow.pop %v1308
    %1310 = vrot.lane.b32.xlu0 %v33, 64
    %v1311 = vpop.permute.xlu0 %1310
    %1312 = vrot.lane.b32.xlu0 %v34, 64
    %v1313 = vpop.permute.xlu0 %1312
    %1314 = vrot.lane.b32.xlu0 %v35, 64
    %v1315 = vpop.permute.xlu0 %1314
    %1316 = vrot.lane.b32.xlu0 %v36, 64
    %v1317 = vpop.permute.xlu0 %1316
    %1318 = vrot.lane.b32.xlu0 %v37, 64
    %v1319 = vpop.permute.xlu0 %1318
    %1320 = vrot.lane.b32.xlu0 %v38, 64
    %v1321 = vpop.permute.xlu0 %1320
    %1322 = vrot.lane.b32.xlu0 %v39, 64
    %v1323 = vpop.permute.xlu0 %1322
    %1324 = vrot.lane.b32.xlu0 %v40, 64
    %v1325 = vpop.permute.xlu0 %1324
    %v1335 = vsel %vm1297, %v1307, 0
    %v1338 = vsel %vm1297, %v1309, 0
    %1340 = vmatprep.subr.mxu0 0.0
    %1341 = vmatpush1.msra.mxu0 0.0
    %1342 = vmatprep.subr.mxu0 0.0
    %1343 = vmatpush1.msra.mxu0 0.0
    %1344 = vmatprep.subr.mxu0 0.0
    %1345 = vmatpush1.msra.mxu0 0.0
    %1346 = vmatprep.subr.mxu0 0.0
    %1347 = vmatpush1.msra.mxu0 0.0
    %1348 = vmatprep.subr.mxu0 0.0
    %1349 = vmatpush1.msra.mxu0 0.0
    %1350 = vmatprep.subr.mxu0 0.0
    %1351 = vmatpush1.msra.mxu0 0.0
    %1352 = vmatprep.subr.mxu0 0.0
    %1353 = vmatpush1.msra.mxu0 0.0
    %1354 = vmatprep.subr.mxu0 0.0
    %1355 = vmatpush1.msra.mxu0 0.0
    %1356 = vmatprep.subr.mxu0 0.0
    %v1357 = vand.u32 %v1325, 4294901760
    %1358 = vmatpush1.msra.mxu0 %v1357
    %1359 = vmatprep.subr.mxu0 0.0
    %v1360 = vand.u32 %v1323, 4294901760
    %1361 = vmatpush1.msra.mxu0 %v1360
    %1362 = vmatprep.subr.mxu0 0.0
    %v1363 = vand.u32 %v1321, 4294901760
    %1364 = vmatpush1.msra.mxu0 %v1363
    %1365 = vmatprep.subr.mxu0 0.0
    %v1366 = vand.u32 %v1319, 4294901760
    %1367 = vmatpush1.msra.mxu0 %v1366
    %1368 = vmatprep.subr.mxu0 0.0
    %v1369 = vand.u32 %v1317, 4294901760
    %1370 = vmatpush1.msra.mxu0 %v1369
    %1371 = vmatprep.subr.mxu0 0.0
    %v1372 = vand.u32 %v1315, 4294901760
    %1373 = vmatpush1.msra.mxu0 %v1372
    %1374 = vmatprep.subr.mxu0 0.0
    %v1375 = vand.u32 %v1313, 4294901760
    %1376 = vmatpush1.msra.mxu0 %v1375
    %1377 = vmatprep.subr.mxu0 0.0
    %v1378 = vand.u32 %v1311, 4294901760
    %1379 = vmatpush1.msra.mxu0 %v1378
    %1380 = vmatprep.subr.mxu0 0.0
    %1381 = vmatpush2.msra.mxu0 0.0
    %1382 = vmatprep.subr.mxu0 0.0
    %1383 = vmatpush2.msra.mxu0 0.0
    %1384 = vmatprep.subr.mxu0 0.0
    %1385 = vmatpush2.msra.mxu0 0.0
    %1386 = vmatprep.subr.mxu0 0.0
    %1387 = vmatpush2.msra.mxu0 0.0
    %1388 = vmatprep.subr.mxu0 0.0
    %1389 = vmatpush2.msra.mxu0 0.0
    %1390 = vmatprep.subr.mxu0 0.0
    %1391 = vmatpush2.msra.mxu0 0.0
    %1392 = vmatprep.subr.mxu0 0.0
    %1393 = vmatpush2.msra.mxu0 0.0
    %1394 = vmatprep.subr.mxu0 0.0
    %1395 = vmatpush2.msra.mxu0 0.0
    %1396 = vmatprep.subr.mxu0 0.0
    %1397 = vmatpush2.msra.mxu0 0.0
    %1398 = vmatprep.subr.mxu0 0.0
    %1399 = vmatpush2.msra.mxu0 0.0
    %1400 = vmatprep.subr.mxu0 0.0
    %1401 = vmatpush2.msra.mxu0 0.0
    %1402 = vmatprep.subr.mxu0 0.0
    %1403 = vmatpush2.msra.mxu0 0.0
    %1404 = vmatprep.subr.mxu0 0.0
    %1405 = vmatpush2.msra.mxu0 0.0
    %1406 = vmatprep.subr.mxu0 0.0
    %1407 = vmatpush2.msra.mxu0 0.0
    %1408 = vmatprep.subr.mxu0 0.0
    %1409 = vmatpush2.msra.mxu0 0.0
    %1410 = vmatprep.subr.mxu0 0.0
    %1411 = vmatpush2.msra.mxu0 0.0
    %1412 = vmatprep.mubr.f32.mxu0 0.0
    %v1413 = vand.u32 %v1335, 4294901760
    %v1414 = vsub.f32 %v1335, %v1413
    %v1415 = vand.u32 %v1414, 4294901760
    %v1416 = vsub.f32 %v1414, %v1415
    %v1417 = vand.u32 %v1416, 4294901760
    %1418 = vmatmul.mubr.f32.gmra.mxu0 %v1417
    %v1419 = vpop.f32.mrf.mxu0
    %v1420 = vadd.f32 0.0, %v1419
    %v1421 = vpop.f32.mrf.mxu0
    %1422 = vmatprep.mubr.f32.mxu0 0.0
    %v1423 = vand.u32 %v1338, 4294901760
    %v1424 = vsub.f32 %v1338, %v1423
    %v1425 = vand.u32 %v1424, 4294901760
    %v1426 = vsub.f32 %v1424, %v1425
    %v1427 = vand.u32 %v1426, 4294901760
    %1428 = vmatmul.mubr.f32.gmra.mxu0 %v1427
    %v1429 = vpop.f32.mrf.mxu0
    %v1430 = vadd.f32 0.0, %v1429
    %v1431 = vpop.f32.mrf.mxu0
    %1432 = vdwg.mxu0
    %1433 = vmatprep.subr.mxu0 0.0
    %1434 = vmatpush1.msra.mxu0 0.0
    %1435 = vmatprep.subr.mxu0 0.0
    %1436 = vmatpush1.msra.mxu0 0.0
    %1437 = vmatprep.subr.mxu0 0.0
    %1438 = vmatpush1.msra.mxu0 0.0
    %1439 = vmatprep.subr.mxu0 0.0
    %1440 = vmatpush1.msra.mxu0 0.0
    %1441 = vmatprep.subr.mxu0 0.0
    %1442 = vmatpush1.msra.mxu0 0.0
    %1443 = vmatprep.subr.mxu0 0.0
    %1444 = vmatpush1.msra.mxu0 0.0
    %1445 = vmatprep.subr.mxu0 0.0
    %1446 = vmatpush1.msra.mxu0 0.0
    %1447 = vmatprep.subr.mxu0 0.0
    %1448 = vmatpush1.msra.mxu0 0.0
    %1449 = vmatprep.subr.mxu0 0.0
    %v1450 = vand.u32 %v1325, 4294901760
    %v1451 = vsub.f32 %v1325, %v1450
    %v1452 = vand.u32 %v1451, 4294901760
    %v1453 = vsub.f32 %v1451, %v1452
    %v1454 = vand.u32 %v1453, 4294901760
    %1455 = vmatpush1.msra.mxu0 %v1454
    %1456 = vmatprep.subr.mxu0 0.0
    %v1457 = vand.u32 %v1323, 4294901760
    %v1458 = vsub.f32 %v1323, %v1457
    %v1459 = vand.u32 %v1458, 4294901760
    %v1460 = vsub.f32 %v1458, %v1459
    %v1461 = vand.u32 %v1460, 4294901760
    %1462 = vmatpush1.msra.mxu0 %v1461
    %1463 = vmatprep.subr.mxu0 0.0
    %v1464 = vand.u32 %v1321, 4294901760
    %v1465 = vsub.f32 %v1321, %v1464
    %v1466 = vand.u32 %v1465, 4294901760
    %v1467 = vsub.f32 %v1465, %v1466
    %v1468 = vand.u32 %v1467, 4294901760
    %1469 = vmatpush1.msra.mxu0 %v1468
    %1470 = vmatprep.subr.mxu0 0.0
    %v1471 = vand.u32 %v1319, 4294901760
    %v1472 = vsub.f32 %v1319, %v1471
    %v1473 = vand.u32 %v1472, 4294901760
    %v1474 = vsub.f32 %v1472, %v1473
    %v1475 = vand.u32 %v1474, 4294901760
    %1476 = vmatpush1.msra.mxu0 %v1475
    %1477 = vmatprep.subr.mxu0 0.0
    %v1478 = vand.u32 %v1317, 4294901760
    %v1479 = vsub.f32 %v1317, %v1478
    %v1480 = vand.u32 %v1479, 4294901760
    %v1481 = vsub.f32 %v1479, %v1480
    %v1482 = vand.u32 %v1481, 4294901760
    %1483 = vmatpush1.msra.mxu0 %v1482
    %1484 = vmatprep.subr.mxu0 0.0
    %v1485 = vand.u32 %v1315, 4294901760
    %v1486 = vsub.f32 %v1315, %v1485
    %v1487 = vand.u32 %v1486, 4294901760
    %v1488 = vsub.f32 %v1486, %v1487
    %v1489 = vand.u32 %v1488, 4294901760
    %1490 = vmatpush1.msra.mxu0 %v1489
    %1491 = vmatprep.subr.mxu0 0.0
    %v1492 = vand.u32 %v1313, 4294901760
    %v1493 = vsub.f32 %v1313, %v1492
    %v1494 = vand.u32 %v1493, 4294901760
    %v1495 = vsub.f32 %v1493, %v1494
    %v1496 = vand.u32 %v1495, 4294901760
    %1497 = vmatpush1.msra.mxu0 %v1496
    %1498 = vmatprep.subr.mxu0 0.0
    %v1499 = vand.u32 %v1311, 4294901760
    %v1500 = vsub.f32 %v1311, %v1499
    %v1501 = vand.u32 %v1500, 4294901760
    %v1502 = vsub.f32 %v1500, %v1501
    %v1503 = vand.u32 %v1502, 4294901760
    %1504 = vmatpush1.msra.mxu0 %v1503
    %1505 = vmatprep.subr.mxu0 0.0
    %1506 = vmatpush2.msra.mxu0 0.0
    %1507 = vmatprep.subr.mxu0 0.0
    %1508 = vmatpush2.msra.mxu0 0.0
    %1509 = vmatprep.subr.mxu0 0.0
    %1510 = vmatpush2.msra.mxu0 0.0
    %1511 = vmatprep.subr.mxu0 0.0
    %1512 = vmatpush2.msra.mxu0 0.0
    %1513 = vmatprep.subr.mxu0 0.0
    %1514 = vmatpush2.msra.mxu0 0.0
    %1515 = vmatprep.subr.mxu0 0.0
    %1516 = vmatpush2.msra.mxu0 0.0
    %1517 = vmatprep.subr.mxu0 0.0
    %1518 = vmatpush2.msra.mxu0 0.0
    %1519 = vmatprep.subr.mxu0 0.0
    %1520 = vmatpush2.msra.mxu0 0.0
    %1521 = vmatprep.subr.mxu0 0.0
    %1522 = vmatpush2.msra.mxu0 0.0
    %1523 = vmatprep.subr.mxu0 0.0
    %1524 = vmatpush2.msra.mxu0 0.0
    %1525 = vmatprep.subr.mxu0 0.0
    %1526 = vmatpush2.msra.mxu0 0.0
    %1527 = vmatprep.subr.mxu0 0.0
    %1528 = vmatpush2.msra.mxu0 0.0
    %1529 = vmatprep.subr.mxu0 0.0
    %1530 = vmatpush2.msra.mxu0 0.0
    %1531 = vmatprep.subr.mxu0 0.0
    %1532 = vmatpush2.msra.mxu0 0.0
    %1533 = vmatprep.subr.mxu0 0.0
    %1534 = vmatpush2.msra.mxu0 0.0
    %1535 = vmatprep.subr.mxu0 0.0
    %1536 = vmatpush2.msra.mxu0 0.0
    %1537 = vmatprep.mubr.f32.mxu0 0.0
    %v1538 = vand.u32 %v1335, 4294901760
    %1539 = vmatmul.mubr.f32.gmra.mxu0 %v1538
    %v1540 = vpop.f32.mrf.mxu0
    %v1541 = vadd.f32 %v1420, %v1540
    %v1542 = vpop.f32.mrf.mxu0
    %1543 = vmatprep.mubr.f32.mxu0 0.0
    %v1544 = vand.u32 %v1338, 4294901760
    %1545 = vmatmul.mubr.f32.gmra.mxu0 %v1544
    %v1546 = vpop.f32.mrf.mxu0
    %v1547 = vadd.f32 %v1430, %v1546
    %v1548 = vpop.f32.mrf.mxu0
    %1549 = vdwg.mxu0
    %1550 = vmatprep.subr.mxu0 0.0
    %1551 = vmatpush1.msra.mxu0 0.0
    %1552 = vmatprep.subr.mxu0 0.0
    %1553 = vmatpush1.msra.mxu0 0.0
    %1554 = vmatprep.subr.mxu0 0.0
    %1555 = vmatpush1.msra.mxu0 0.0
    %1556 = vmatprep.subr.mxu0 0.0
    %1557 = vmatpush1.msra.mxu0 0.0
    %1558 = vmatprep.subr.mxu0 0.0
    %1559 = vmatpush1.msra.mxu0 0.0
    %1560 = vmatprep.subr.mxu0 0.0
    %1561 = vmatpush1.msra.mxu0 0.0
    %1562 = vmatprep.subr.mxu0 0.0
    %1563 = vmatpush1.msra.mxu0 0.0
    %1564 = vmatprep.subr.mxu0 0.0
    %1565 = vmatpush1.msra.mxu0 0.0
    %1566 = vmatprep.subr.mxu0 0.0
    %v1567 = vand.u32 %v1325, 4294901760
    %v1568 = vsub.f32 %v1325, %v1567
    %1569 = vmatpush1.msra.mxu0 %v1568
    %1570 = vmatprep.subr.mxu0 0.0
    %v1571 = vand.u32 %v1323, 4294901760
    %v1572 = vsub.f32 %v1323, %v1571
    %1573 = vmatpush1.msra.mxu0 %v1572
    %1574 = vmatprep.subr.mxu0 0.0
    %v1575 = vand.u32 %v1321, 4294901760
    %v1576 = vsub.f32 %v1321, %v1575
    %1577 = vmatpush1.msra.mxu0 %v1576
    %1578 = vmatprep.subr.mxu0 0.0
    %v1579 = vand.u32 %v1319, 4294901760
    %v1580 = vsub.f32 %v1319, %v1579
    %1581 = vmatpush1.msra.mxu0 %v1580
    %1582 = vmatprep.subr.mxu0 0.0
    %v1583 = vand.u32 %v1317, 4294901760
    %v1584 = vsub.f32 %v1317, %v1583
    %1585 = vmatpush1.msra.mxu0 %v1584
    %1586 = vmatprep.subr.mxu0 0.0
    %v1587 = vand.u32 %v1315, 4294901760
    %v1588 = vsub.f32 %v1315, %v1587
    %1589 = vmatpush1.msra.mxu0 %v1588
    %1590 = vmatprep.subr.mxu0 0.0
    %v1591 = vand.u32 %v1313, 4294901760
    %v1592 = vsub.f32 %v1313, %v1591
    %1593 = vmatpush1.msra.mxu0 %v1592
    %1594 = vmatprep.subr.mxu0 0.0
    %v1595 = vand.u32 %v1311, 4294901760
    %v1596 = vsub.f32 %v1311, %v1595
    %1597 = vmatpush1.msra.mxu0 %v1596
    %1598 = vmatprep.subr.mxu0 0.0
    %1599 = vmatpush2.msra.mxu0 0.0
    %1600 = vmatprep.subr.mxu0 0.0
    %1601 = vmatpush2.msra.mxu0 0.0
    %1602 = vmatprep.subr.mxu0 0.0
    %1603 = vmatpush2.msra.mxu0 0.0
    %1604 = vmatprep.subr.mxu0 0.0
    %1605 = vmatpush2.msra.mxu0 0.0
    %1606 = vmatprep.subr.mxu0 0.0
    %1607 = vmatpush2.msra.mxu0 0.0
    %1608 = vmatprep.subr.mxu0 0.0
    %1609 = vmatpush2.msra.mxu0 0.0
    %1610 = vmatprep.subr.mxu0 0.0
    %1611 = vmatpush2.msra.mxu0 0.0
    %1612 = vmatprep.subr.mxu0 0.0
    %1613 = vmatpush2.msra.mxu0 0.0
    %1614 = vmatprep.subr.mxu0 0.0
    %1615 = vmatpush2.msra.mxu0 0.0
    %1616 = vmatprep.subr.mxu0 0.0
    %1617 = vmatpush2.msra.mxu0 0.0
    %1618 = vmatprep.subr.mxu0 0.0
    %1619 = vmatpush2.msra.mxu0 0.0
    %1620 = vmatprep.subr.mxu0 0.0
    %1621 = vmatpush2.msra.mxu0 0.0
    %1622 = vmatprep.subr.mxu0 0.0
    %1623 = vmatpush2.msra.mxu0 0.0
    %1624 = vmatprep.subr.mxu0 0.0
    %1625 = vmatpush2.msra.mxu0 0.0
    %1626 = vmatprep.subr.mxu0 0.0
    %1627 = vmatpush2.msra.mxu0 0.0
    %1628 = vmatprep.subr.mxu0 0.0
    %1629 = vmatpush2.msra.mxu0 0.0
    %1630 = vmatprep.mubr.f32.mxu0 0.0
    %v1631 = vand.u32 %v1335, 4294901760
    %v1632 = vsub.f32 %v1335, %v1631
    %1633 = vmatmul.mubr.f32.gmra.mxu0 %v1632
    %v1634 = vpop.f32.mrf.mxu0
    %v1635 = vadd.f32 %v1541, %v1634
    %v1636 = vpop.f32.mrf.mxu0
    %1637 = vmatprep.mubr.f32.mxu0 0.0
    %v1638 = vand.u32 %v1338, 4294901760
    %v1639 = vsub.f32 %v1338, %v1638
    %1640 = vmatmul.mubr.f32.gmra.mxu0 %v1639
    %v1641 = vpop.f32.mrf.mxu0
    %v1642 = vadd.f32 %v1547, %v1641
    %v1643 = vpop.f32.mrf.mxu0
    %1644 = vdwg.mxu0
    %1645 = vmatprep.subr.mxu0 0.0
    %1646 = vmatpush1.msra.mxu0 0.0
    %1647 = vmatprep.subr.mxu0 0.0
    %1648 = vmatpush1.msra.mxu0 0.0
    %1649 = vmatprep.subr.mxu0 0.0
    %1650 = vmatpush1.msra.mxu0 0.0
    %1651 = vmatprep.subr.mxu0 0.0
    %1652 = vmatpush1.msra.mxu0 0.0
    %1653 = vmatprep.subr.mxu0 0.0
    %1654 = vmatpush1.msra.mxu0 0.0
    %1655 = vmatprep.subr.mxu0 0.0
    %1656 = vmatpush1.msra.mxu0 0.0
    %1657 = vmatprep.subr.mxu0 0.0
    %1658 = vmatpush1.msra.mxu0 0.0
    %1659 = vmatprep.subr.mxu0 0.0
    %1660 = vmatpush1.msra.mxu0 0.0
    %1661 = vmatprep.subr.mxu0 0.0
    %v1662 = vand.u32 %v1325, 4294901760
    %1663 = vmatpush1.msra.mxu0 %v1662
    %1664 = vmatprep.subr.mxu0 0.0
    %v1665 = vand.u32 %v1323, 4294901760
    %1666 = vmatpush1.msra.mxu0 %v1665
    %1667 = vmatprep.subr.mxu0 0.0
    %v1668 = vand.u32 %v1321, 4294901760
    %1669 = vmatpush1.msra.mxu0 %v1668
    %1670 = vmatprep.subr.mxu0 0.0
    %v1671 = vand.u32 %v1319, 4294901760
    %1672 = vmatpush1.msra.mxu0 %v1671
    %1673 = vmatprep.subr.mxu0 0.0
    %v1674 = vand.u32 %v1317, 4294901760
    %1675 = vmatpush1.msra.mxu0 %v1674
    %1676 = vmatprep.subr.mxu0 0.0
    %v1677 = vand.u32 %v1315, 4294901760
    %1678 = vmatpush1.msra.mxu0 %v1677
    %1679 = vmatprep.subr.mxu0 0.0
    %v1680 = vand.u32 %v1313, 4294901760
    %1681 = vmatpush1.msra.mxu0 %v1680
    %1682 = vmatprep.subr.mxu0 0.0
    %v1683 = vand.u32 %v1311, 4294901760
    %1684 = vmatpush1.msra.mxu0 %v1683
    %1685 = vmatprep.subr.mxu0 0.0
    %1686 = vmatpush2.msra.mxu0 0.0
    %1687 = vmatprep.subr.mxu0 0.0
    %1688 = vmatpush2.msra.mxu0 0.0
    %1689 = vmatprep.subr.mxu0 0.0
    %1690 = vmatpush2.msra.mxu0 0.0
    %1691 = vmatprep.subr.mxu0 0.0
    %1692 = vmatpush2.msra.mxu0 0.0
    %1693 = vmatprep.subr.mxu0 0.0
    %1694 = vmatpush2.msra.mxu0 0.0
    %1695 = vmatprep.subr.mxu0 0.0
    %1696 = vmatpush2.msra.mxu0 0.0
    %1697 = vmatprep.subr.mxu0 0.0
    %1698 = vmatpush2.msra.mxu0 0.0
    %1699 = vmatprep.subr.mxu0 0.0
    %1700 = vmatpush2.msra.mxu0 0.0
    %1701 = vmatprep.subr.mxu0 0.0
    %1702 = vmatpush2.msra.mxu0 0.0
    %1703 = vmatprep.subr.mxu0 0.0
    %1704 = vmatpush2.msra.mxu0 0.0
    %1705 = vmatprep.subr.mxu0 0.0
    %1706 = vmatpush2.msra.mxu0 0.0
    %1707 = vmatprep.subr.mxu0 0.0
    %1708 = vmatpush2.msra.mxu0 0.0
    %1709 = vmatprep.subr.mxu0 0.0
    %1710 = vmatpush2.msra.mxu0 0.0
    %1711 = vmatprep.subr.mxu0 0.0
    %1712 = vmatpush2.msra.mxu0 0.0
    %1713 = vmatprep.subr.mxu0 0.0
    %1714 = vmatpush2.msra.mxu0 0.0
    %1715 = vmatprep.subr.mxu0 0.0
    %1716 = vmatpush2.msra.mxu0 0.0
    %1717 = vmatprep.mubr.f32.mxu0 0.0
    %v1718 = vand.u32 %v1335, 4294901760
    %v1719 = vsub.f32 %v1335, %v1718
    %v1720 = vand.u32 %v1719, 4294901760
    %1721 = vmatmul.mubr.f32.gmra.mxu0 %v1720
    %v1722 = vpop.f32.mrf.mxu0
    %v1723 = vadd.f32 %v1635, %v1722
    %v1724 = vpop.f32.mrf.mxu0
    %1725 = vmatprep.mubr.f32.mxu0 0.0
    %v1726 = vand.u32 %v1338, 4294901760
    %v1727 = vsub.f32 %v1338, %v1726
    %v1728 = vand.u32 %v1727, 4294901760
    %1729 = vmatmul.mubr.f32.gmra.mxu0 %v1728
    %v1730 = vpop.f32.mrf.mxu0
    %v1731 = vadd.f32 %v1642, %v1730
    %v1732 = vpop.f32.mrf.mxu0
    %1733 = vdwg.mxu0
    %1734 = vmatprep.subr.mxu0 0.0
    %1735 = vmatpush1.msra.mxu0 0.0
    %1736 = vmatprep.subr.mxu0 0.0
    %1737 = vmatpush1.msra.mxu0 0.0
    %1738 = vmatprep.subr.mxu0 0.0
    %1739 = vmatpush1.msra.mxu0 0.0
    %1740 = vmatprep.subr.mxu0 0.0
    %1741 = vmatpush1.msra.mxu0 0.0
    %1742 = vmatprep.subr.mxu0 0.0
    %1743 = vmatpush1.msra.mxu0 0.0
    %1744 = vmatprep.subr.mxu0 0.0
    %1745 = vmatpush1.msra.mxu0 0.0
    %1746 = vmatprep.subr.mxu0 0.0
    %1747 = vmatpush1.msra.mxu0 0.0
    %1748 = vmatprep.subr.mxu0 0.0
    %1749 = vmatpush1.msra.mxu0 0.0
    %1750 = vmatprep.subr.mxu0 0.0
    %v1751 = vand.u32 %v1325, 4294901760
    %v1752 = vsub.f32 %v1325, %v1751
    %v1753 = vand.u32 %v1752, 4294901760
    %1754 = vmatpush1.msra.mxu0 %v1753
    %1755 = vmatprep.subr.mxu0 0.0
    %v1756 = vand.u32 %v1323, 4294901760
    %v1757 = vsub.f32 %v1323, %v1756
    %v1758 = vand.u32 %v1757, 4294901760
    %1759 = vmatpush1.msra.mxu0 %v1758
    %1760 = vmatprep.subr.mxu0 0.0
    %v1761 = vand.u32 %v1321, 4294901760
    %v1762 = vsub.f32 %v1321, %v1761
    %v1763 = vand.u32 %v1762, 4294901760
    %1764 = vmatpush1.msra.mxu0 %v1763
    %1765 = vmatprep.subr.mxu0 0.0
    %v1766 = vand.u32 %v1319, 4294901760
    %v1767 = vsub.f32 %v1319, %v1766
    %v1768 = vand.u32 %v1767, 4294901760
    %1769 = vmatpush1.msra.mxu0 %v1768
    %1770 = vmatprep.subr.mxu0 0.0
    %v1771 = vand.u32 %v1317, 4294901760
    %v1772 = vsub.f32 %v1317, %v1771
    %v1773 = vand.u32 %v1772, 4294901760
    %1774 = vmatpush1.msra.mxu0 %v1773
    %1775 = vmatprep.subr.mxu0 0.0
    %v1776 = vand.u32 %v1315, 4294901760
    %v1777 = vsub.f32 %v1315, %v1776
    %v1778 = vand.u32 %v1777, 4294901760
    %1779 = vmatpush1.msra.mxu0 %v1778
    %1780 = vmatprep.subr.mxu0 0.0
    %v1781 = vand.u32 %v1313, 4294901760
    %v1782 = vsub.f32 %v1313, %v1781
    %v1783 = vand.u32 %v1782, 4294901760
    %1784 = vmatpush1.msra.mxu0 %v1783
    %1785 = vmatprep.subr.mxu0 0.0
    %v1786 = vand.u32 %v1311, 4294901760
    %v1787 = vsub.f32 %v1311, %v1786
    %v1788 = vand.u32 %v1787, 4294901760
    %1789 = vmatpush1.msra.mxu0 %v1788
    %1790 = vmatprep.subr.mxu0 0.0
    %1791 = vmatpush2.msra.mxu0 0.0
    %1792 = vmatprep.subr.mxu0 0.0
    %1793 = vmatpush2.msra.mxu0 0.0
    %1794 = vmatprep.subr.mxu0 0.0
    %1795 = vmatpush2.msra.mxu0 0.0
    %1796 = vmatprep.subr.mxu0 0.0
    %1797 = vmatpush2.msra.mxu0 0.0
    %1798 = vmatprep.subr.mxu0 0.0
    %1799 = vmatpush2.msra.mxu0 0.0
    %1800 = vmatprep.subr.mxu0 0.0
    %1801 = vmatpush2.msra.mxu0 0.0
    %1802 = vmatprep.subr.mxu0 0.0
    %1803 = vmatpush2.msra.mxu0 0.0
    %1804 = vmatprep.subr.mxu0 0.0
    %1805 = vmatpush2.msra.mxu0 0.0
    %1806 = vmatprep.subr.mxu0 0.0
    %1807 = vmatpush2.msra.mxu0 0.0
    %1808 = vmatprep.subr.mxu0 0.0
    %1809 = vmatpush2.msra.mxu0 0.0
    %1810 = vmatprep.subr.mxu0 0.0
    %1811 = vmatpush2.msra.mxu0 0.0
    %1812 = vmatprep.subr.mxu0 0.0
    %1813 = vmatpush2.msra.mxu0 0.0
    %1814 = vmatprep.subr.mxu0 0.0
    %1815 = vmatpush2.msra.mxu0 0.0
    %1816 = vmatprep.subr.mxu0 0.0
    %1817 = vmatpush2.msra.mxu0 0.0
    %1818 = vmatprep.subr.mxu0 0.0
    %1819 = vmatpush2.msra.mxu0 0.0
    %1820 = vmatprep.subr.mxu0 0.0
    %1821 = vmatpush2.msra.mxu0 0.0
    %1822 = vmatprep.mubr.f32.mxu0 0.0
    %v1823 = vand.u32 %v1335, 4294901760
    %1824 = vmatmul.mubr.f32.gmra.mxu0 %v1823
    %v1825 = vpop.f32.mrf.mxu0
    %v1826 = vadd.f32 %v1723, %v1825
    %v1827 = vpop.f32.mrf.mxu0
    %1828 = vmatprep.mubr.f32.mxu0 0.0
    %v1829 = vand.u32 %v1338, 4294901760
    %1830 = vmatmul.mubr.f32.gmra.mxu0 %v1829
    %v1831 = vpop.f32.mrf.mxu0
    %v1832 = vadd.f32 %v1731, %v1831
    %v1833 = vpop.f32.mrf.mxu0
    %1834 = vdwg.mxu0
    %1835 = vmatprep.subr.mxu0 0.0
    %1836 = vmatpush1.msra.mxu0 0.0
    %1837 = vmatprep.subr.mxu0 0.0
    %1838 = vmatpush1.msra.mxu0 0.0
    %1839 = vmatprep.subr.mxu0 0.0
    %1840 = vmatpush1.msra.mxu0 0.0
    %1841 = vmatprep.subr.mxu0 0.0
    %1842 = vmatpush1.msra.mxu0 0.0
    %1843 = vmatprep.subr.mxu0 0.0
    %1844 = vmatpush1.msra.mxu0 0.0
    %1845 = vmatprep.subr.mxu0 0.0
    %1846 = vmatpush1.msra.mxu0 0.0
    %1847 = vmatprep.subr.mxu0 0.0
    %1848 = vmatpush1.msra.mxu0 0.0
    %1849 = vmatprep.subr.mxu0 0.0
    %1850 = vmatpush1.msra.mxu0 0.0
    %1851 = vmatprep.subr.mxu0 0.0
    %v1852 = vand.u32 %v1325, 4294901760
    %1853 = vmatpush1.msra.mxu0 %v1852
    %1854 = vmatprep.subr.mxu0 0.0
    %v1855 = vand.u32 %v1323, 4294901760
    %1856 = vmatpush1.msra.mxu0 %v1855
    %1857 = vmatprep.subr.mxu0 0.0
    %v1858 = vand.u32 %v1321, 4294901760
    %1859 = vmatpush1.msra.mxu0 %v1858
    %1860 = vmatprep.subr.mxu0 0.0
    %v1861 = vand.u32 %v1319, 4294901760
    %1862 = vmatpush1.msra.mxu0 %v1861
    %1863 = vmatprep.subr.mxu0 0.0
    %v1864 = vand.u32 %v1317, 4294901760
    %1865 = vmatpush1.msra.mxu0 %v1864
    %1866 = vmatprep.subr.mxu0 0.0
    %v1867 = vand.u32 %v1315, 4294901760
    %1868 = vmatpush1.msra.mxu0 %v1867
    %1869 = vmatprep.subr.mxu0 0.0
    %v1870 = vand.u32 %v1313, 4294901760
    %1871 = vmatpush1.msra.mxu0 %v1870
    %1872 = vmatprep.subr.mxu0 0.0
    %v1873 = vand.u32 %v1311, 4294901760
    %1874 = vmatpush1.msra.mxu0 %v1873
    %1875 = vmatprep.subr.mxu0 0.0
    %1876 = vmatpush2.msra.mxu0 0.0
    %1877 = vmatprep.subr.mxu0 0.0
    %1878 = vmatpush2.msra.mxu0 0.0
    %1879 = vmatprep.subr.mxu0 0.0
    %1880 = vmatpush2.msra.mxu0 0.0
    %1881 = vmatprep.subr.mxu0 0.0
    %1882 = vmatpush2.msra.mxu0 0.0
    %1883 = vmatprep.subr.mxu0 0.0
    %1884 = vmatpush2.msra.mxu0 0.0
    %1885 = vmatprep.subr.mxu0 0.0
    %1886 = vmatpush2.msra.mxu0 0.0
    %1887 = vmatprep.subr.mxu0 0.0
    %1888 = vmatpush2.msra.mxu0 0.0
    %1889 = vmatprep.subr.mxu0 0.0
    %1890 = vmatpush2.msra.mxu0 0.0
    %1891 = vmatprep.subr.mxu0 0.0
    %1892 = vmatpush2.msra.mxu0 0.0
    %1893 = vmatprep.subr.mxu0 0.0
    %1894 = vmatpush2.msra.mxu0 0.0
    %1895 = vmatprep.subr.mxu0 0.0
    %1896 = vmatpush2.msra.mxu0 0.0
    %1897 = vmatprep.subr.mxu0 0.0
    %1898 = vmatpush2.msra.mxu0 0.0
    %1899 = vmatprep.subr.mxu0 0.0
    %1900 = vmatpush2.msra.mxu0 0.0
    %1901 = vmatprep.subr.mxu0 0.0
    %1902 = vmatpush2.msra.mxu0 0.0
    %1903 = vmatprep.subr.mxu0 0.0
    %1904 = vmatpush2.msra.mxu0 0.0
    %1905 = vmatprep.subr.mxu0 0.0
    %1906 = vmatpush2.msra.mxu0 0.0
    %1907 = vmatprep.mubr.f32.mxu0 0.0
    %v1908 = vand.u32 %v1335, 4294901760
    %1909 = vmatmul.mubr.f32.gmra.mxu0 %v1908
    %v1910 = vpop.f32.mrf.mxu0
    %v1911 = vadd.f32 %v1826, %v1910
    %v1912 = vpop.f32.mrf.mxu0
    %1913 = vmatprep.mubr.f32.mxu0 0.0
    %v1914 = vand.u32 %v1338, 4294901760
    %1915 = vmatmul.mubr.f32.gmra.mxu0 %v1914
    %v1916 = vpop.f32.mrf.mxu0
    %v1917 = vadd.f32 %v1832, %v1916
    %v1918 = vpop.f32.mrf.mxu0
    %1919 = vdwg.mxu0
    %v1920 = vrcp.pop %v1911
    %v1921 = vmul.f32 %v1307, %v1920
    %v1922 = vrcp.pop %v1917
    %v1923 = vmul.f32 %v1309, %v1922
    %1932 = vrot.lane.b32.xlu0 %v659, 64
    %v1933 = vpop.permute.xlu0 %1932
    %1934 = vrot.lane.b32.xlu0 %v660, 64
    %v1935 = vpop.permute.xlu0 %1934
    %1936 = vrot.lane.b32.xlu0 %v661, 64
    %v1937 = vpop.permute.xlu0 %1936
    %1938 = vrot.lane.b32.xlu0 %v662, 64
    %v1939 = vpop.permute.xlu0 %1938
    %1940 = vrot.lane.b32.xlu0 %v663, 64
    %v1941 = vpop.permute.xlu0 %1940
    %1942 = vrot.lane.b32.xlu0 %v664, 64
    %v1943 = vpop.permute.xlu0 %1942
    %1944 = vrot.lane.b32.xlu0 %v665, 64
    %v1945 = vpop.permute.xlu0 %1944
    %1946 = vrot.lane.b32.xlu0 %v666, 64
    %v1947 = vpop.permute.xlu0 %1946
    %v1957 = vsel %vm1297, %v1921, 0
    %v1960 = vsel %vm1297, %v1923, 0
    %1962 = vmatprep.subr.mxu0 0.0
    %1963 = vmatpush1.msra.mxu0 0.0
    %1964 = vmatprep.subr.mxu0 0.0
    %1965 = vmatpush1.msra.mxu0 0.0
    %1966 = vmatprep.subr.mxu0 0.0
    %1967 = vmatpush1.msra.mxu0 0.0
    %1968 = vmatprep.subr.mxu0 0.0
    %1969 = vmatpush1.msra.mxu0 0.0
    %1970 = vmatprep.subr.mxu0 0.0
    %1971 = vmatpush1.msra.mxu0 0.0
    %1972 = vmatprep.subr.mxu0 0.0
    %1973 = vmatpush1.msra.mxu0 0.0
    %1974 = vmatprep.subr.mxu0 0.0
    %1975 = vmatpush1.msra.mxu0 0.0
    %1976 = vmatprep.subr.mxu0 0.0
    %1977 = vmatpush1.msra.mxu0 0.0
    %1978 = vmatprep.subr.mxu0 0.0
    %v1979 = vand.u32 %v1947, 4294901760
    %1980 = vmatpush1.msra.mxu0 %v1979
    %1981 = vmatprep.subr.mxu0 0.0
    %v1982 = vand.u32 %v1945, 4294901760
    %1983 = vmatpush1.msra.mxu0 %v1982
    %1984 = vmatprep.subr.mxu0 0.0
    %v1985 = vand.u32 %v1943, 4294901760
    %1986 = vmatpush1.msra.mxu0 %v1985
    %1987 = vmatprep.subr.mxu0 0.0
    %v1988 = vand.u32 %v1941, 4294901760
    %1989 = vmatpush1.msra.mxu0 %v1988
    %1990 = vmatprep.subr.mxu0 0.0
    %v1991 = vand.u32 %v1939, 4294901760
    %1992 = vmatpush1.msra.mxu0 %v1991
    %1993 = vmatprep.subr.mxu0 0.0
    %v1994 = vand.u32 %v1937, 4294901760
    %1995 = vmatpush1.msra.mxu0 %v1994
    %1996 = vmatprep.subr.mxu0 0.0
    %v1997 = vand.u32 %v1935, 4294901760
    %1998 = vmatpush1.msra.mxu0 %v1997
    %1999 = vmatprep.subr.mxu0 0.0
    %v2000 = vand.u32 %v1933, 4294901760
    %2001 = vmatpush1.msra.mxu0 %v2000
    %2002 = vmatprep.subr.mxu0 0.0
    %2003 = vmatpush2.msra.mxu0 0.0
    %2004 = vmatprep.subr.mxu0 0.0
    %2005 = vmatpush2.msra.mxu0 0.0
    %2006 = vmatprep.subr.mxu0 0.0
    %2007 = vmatpush2.msra.mxu0 0.0
    %2008 = vmatprep.subr.mxu0 0.0
    %2009 = vmatpush2.msra.mxu0 0.0
    %2010 = vmatprep.subr.mxu0 0.0
    %2011 = vmatpush2.msra.mxu0 0.0
    %2012 = vmatprep.subr.mxu0 0.0
    %2013 = vmatpush2.msra.mxu0 0.0
    %2014 = vmatprep.subr.mxu0 0.0
    %2015 = vmatpush2.msra.mxu0 0.0
    %2016 = vmatprep.subr.mxu0 0.0
    %2017 = vmatpush2.msra.mxu0 0.0
    %2018 = vmatprep.subr.mxu0 0.0
    %2019 = vmatpush2.msra.mxu0 0.0
    %2020 = vmatprep.subr.mxu0 0.0
    %2021 = vmatpush2.msra.mxu0 0.0
    %2022 = vmatprep.subr.mxu0 0.0
    %2023 = vmatpush2.msra.mxu0 0.0
    %2024 = vmatprep.subr.mxu0 0.0
    %2025 = vmatpush2.msra.mxu0 0.0
    %2026 = vmatprep.subr.mxu0 0.0
    %2027 = vmatpush2.msra.mxu0 0.0
    %2028 = vmatprep.subr.mxu0 0.0
    %2029 = vmatpush2.msra.mxu0 0.0
    %2030 = vmatprep.subr.mxu0 0.0
    %2031 = vmatpush2.msra.mxu0 0.0
    %2032 = vmatprep.subr.mxu0 0.0
    %2033 = vmatpush2.msra.mxu0 0.0
    %2034 = vmatprep.mubr.f32.mxu0 0.0
    %v2035 = vand.u32 %v1957, 4294901760
    %v2036 = vsub.f32 %v1957, %v2035
    %v2037 = vand.u32 %v2036, 4294901760
    %v2038 = vsub.f32 %v2036, %v2037
    %v2039 = vand.u32 %v2038, 4294901760
    %2040 = vmatmul.mubr.f32.gmra.mxu0 %v2039
    %v2041 = vpop.f32.mrf.mxu0
    %v2042 = vadd.f32 0.0, %v2041
    %v2043 = vpop.f32.mrf.mxu0
    %2044 = vmatprep.mubr.f32.mxu0 0.0
    %v2045 = vand.u32 %v1960, 4294901760
    %v2046 = vsub.f32 %v1960, %v2045
    %v2047 = vand.u32 %v2046, 4294901760
    %v2048 = vsub.f32 %v2046, %v2047
    %v2049 = vand.u32 %v2048, 4294901760
    %2050 = vmatmul.mubr.f32.gmra.mxu0 %v2049
    %v2051 = vpop.f32.mrf.mxu0
    %v2052 = vadd.f32 0.0, %v2051
    %v2053 = vpop.f32.mrf.mxu0
    %2054 = vdwg.mxu0
    %2055 = vmatprep.subr.mxu0 0.0
    %2056 = vmatpush1.msra.mxu0 0.0
    %2057 = vmatprep.subr.mxu0 0.0
    %2058 = vmatpush1.msra.mxu0 0.0
    %2059 = vmatprep.subr.mxu0 0.0
    %2060 = vmatpush1.msra.mxu0 0.0
    %2061 = vmatprep.subr.mxu0 0.0
    %2062 = vmatpush1.msra.mxu0 0.0
    %2063 = vmatprep.subr.mxu0 0.0
    %2064 = vmatpush1.msra.mxu0 0.0
    %2065 = vmatprep.subr.mxu0 0.0
    %2066 = vmatpush1.msra.mxu0 0.0
    %2067 = vmatprep.subr.mxu0 0.0
    %2068 = vmatpush1.msra.mxu0 0.0
    %2069 = vmatprep.subr.mxu0 0.0
    %2070 = vmatpush1.msra.mxu0 0.0
    %2071 = vmatprep.subr.mxu0 0.0
    %v2072 = vand.u32 %v1947, 4294901760
    %v2073 = vsub.f32 %v1947, %v2072
    %v2074 = vand.u32 %v2073, 4294901760
    %v2075 = vsub.f32 %v2073, %v2074
    %v2076 = vand.u32 %v2075, 4294901760
    %2077 = vmatpush1.msra.mxu0 %v2076
    %2078 = vmatprep.subr.mxu0 0.0
    %v2079 = vand.u32 %v1945, 4294901760
    %v2080 = vsub.f32 %v1945, %v2079
    %v2081 = vand.u32 %v2080, 4294901760
    %v2082 = vsub.f32 %v2080, %v2081
    %v2083 = vand.u32 %v2082, 4294901760
    %2084 = vmatpush1.msra.mxu0 %v2083
    %2085 = vmatprep.subr.mxu0 0.0
    %v2086 = vand.u32 %v1943, 4294901760
    %v2087 = vsub.f32 %v1943, %v2086
    %v2088 = vand.u32 %v2087, 4294901760
    %v2089 = vsub.f32 %v2087, %v2088
    %v2090 = vand.u32 %v2089, 4294901760
    %2091 = vmatpush1.msra.mxu0 %v2090
    %2092 = vmatprep.subr.mxu0 0.0
    %v2093 = vand.u32 %v1941, 4294901760
    %v2094 = vsub.f32 %v1941, %v2093
    %v2095 = vand.u32 %v2094, 4294901760
    %v2096 = vsub.f32 %v2094, %v2095
    %v2097 = vand.u32 %v2096, 4294901760
    %2098 = vmatpush1.msra.mxu0 %v2097
    %2099 = vmatprep.subr.mxu0 0.0
    %v2100 = vand.u32 %v1939, 4294901760
    %v2101 = vsub.f32 %v1939, %v2100
    %v2102 = vand.u32 %v2101, 4294901760
    %v2103 = vsub.f32 %v2101, %v2102
    %v2104 = vand.u32 %v2103, 4294901760
    %2105 = vmatpush1.msra.mxu0 %v2104
    %2106 = vmatprep.subr.mxu0 0.0
    %v2107 = vand.u32 %v1937, 4294901760
    %v2108 = vsub.f32 %v1937, %v2107
    %v2109 = vand.u32 %v2108, 4294901760
    %v2110 = vsub.f32 %v2108, %v2109
    %v2111 = vand.u32 %v2110, 4294901760
    %2112 = vmatpush1.msra.mxu0 %v2111
    %2113 = vmatprep.subr.mxu0 0.0
    %v2114 = vand.u32 %v1935, 4294901760
    %v2115 = vsub.f32 %v1935, %v2114
    %v2116 = vand.u32 %v2115, 4294901760
    %v2117 = vsub.f32 %v2115, %v2116
    %v2118 = vand.u32 %v2117, 4294901760
    %2119 = vmatpush1.msra.mxu0 %v2118
    %2120 = vmatprep.subr.mxu0 0.0
    %v2121 = vand.u32 %v1933, 4294901760
    %v2122 = vsub.f32 %v1933, %v2121
    %v2123 = vand.u32 %v2122, 4294901760
    %v2124 = vsub.f32 %v2122, %v2123
    %v2125 = vand.u32 %v2124, 4294901760
    %2126 = vmatpush1.msra.mxu0 %v2125
    %2127 = vmatprep.subr.mxu0 0.0
    %2128 = vmatpush2.msra.mxu0 0.0
    %2129 = vmatprep.subr.mxu0 0.0
    %2130 = vmatpush2.msra.mxu0 0.0
    %2131 = vmatprep.subr.mxu0 0.0
    %2132 = vmatpush2.msra.mxu0 0.0
    %2133 = vmatprep.subr.mxu0 0.0
    %2134 = vmatpush2.msra.mxu0 0.0
    %2135 = vmatprep.subr.mxu0 0.0
    %2136 = vmatpush2.msra.mxu0 0.0
    %2137 = vmatprep.subr.mxu0 0.0
    %2138 = vmatpush2.msra.mxu0 0.0
    %2139 = vmatprep.subr.mxu0 0.0
    %2140 = vmatpush2.msra.mxu0 0.0
    %2141 = vmatprep.subr.mxu0 0.0
    %2142 = vmatpush2.msra.mxu0 0.0
    %2143 = vmatprep.subr.mxu0 0.0
    %2144 = vmatpush2.msra.mxu0 0.0
    %2145 = vmatprep.subr.mxu0 0.0
    %2146 = vmatpush2.msra.mxu0 0.0
    %2147 = vmatprep.subr.mxu0 0.0
    %2148 = vmatpush2.msra.mxu0 0.0
    %2149 = vmatprep.subr.mxu0 0.0
    %2150 = vmatpush2.msra.mxu0 0.0
    %2151 = vmatprep.subr.mxu0 0.0
    %2152 = vmatpush2.msra.mxu0 0.0
    %2153 = vmatprep.subr.mxu0 0.0
    %2154 = vmatpush2.msra.mxu0 0.0
    %2155 = vmatprep.subr.mxu0 0.0
    %2156 = vmatpush2.msra.mxu0 0.0
    %2157 = vmatprep.subr.mxu0 0.0
    %2158 = vmatpush2.msra.mxu0 0.0
    %2159 = vmatprep.mubr.f32.mxu0 0.0
    %v2160 = vand.u32 %v1957, 4294901760
    %2161 = vmatmul.mubr.f32.gmra.mxu0 %v2160
    %v2162 = vpop.f32.mrf.mxu0
    %v2163 = vadd.f32 %v2042, %v2162
    %v2164 = vpop.f32.mrf.mxu0
    %2165 = vmatprep.mubr.f32.mxu0 0.0
    %v2166 = vand.u32 %v1960, 4294901760
    %2167 = vmatmul.mubr.f32.gmra.mxu0 %v2166
    %v2168 = vpop.f32.mrf.mxu0
    %v2169 = vadd.f32 %v2052, %v2168
    %v2170 = vpop.f32.mrf.mxu0
    %2171 = vdwg.mxu0
    %2172 = vmatprep.subr.mxu0 0.0
    %2173 = vmatpush1.msra.mxu0 0.0
    %2174 = vmatprep.subr.mxu0 0.0
    %2175 = vmatpush1.msra.mxu0 0.0
    %2176 = vmatprep.subr.mxu0 0.0
    %2177 = vmatpush1.msra.mxu0 0.0
    %2178 = vmatprep.subr.mxu0 0.0
    %2179 = vmatpush1.msra.mxu0 0.0
    %2180 = vmatprep.subr.mxu0 0.0
    %2181 = vmatpush1.msra.mxu0 0.0
    %2182 = vmatprep.subr.mxu0 0.0
    %2183 = vmatpush1.msra.mxu0 0.0
    %2184 = vmatprep.subr.mxu0 0.0
    %2185 = vmatpush1.msra.mxu0 0.0
    %2186 = vmatprep.subr.mxu0 0.0
    %2187 = vmatpush1.msra.mxu0 0.0
    %2188 = vmatprep.subr.mxu0 0.0
    %v2189 = vand.u32 %v1947, 4294901760
    %v2190 = vsub.f32 %v1947, %v2189
    %2191 = vmatpush1.msra.mxu0 %v2190
    %2192 = vmatprep.subr.mxu0 0.0
    %v2193 = vand.u32 %v1945, 4294901760
    %v2194 = vsub.f32 %v1945, %v2193
    %2195 = vmatpush1.msra.mxu0 %v2194
    %2196 = vmatprep.subr.mxu0 0.0
    %v2197 = vand.u32 %v1943, 4294901760
    %v2198 = vsub.f32 %v1943, %v2197
    %2199 = vmatpush1.msra.mxu0 %v2198
    %2200 = vmatprep.subr.mxu0 0.0
    %v2201 = vand.u32 %v1941, 4294901760
    %v2202 = vsub.f32 %v1941, %v2201
    %2203 = vmatpush1.msra.mxu0 %v2202
    %2204 = vmatprep.subr.mxu0 0.0
    %v2205 = vand.u32 %v1939, 4294901760
    %v2206 = vsub.f32 %v1939, %v2205
    %2207 = vmatpush1.msra.mxu0 %v2206
    %2208 = vmatprep.subr.mxu0 0.0
    %v2209 = vand.u32 %v1937, 4294901760
    %v2210 = vsub.f32 %v1937, %v2209
    %2211 = vmatpush1.msra.mxu0 %v2210
    %2212 = vmatprep.subr.mxu0 0.0
    %v2213 = vand.u32 %v1935, 4294901760
    %v2214 = vsub.f32 %v1935, %v2213
    %2215 = vmatpush1.msra.mxu0 %v2214
    %2216 = vmatprep.subr.mxu0 0.0
    %v2217 = vand.u32 %v1933, 4294901760
    %v2218 = vsub.f32 %v1933, %v2217
    %2219 = vmatpush1.msra.mxu0 %v2218
    %2220 = vmatprep.subr.mxu0 0.0
    %2221 = vmatpush2.msra.mxu0 0.0
    %2222 = vmatprep.subr.mxu0 0.0
    %2223 = vmatpush2.msra.mxu0 0.0
    %2224 = vmatprep.subr.mxu0 0.0
    %2225 = vmatpush2.msra.mxu0 0.0
    %2226 = vmatprep.subr.mxu0 0.0
    %2227 = vmatpush2.msra.mxu0 0.0
    %2228 = vmatprep.subr.mxu0 0.0
    %2229 = vmatpush2.msra.mxu0 0.0
    %2230 = vmatprep.subr.mxu0 0.0
    %2231 = vmatpush2.msra.mxu0 0.0
    %2232 = vmatprep.subr.mxu0 0.0
    %2233 = vmatpush2.msra.mxu0 0.0
    %2234 = vmatprep.subr.mxu0 0.0
    %2235 = vmatpush2.msra.mxu0 0.0
    %2236 = vmatprep.subr.mxu0 0.0
    %2237 = vmatpush2.msra.mxu0 0.0
    %2238 = vmatprep.subr.mxu0 0.0
    %2239 = vmatpush2.msra.mxu0 0.0
    %2240 = vmatprep.subr.mxu0 0.0
    %2241 = vmatpush2.msra.mxu0 0.0
    %2242 = vmatprep.subr.mxu0 0.0
    %2243 = vmatpush2.msra.mxu0 0.0
    %2244 = vmatprep.subr.mxu0 0.0
    %2245 = vmatpush2.msra.mxu0 0.0
    %2246 = vmatprep.subr.mxu0 0.0
    %2247 = vmatpush2.msra.mxu0 0.0
    %2248 = vmatprep.subr.mxu0 0.0
    %2249 = vmatpush2.msra.mxu0 0.0
    %2250 = vmatprep.subr.mxu0 0.0
    %2251 = vmatpush2.msra.mxu0 0.0
    %2252 = vmatprep.mubr.f32.mxu0 0.0
    %v2253 = vand.u32 %v1957, 4294901760
    %v2254 = vsub.f32 %v1957, %v2253
    %2255 = vmatmul.mubr.f32.gmra.mxu0 %v2254
    %v2256 = vpop.f32.mrf.mxu0
    %v2257 = vadd.f32 %v2163, %v2256
    %v2258 = vpop.f32.mrf.mxu0
    %2259 = vmatprep.mubr.f32.mxu0 0.0
    %v2260 = vand.u32 %v1960, 4294901760
    %v2261 = vsub.f32 %v1960, %v2260
    %2262 = vmatmul.mubr.f32.gmra.mxu0 %v2261
    %v2263 = vpop.f32.mrf.mxu0
    %v2264 = vadd.f32 %v2169, %v2263
    %v2265 = vpop.f32.mrf.mxu0
    %2266 = vdwg.mxu0
    %2267 = vmatprep.subr.mxu0 0.0
    %2268 = vmatpush1.msra.mxu0 0.0
    %2269 = vmatprep.subr.mxu0 0.0
    %2270 = vmatpush1.msra.mxu0 0.0
    %2271 = vmatprep.subr.mxu0 0.0
    %2272 = vmatpush1.msra.mxu0 0.0
    %2273 = vmatprep.subr.mxu0 0.0
    %2274 = vmatpush1.msra.mxu0 0.0
    %2275 = vmatprep.subr.mxu0 0.0
    %2276 = vmatpush1.msra.mxu0 0.0
    %2277 = vmatprep.subr.mxu0 0.0
    %2278 = vmatpush1.msra.mxu0 0.0
    %2279 = vmatprep.subr.mxu0 0.0
    %2280 = vmatpush1.msra.mxu0 0.0
    %2281 = vmatprep.subr.mxu0 0.0
    %2282 = vmatpush1.msra.mxu0 0.0
    %2283 = vmatprep.subr.mxu0 0.0
    %v2284 = vand.u32 %v1947, 4294901760
    %2285 = vmatpush1.msra.mxu0 %v2284
    %2286 = vmatprep.subr.mxu0 0.0
    %v2287 = vand.u32 %v1945, 4294901760
    %2288 = vmatpush1.msra.mxu0 %v2287
    %2289 = vmatprep.subr.mxu0 0.0
    %v2290 = vand.u32 %v1943, 4294901760
    %2291 = vmatpush1.msra.mxu0 %v2290
    %2292 = vmatprep.subr.mxu0 0.0
    %v2293 = vand.u32 %v1941, 4294901760
    %2294 = vmatpush1.msra.mxu0 %v2293
    %2295 = vmatprep.subr.mxu0 0.0
    %v2296 = vand.u32 %v1939, 4294901760
    %2297 = vmatpush1.msra.mxu0 %v2296
    %2298 = vmatprep.subr.mxu0 0.0
    %v2299 = vand.u32 %v1937, 4294901760
    %2300 = vmatpush1.msra.mxu0 %v2299
    %2301 = vmatprep.subr.mxu0 0.0
    %v2302 = vand.u32 %v1935, 4294901760
    %2303 = vmatpush1.msra.mxu0 %v2302
    %2304 = vmatprep.subr.mxu0 0.0
    %v2305 = vand.u32 %v1933, 4294901760
    %2306 = vmatpush1.msra.mxu0 %v2305
    %2307 = vmatprep.subr.mxu0 0.0
    %2308 = vmatpush2.msra.mxu0 0.0
    %2309 = vmatprep.subr.mxu0 0.0
    %2310 = vmatpush2.msra.mxu0 0.0
    %2311 = vmatprep.subr.mxu0 0.0
    %2312 = vmatpush2.msra.mxu0 0.0
    %2313 = vmatprep.subr.mxu0 0.0
    %2314 = vmatpush2.msra.mxu0 0.0
    %2315 = vmatprep.subr.mxu0 0.0
    %2316 = vmatpush2.msra.mxu0 0.0
    %2317 = vmatprep.subr.mxu0 0.0
    %2318 = vmatpush2.msra.mxu0 0.0
    %2319 = vmatprep.subr.mxu0 0.0
    %2320 = vmatpush2.msra.mxu0 0.0
    %2321 = vmatprep.subr.mxu0 0.0
    %2322 = vmatpush2.msra.mxu0 0.0
    %2323 = vmatprep.subr.mxu0 0.0
    %2324 = vmatpush2.msra.mxu0 0.0
    %2325 = vmatprep.subr.mxu0 0.0
    %2326 = vmatpush2.msra.mxu0 0.0
    %2327 = vmatprep.subr.mxu0 0.0
    %2328 = vmatpush2.msra.mxu0 0.0
    %2329 = vmatprep.subr.mxu0 0.0
    %2330 = vmatpush2.msra.mxu0 0.0
    %2331 = vmatprep.subr.mxu0 0.0
    %2332 = vmatpush2.msra.mxu0 0.0
    %2333 = vmatprep.subr.mxu0 0.0
    %2334 = vmatpush2.msra.mxu0 0.0
    %2335 = vmatprep.subr.mxu0 0.0
    %2336 = vmatpush2.msra.mxu0 0.0
    %2337 = vmatprep.subr.mxu0 0.0
    %2338 = vmatpush2.msra.mxu0 0.0
    %2339 = vmatprep.mubr.f32.mxu0 0.0
    %v2340 = vand.u32 %v1957, 4294901760
    %v2341 = vsub.f32 %v1957, %v2340
    %v2342 = vand.u32 %v2341, 4294901760
    %2343 = vmatmul.mubr.f32.gmra.mxu0 %v2342
    %v2344 = vpop.f32.mrf.mxu0
    %v2345 = vadd.f32 %v2257, %v2344
    %v2346 = vpop.f32.mrf.mxu0
    %2347 = vmatprep.mubr.f32.mxu0 0.0
    %v2348 = vand.u32 %v1960, 4294901760
    %v2349 = vsub.f32 %v1960, %v2348
    %v2350 = vand.u32 %v2349, 4294901760
    %2351 = vmatmul.mubr.f32.gmra.mxu0 %v2350
    %v2352 = vpop.f32.mrf.mxu0
    %v2353 = vadd.f32 %v2264, %v2352
    %v2354 = vpop.f32.mrf.mxu0
    %2355 = vdwg.mxu0
    %2356 = vmatprep.subr.mxu0 0.0
    %2357 = vmatpush1.msra.mxu0 0.0
    %2358 = vmatprep.subr.mxu0 0.0
    %2359 = vmatpush1.msra.mxu0 0.0
    %2360 = vmatprep.subr.mxu0 0.0
    %2361 = vmatpush1.msra.mxu0 0.0
    %2362 = vmatprep.subr.mxu0 0.0
    %2363 = vmatpush1.msra.mxu0 0.0
    %2364 = vmatprep.subr.mxu0 0.0
    %2365 = vmatpush1.msra.mxu0 0.0
    %2366 = vmatprep.subr.mxu0 0.0
    %2367 = vmatpush1.msra.mxu0 0.0
    %2368 = vmatprep.subr.mxu0 0.0
    %2369 = vmatpush1.msra.mxu0 0.0
    %2370 = vmatprep.subr.mxu0 0.0
    %2371 = vmatpush1.msra.mxu0 0.0
    %2372 = vmatprep.subr.mxu0 0.0
    %v2373 = vand.u32 %v1947, 4294901760
    %v2374 = vsub.f32 %v1947, %v2373
    %v2375 = vand.u32 %v2374, 4294901760
    %2376 = vmatpush1.msra.mxu0 %v2375
    %2377 = vmatprep.subr.mxu0 0.0
    %v2378 = vand.u32 %v1945, 4294901760
    %v2379 = vsub.f32 %v1945, %v2378
    %v2380 = vand.u32 %v2379, 4294901760
    %2381 = vmatpush1.msra.mxu0 %v2380
    %2382 = vmatprep.subr.mxu0 0.0
    %v2383 = vand.u32 %v1943, 4294901760
    %v2384 = vsub.f32 %v1943, %v2383
    %v2385 = vand.u32 %v2384, 4294901760
    %2386 = vmatpush1.msra.mxu0 %v2385
    %2387 = vmatprep.subr.mxu0 0.0
    %v2388 = vand.u32 %v1941, 4294901760
    %v2389 = vsub.f32 %v1941, %v2388
    %v2390 = vand.u32 %v2389, 4294901760
    %2391 = vmatpush1.msra.mxu0 %v2390
    %2392 = vmatprep.subr.mxu0 0.0
    %v2393 = vand.u32 %v1939, 4294901760
    %v2394 = vsub.f32 %v1939, %v2393
    %v2395 = vand.u32 %v2394, 4294901760
    %2396 = vmatpush1.msra.mxu0 %v2395
    %2397 = vmatprep.subr.mxu0 0.0
    %v2398 = vand.u32 %v1937, 4294901760
    %v2399 = vsub.f32 %v1937, %v2398
    %v2400 = vand.u32 %v2399, 4294901760
    %2401 = vmatpush1.msra.mxu0 %v2400
    %2402 = vmatprep.subr.mxu0 0.0
    %v2403 = vand.u32 %v1935, 4294901760
    %v2404 = vsub.f32 %v1935, %v2403
    %v2405 = vand.u32 %v2404, 4294901760
    %2406 = vmatpush1.msra.mxu0 %v2405
    %2407 = vmatprep.subr.mxu0 0.0
    %v2408 = vand.u32 %v1933, 4294901760
    %v2409 = vsub.f32 %v1933, %v2408
    %v2410 = vand.u32 %v2409, 4294901760
    %2411 = vmatpush1.msra.mxu0 %v2410
    %2412 = vmatprep.subr.mxu0 0.0
    %2413 = vmatpush2.msra.mxu0 0.0
    %2414 = vmatprep.subr.mxu0 0.0
    %2415 = vmatpush2.msra.mxu0 0.0
    %2416 = vmatprep.subr.mxu0 0.0
    %2417 = vmatpush2.msra.mxu0 0.0
    %2418 = vmatprep.subr.mxu0 0.0
    %2419 = vmatpush2.msra.mxu0 0.0
    %2420 = vmatprep.subr.mxu0 0.0
    %2421 = vmatpush2.msra.mxu0 0.0
    %2422 = vmatprep.subr.mxu0 0.0
    %2423 = vmatpush2.msra.mxu0 0.0
    %2424 = vmatprep.subr.mxu0 0.0
    %2425 = vmatpush2.msra.mxu0 0.0
    %2426 = vmatprep.subr.mxu0 0.0
    %2427 = vmatpush2.msra.mxu0 0.0
    %2428 = vmatprep.subr.mxu0 0.0
    %2429 = vmatpush2.msra.mxu0 0.0
    %2430 = vmatprep.subr.mxu0 0.0
    %2431 = vmatpush2.msra.mxu0 0.0
    %2432 = vmatprep.subr.mxu0 0.0
    %2433 = vmatpush2.msra.mxu0 0.0
    %2434 = vmatprep.subr.mxu0 0.0
    %2435 = vmatpush2.msra.mxu0 0.0
    %2436 = vmatprep.subr.mxu0 0.0
    %2437 = vmatpush2.msra.mxu0 0.0
    %2438 = vmatprep.subr.mxu0 0.0
    %2439 = vmatpush2.msra.mxu0 0.0
    %2440 = vmatprep.subr.mxu0 0.0
    %2441 = vmatpush2.msra.mxu0 0.0
    %2442 = vmatprep.subr.mxu0 0.0
    %2443 = vmatpush2.msra.mxu0 0.0
    %2444 = vmatprep.mubr.f32.mxu0 0.0
    %v2445 = vand.u32 %v1957, 4294901760
    %2446 = vmatmul.mubr.f32.gmra.mxu0 %v2445
    %v2447 = vpop.f32.mrf.mxu0
    %v2448 = vadd.f32 %v2345, %v2447
    %v2449 = vpop.f32.mrf.mxu0
    %2450 = vmatprep.mubr.f32.mxu0 0.0
    %v2451 = vand.u32 %v1960, 4294901760
    %2452 = vmatmul.mubr.f32.gmra.mxu0 %v2451
    %v2453 = vpop.f32.mrf.mxu0
    %v2454 = vadd.f32 %v2353, %v2453
    %v2455 = vpop.f32.mrf.mxu0
    %2456 = vdwg.mxu0
    %2457 = vmatprep.subr.mxu0 0.0
    %2458 = vmatpush1.msra.mxu0 0.0
    %2459 = vmatprep.subr.mxu0 0.0
    %2460 = vmatpush1.msra.mxu0 0.0
    %2461 = vmatprep.subr.mxu0 0.0
    %2462 = vmatpush1.msra.mxu0 0.0
    %2463 = vmatprep.subr.mxu0 0.0
    %2464 = vmatpush1.msra.mxu0 0.0
    %2465 = vmatprep.subr.mxu0 0.0
    %2466 = vmatpush1.msra.mxu0 0.0
    %2467 = vmatprep.subr.mxu0 0.0
    %2468 = vmatpush1.msra.mxu0 0.0
    %2469 = vmatprep.subr.mxu0 0.0
    %2470 = vmatpush1.msra.mxu0 0.0
    %2471 = vmatprep.subr.mxu0 0.0
    %2472 = vmatpush1.msra.mxu0 0.0
    %2473 = vmatprep.subr.mxu0 0.0
    %v2474 = vand.u32 %v1947, 4294901760
    %2475 = vmatpush1.msra.mxu0 %v2474
    %2476 = vmatprep.subr.mxu0 0.0
    %v2477 = vand.u32 %v1945, 4294901760
    %2478 = vmatpush1.msra.mxu0 %v2477
    %2479 = vmatprep.subr.mxu0 0.0
    %v2480 = vand.u32 %v1943, 4294901760
    %2481 = vmatpush1.msra.mxu0 %v2480
    %2482 = vmatprep.subr.mxu0 0.0
    %v2483 = vand.u32 %v1941, 4294901760
    %2484 = vmatpush1.msra.mxu0 %v2483
    %2485 = vmatprep.subr.mxu0 0.0
    %v2486 = vand.u32 %v1939, 4294901760
    %2487 = vmatpush1.msra.mxu0 %v2486
    %2488 = vmatprep.subr.mxu0 0.0
    %v2489 = vand.u32 %v1937, 4294901760
    %2490 = vmatpush1.msra.mxu0 %v2489
    %2491 = vmatprep.subr.mxu0 0.0
    %v2492 = vand.u32 %v1935, 4294901760
    %2493 = vmatpush1.msra.mxu0 %v2492
    %2494 = vmatprep.subr.mxu0 0.0
    %v2495 = vand.u32 %v1933, 4294901760
    %2496 = vmatpush1.msra.mxu0 %v2495
    %2497 = vmatprep.subr.mxu0 0.0
    %2498 = vmatpush2.msra.mxu0 0.0
    %2499 = vmatprep.subr.mxu0 0.0
    %2500 = vmatpush2.msra.mxu0 0.0
    %2501 = vmatprep.subr.mxu0 0.0
    %2502 = vmatpush2.msra.mxu0 0.0
    %2503 = vmatprep.subr.mxu0 0.0
    %2504 = vmatpush2.msra.mxu0 0.0
    %2505 = vmatprep.subr.mxu0 0.0
    %2506 = vmatpush2.msra.mxu0 0.0
    %2507 = vmatprep.subr.mxu0 0.0
    %2508 = vmatpush2.msra.mxu0 0.0
    %2509 = vmatprep.subr.mxu0 0.0
    %2510 = vmatpush2.msra.mxu0 0.0
    %2511 = vmatprep.subr.mxu0 0.0
    %2512 = vmatpush2.msra.mxu0 0.0
    %2513 = vmatprep.subr.mxu0 0.0
    %2514 = vmatpush2.msra.mxu0 0.0
    %2515 = vmatprep.subr.mxu0 0.0
    %2516 = vmatpush2.msra.mxu0 0.0
    %2517 = vmatprep.subr.mxu0 0.0
    %2518 = vmatpush2.msra.mxu0 0.0
    %2519 = vmatprep.subr.mxu0 0.0
    %2520 = vmatpush2.msra.mxu0 0.0
    %2521 = vmatprep.subr.mxu0 0.0
    %2522 = vmatpush2.msra.mxu0 0.0
    %2523 = vmatprep.subr.mxu0 0.0
    %2524 = vmatpush2.msra.mxu0 0.0
    %2525 = vmatprep.subr.mxu0 0.0
    %2526 = vmatpush2.msra.mxu0 0.0
    %2527 = vmatprep.subr.mxu0 0.0
    %2528 = vmatpush2.msra.mxu0 0.0
    %2529 = vmatprep.mubr.f32.mxu0 0.0
    %v2530 = vand.u32 %v1957, 4294901760
    %2531 = vmatmul.mubr.f32.gmra.mxu0 %v2530
    %v2532 = vpop.f32.mrf.mxu0
    %v2533 = vadd.f32 %v2448, %v2532
    %v2534 = vpop.f32.mrf.mxu0
    %2535 = vmatprep.mubr.f32.mxu0 0.0
    %v2536 = vand.u32 %v1960, 4294901760
    %2537 = vmatmul.mubr.f32.gmra.mxu0 %v2536
    %v2538 = vpop.f32.mrf.mxu0
    %v2539 = vadd.f32 %v2454, %v2538
    %v2540 = vpop.f32.mrf.mxu0
    %2541 = vdwg.mxu0
    %2546 = vrot.lane.b32.xlu0 %v25, 32
    %v2547 = vpop.permute.xlu0 %2546
    %2548 = vrot.lane.b32.xlu0 %v27, 32
    %v2549 = vpop.permute.xlu0 %2548
    %2550 = vrot.lane.b32.xlu0 %v29, 32
    %v2551 = vpop.permute.xlu0 %2550
    %2552 = vrot.lane.b32.xlu0 %v31, 32
    %v2553 = vpop.permute.xlu0 %2552
    %v2559 = vsel %vm42, %v2533, 0
    %v2562 = vsel %vm42, %v2539, 0
    %2564 = vmatprep.subr.mxu0 0.0
    %2565 = vmatpush1.msra.mxu0 0.0
    %2566 = vmatprep.subr.mxu0 0.0
    %2567 = vmatpush1.msra.mxu0 0.0
    %2568 = vmatprep.subr.mxu0 0.0
    %2569 = vmatpush1.msra.mxu0 0.0
    %2570 = vmatprep.subr.mxu0 0.0
    %2571 = vmatpush1.msra.mxu0 0.0
    %2572 = vmatprep.subr.mxu0 0.0
    %2573 = vmatpush1.msra.mxu0 0.0
    %2574 = vmatprep.subr.mxu0 0.0
    %2575 = vmatpush1.msra.mxu0 0.0
    %2576 = vmatprep.subr.mxu0 0.0
    %2577 = vmatpush1.msra.mxu0 0.0
    %2578 = vmatprep.subr.mxu0 0.0
    %2579 = vmatpush1.msra.mxu0 0.0
    %2580 = vmatprep.subr.mxu0 0.0
    %2581 = vmatpush1.msra.mxu0 0.0
    %2582 = vmatprep.subr.mxu0 0.0
    %2583 = vmatpush1.msra.mxu0 0.0
    %2584 = vmatprep.subr.mxu0 0.0
    %2585 = vmatpush1.msra.mxu0 0.0
    %2586 = vmatprep.subr.mxu0 0.0
    %2587 = vmatpush1.msra.mxu0 0.0
    %2588 = vmatprep.subr.mxu0 0.0
    %v2589 = vand.u32 %v2553, 4294901760
    %2590 = vmatpush1.msra.mxu0 %v2589
    %2591 = vmatprep.subr.mxu0 0.0
    %v2592 = vand.u32 %v2551, 4294901760
    %2593 = vmatpush1.msra.mxu0 %v2592
    %2594 = vmatprep.subr.mxu0 0.0
    %v2595 = vand.u32 %v2549, 4294901760
    %2596 = vmatpush1.msra.mxu0 %v2595
    %2597 = vmatprep.subr.mxu0 0.0
    %v2598 = vand.u32 %v2547, 4294901760
    %2599 = vmatpush1.msra.mxu0 %v2598
    %2600 = vmatprep.subr.mxu0 0.0
    %2601 = vmatpush2.msra.mxu0 0.0
    %2602 = vmatprep.subr.mxu0 0.0
    %2603 = vmatpush2.msra.mxu0 0.0
    %2604 = vmatprep.subr.mxu0 0.0
    %2605 = vmatpush2.msra.mxu0 0.0
    %2606 = vmatprep.subr.mxu0 0.0
    %2607 = vmatpush2.msra.mxu0 0.0
    %2608 = vmatprep.subr.mxu0 0.0
    %2609 = vmatpush2.msra.mxu0 0.0
    %2610 = vmatprep.subr.mxu0 0.0
    %2611 = vmatpush2.msra.mxu0 0.0
    %2612 = vmatprep.subr.mxu0 0.0
    %2613 = vmatpush2.msra.mxu0 0.0
    %2614 = vmatprep.subr.mxu0 0.0
    %2615 = vmatpush2.msra.mxu0 0.0
    %2616 = vmatprep.subr.mxu0 0.0
    %2617 = vmatpush2.msra.mxu0 0.0
    %2618 = vmatprep.subr.mxu0 0.0
    %2619 = vmatpush2.msra.mxu0 0.0
    %2620 = vmatprep.subr.mxu0 0.0
    %2621 = vmatpush2.msra.mxu0 0.0
    %2622 = vmatprep.subr.mxu0 0.0
    %2623 = vmatpush2.msra.mxu0 0.0
    %2624 = vmatprep.subr.mxu0 0.0
    %2625 = vmatpush2.msra.mxu0 0.0
    %2626 = vmatprep.subr.mxu0 0.0
    %2627 = vmatpush2.msra.mxu0 0.0
    %2628 = vmatprep.subr.mxu0 0.0
    %2629 = vmatpush2.msra.mxu0 0.0
    %2630 = vmatprep.subr.mxu0 0.0
    %2631 = vmatpush2.msra.mxu0 0.0
    %2632 = vmatprep.mubr.f32.mxu0 0.0
    %v2633 = vand.u32 %v2559, 4294901760
    %v2634 = vsub.f32 %v2559, %v2633
    %v2635 = vand.u32 %v2634, 4294901760
    %v2636 = vsub.f32 %v2634, %v2635
    %v2637 = vand.u32 %v2636, 4294901760
    %2638 = vmatmul.mubr.f32.gmra.mxu0 %v2637
    %v2639 = vpop.f32.mrf.mxu0
    %v2640 = vadd.f32 0.0, %v2639
    %v2641 = vpop.f32.mrf.mxu0
    %2642 = vmatprep.mubr.f32.mxu0 0.0
    %v2643 = vand.u32 %v2562, 4294901760
    %v2644 = vsub.f32 %v2562, %v2643
    %v2645 = vand.u32 %v2644, 4294901760
    %v2646 = vsub.f32 %v2644, %v2645
    %v2647 = vand.u32 %v2646, 4294901760
    %2648 = vmatmul.mubr.f32.gmra.mxu0 %v2647
    %v2649 = vpop.f32.mrf.mxu0
    %v2650 = vadd.f32 0.0, %v2649
    %v2651 = vpop.f32.mrf.mxu0
    %2652 = vdwg.mxu0
    %2653 = vmatprep.subr.mxu0 0.0
    %2654 = vmatpush1.msra.mxu0 0.0
    %2655 = vmatprep.subr.mxu0 0.0
    %2656 = vmatpush1.msra.mxu0 0.0
    %2657 = vmatprep.subr.mxu0 0.0
    %2658 = vmatpush1.msra.mxu0 0.0
    %2659 = vmatprep.subr.mxu0 0.0
    %2660 = vmatpush1.msra.mxu0 0.0
    %2661 = vmatprep.subr.mxu0 0.0
    %2662 = vmatpush1.msra.mxu0 0.0
    %2663 = vmatprep.subr.mxu0 0.0
    %2664 = vmatpush1.msra.mxu0 0.0
    %2665 = vmatprep.subr.mxu0 0.0
    %2666 = vmatpush1.msra.mxu0 0.0
    %2667 = vmatprep.subr.mxu0 0.0
    %2668 = vmatpush1.msra.mxu0 0.0
    %2669 = vmatprep.subr.mxu0 0.0
    %2670 = vmatpush1.msra.mxu0 0.0
    %2671 = vmatprep.subr.mxu0 0.0
    %2672 = vmatpush1.msra.mxu0 0.0
    %2673 = vmatprep.subr.mxu0 0.0
    %2674 = vmatpush1.msra.mxu0 0.0
    %2675 = vmatprep.subr.mxu0 0.0
    %2676 = vmatpush1.msra.mxu0 0.0
    %2677 = vmatprep.subr.mxu0 0.0
    %v2678 = vand.u32 %v2553, 4294901760
    %v2679 = vsub.f32 %v2553, %v2678
    %v2680 = vand.u32 %v2679, 4294901760
    %v2681 = vsub.f32 %v2679, %v2680
    %v2682 = vand.u32 %v2681, 4294901760
    %2683 = vmatpush1.msra.mxu0 %v2682
    %2684 = vmatprep.subr.mxu0 0.0
    %v2685 = vand.u32 %v2551, 4294901760
    %v2686 = vsub.f32 %v2551, %v2685
    %v2687 = vand.u32 %v2686, 4294901760
    %v2688 = vsub.f32 %v2686, %v2687
    %v2689 = vand.u32 %v2688, 4294901760
    %2690 = vmatpush1.msra.mxu0 %v2689
    %2691 = vmatprep.subr.mxu0 0.0
    %v2692 = vand.u32 %v2549, 4294901760
    %v2693 = vsub.f32 %v2549, %v2692
    %v2694 = vand.u32 %v2693, 4294901760
    %v2695 = vsub.f32 %v2693, %v2694
    %v2696 = vand.u32 %v2695, 4294901760
    %2697 = vmatpush1.msra.mxu0 %v2696
    %2698 = vmatprep.subr.mxu0 0.0
    %v2699 = vand.u32 %v2547, 4294901760
    %v2700 = vsub.f32 %v2547, %v2699
    %v2701 = vand.u32 %v2700, 4294901760
    %v2702 = vsub.f32 %v2700, %v2701
    %v2703 = vand.u32 %v2702, 4294901760
    %2704 = vmatpush1.msra.mxu0 %v2703
    %2705 = vmatprep.subr.mxu0 0.0
    %2706 = vmatpush2.msra.mxu0 0.0
    %2707 = vmatprep.subr.mxu0 0.0
    %2708 = vmatpush2.msra.mxu0 0.0
    %2709 = vmatprep.subr.mxu0 0.0
    %2710 = vmatpush2.msra.mxu0 0.0
    %2711 = vmatprep.subr.mxu0 0.0
    %2712 = vmatpush2.msra.mxu0 0.0
    %2713 = vmatprep.subr.mxu0 0.0
    %2714 = vmatpush2.msra.mxu0 0.0
    %2715 = vmatprep.subr.mxu0 0.0
    %2716 = vmatpush2.msra.mxu0 0.0
    %2717 = vmatprep.subr.mxu0 0.0
    %2718 = vmatpush2.msra.mxu0 0.0
    %2719 = vmatprep.subr.mxu0 0.0
    %2720 = vmatpush2.msra.mxu0 0.0
    %2721 = vmatprep.subr.mxu0 0.0
    %2722 = vmatpush2.msra.mxu0 0.0
    %2723 = vmatprep.subr.mxu0 0.0
    %2724 = vmatpush2.msra.mxu0 0.0
    %2725 = vmatprep.subr.mxu0 0.0
    %2726 = vmatpush2.msra.mxu0 0.0
    %2727 = vmatprep.subr.mxu0 0.0
    %2728 = vmatpush2.msra.mxu0 0.0
    %2729 = vmatprep.subr.mxu0 0.0
    %2730 = vmatpush2.msra.mxu0 0.0
    %2731 = vmatprep.subr.mxu0 0.0
    %2732 = vmatpush2.msra.mxu0 0.0
    %2733 = vmatprep.subr.mxu0 0.0
    %2734 = vmatpush2.msra.mxu0 0.0
    %2735 = vmatprep.subr.mxu0 0.0
    %2736 = vmatpush2.msra.mxu0 0.0
    %2737 = vmatprep.mubr.f32.mxu0 0.0
    %v2738 = vand.u32 %v2559, 4294901760
    %2739 = vmatmul.mubr.f32.gmra.mxu0 %v2738
    %v2740 = vpop.f32.mrf.mxu0
    %v2741 = vadd.f32 %v2640, %v2740
    %v2742 = vpop.f32.mrf.mxu0
    %2743 = vmatprep.mubr.f32.mxu0 0.0
    %v2744 = vand.u32 %v2562, 4294901760
    %2745 = vmatmul.mubr.f32.gmra.mxu0 %v2744
    %v2746 = vpop.f32.mrf.mxu0
    %v2747 = vadd.f32 %v2650, %v2746
    %v2748 = vpop.f32.mrf.mxu0
    %2749 = vdwg.mxu0
    %2750 = vmatprep.subr.mxu0 0.0
    %2751 = vmatpush1.msra.mxu0 0.0
    %2752 = vmatprep.subr.mxu0 0.0
    %2753 = vmatpush1.msra.mxu0 0.0
    %2754 = vmatprep.subr.mxu0 0.0
    %2755 = vmatpush1.msra.mxu0 0.0
    %2756 = vmatprep.subr.mxu0 0.0
    %2757 = vmatpush1.msra.mxu0 0.0
    %2758 = vmatprep.subr.mxu0 0.0
    %2759 = vmatpush1.msra.mxu0 0.0
    %2760 = vmatprep.subr.mxu0 0.0
    %2761 = vmatpush1.msra.mxu0 0.0
    %2762 = vmatprep.subr.mxu0 0.0
    %2763 = vmatpush1.msra.mxu0 0.0
    %2764 = vmatprep.subr.mxu0 0.0
    %2765 = vmatpush1.msra.mxu0 0.0
    %2766 = vmatprep.subr.mxu0 0.0
    %2767 = vmatpush1.msra.mxu0 0.0
    %2768 = vmatprep.subr.mxu0 0.0
    %2769 = vmatpush1.msra.mxu0 0.0
    %2770 = vmatprep.subr.mxu0 0.0
    %2771 = vmatpush1.msra.mxu0 0.0
    %2772 = vmatprep.subr.mxu0 0.0
    %2773 = vmatpush1.msra.mxu0 0.0
    %2774 = vmatprep.subr.mxu0 0.0
    %v2775 = vand.u32 %v2553, 4294901760
    %v2776 = vsub.f32 %v2553, %v2775
    %2777 = vmatpush1.msra.mxu0 %v2776
    %2778 = vmatprep.subr.mxu0 0.0
    %v2779 = vand.u32 %v2551, 4294901760
    %v2780 = vsub.f32 %v2551, %v2779
    %2781 = vmatpush1.msra.mxu0 %v2780
    %2782 = vmatprep.subr.mxu0 0.0
    %v2783 = vand.u32 %v2549, 4294901760
    %v2784 = vsub.f32 %v2549, %v2783
    %2785 = vmatpush1.msra.mxu0 %v2784
    %2786 = vmatprep.subr.mxu0 0.0
    %v2787 = vand.u32 %v2547, 4294901760
    %v2788 = vsub.f32 %v2547, %v2787
    %2789 = vmatpush1.msra.mxu0 %v2788
    %2790 = vmatprep.subr.mxu0 0.0
    %2791 = vmatpush2.msra.mxu0 0.0
    %2792 = vmatprep.subr.mxu0 0.0
    %2793 = vmatpush2.msra.mxu0 0.0
    %2794 = vmatprep.subr.mxu0 0.0
    %2795 = vmatpush2.msra.mxu0 0.0
    %2796 = vmatprep.subr.mxu0 0.0
    %2797 = vmatpush2.msra.mxu0 0.0
    %2798 = vmatprep.subr.mxu0 0.0
    %2799 = vmatpush2.msra.mxu0 0.0
    %2800 = vmatprep.subr.mxu0 0.0
    %2801 = vmatpush2.msra.mxu0 0.0
    %2802 = vmatprep.subr.mxu0 0.0
    %2803 = vmatpush2.msra.mxu0 0.0
    %2804 = vmatprep.subr.mxu0 0.0
    %2805 = vmatpush2.msra.mxu0 0.0
    %2806 = vmatprep.subr.mxu0 0.0
    %2807 = vmatpush2.msra.mxu0 0.0
    %2808 = vmatprep.subr.mxu0 0.0
    %2809 = vmatpush2.msra.mxu0 0.0
    %2810 = vmatprep.subr.mxu0 0.0
    %2811 = vmatpush2.msra.mxu0 0.0
    %2812 = vmatprep.subr.mxu0 0.0
    %2813 = vmatpush2.msra.mxu0 0.0
    %2814 = vmatprep.subr.mxu0 0.0
    %2815 = vmatpush2.msra.mxu0 0.0
    %2816 = vmatprep.subr.mxu0 0.0
    %2817 = vmatpush2.msra.mxu0 0.0
    %2818 = vmatprep.subr.mxu0 0.0
    %2819 = vmatpush2.msra.mxu0 0.0
    %2820 = vmatprep.subr.mxu0 0.0
    %2821 = vmatpush2.msra.mxu0 0.0
    %2822 = vmatprep.mubr.f32.mxu0 0.0
    %v2823 = vand.u32 %v2559, 4294901760
    %v2824 = vsub.f32 %v2559, %v2823
    %2825 = vmatmul.mubr.f32.gmra.mxu0 %v2824
    %v2826 = vpop.f32.mrf.mxu0
    %v2827 = vadd.f32 %v2741, %v2826
    %v2828 = vpop.f32.mrf.mxu0
    %2829 = vmatprep.mubr.f32.mxu0 0.0
    %v2830 = vand.u32 %v2562, 4294901760
    %v2831 = vsub.f32 %v2562, %v2830
    %2832 = vmatmul.mubr.f32.gmra.mxu0 %v2831
    %v2833 = vpop.f32.mrf.mxu0
    %v2834 = vadd.f32 %v2747, %v2833
    %v2835 = vpop.f32.mrf.mxu0
    %2836 = vdwg.mxu0
    %2837 = vmatprep.subr.mxu0 0.0
    %2838 = vmatpush1.msra.mxu0 0.0
    %2839 = vmatprep.subr.mxu0 0.0
    %2840 = vmatpush1.msra.mxu0 0.0
    %2841 = vmatprep.subr.mxu0 0.0
    %2842 = vmatpush1.msra.mxu0 0.0
    %2843 = vmatprep.subr.mxu0 0.0
    %2844 = vmatpush1.msra.mxu0 0.0
    %2845 = vmatprep.subr.mxu0 0.0
    %2846 = vmatpush1.msra.mxu0 0.0
    %2847 = vmatprep.subr.mxu0 0.0
    %2848 = vmatpush1.msra.mxu0 0.0
    %2849 = vmatprep.subr.mxu0 0.0
    %2850 = vmatpush1.msra.mxu0 0.0
    %2851 = vmatprep.subr.mxu0 0.0
    %2852 = vmatpush1.msra.mxu0 0.0
    %2853 = vmatprep.subr.mxu0 0.0
    %2854 = vmatpush1.msra.mxu0 0.0
    %2855 = vmatprep.subr.mxu0 0.0
    %2856 = vmatpush1.msra.mxu0 0.0
    %2857 = vmatprep.subr.mxu0 0.0
    %2858 = vmatpush1.msra.mxu0 0.0
    %2859 = vmatprep.subr.mxu0 0.0
    %2860 = vmatpush1.msra.mxu0 0.0
    %2861 = vmatprep.subr.mxu0 0.0
    %v2862 = vand.u32 %v2553, 4294901760
    %2863 = vmatpush1.msra.mxu0 %v2862
    %2864 = vmatprep.subr.mxu0 0.0
    %v2865 = vand.u32 %v2551, 4294901760
    %2866 = vmatpush1.msra.mxu0 %v2865
    %2867 = vmatprep.subr.mxu0 0.0
    %v2868 = vand.u32 %v2549, 4294901760
    %2869 = vmatpush1.msra.mxu0 %v2868
    %2870 = vmatprep.subr.mxu0 0.0
    %v2871 = vand.u32 %v2547, 4294901760
    %2872 = vmatpush1.msra.mxu0 %v2871
    %2873 = vmatprep.subr.mxu0 0.0
    %2874 = vmatpush2.msra.mxu0 0.0
    %2875 = vmatprep.subr.mxu0 0.0
    %2876 = vmatpush2.msra.mxu0 0.0
    %2877 = vmatprep.subr.mxu0 0.0
    %2878 = vmatpush2.msra.mxu0 0.0
    %2879 = vmatprep.subr.mxu0 0.0
    %2880 = vmatpush2.msra.mxu0 0.0
    %2881 = vmatprep.subr.mxu0 0.0
    %2882 = vmatpush2.msra.mxu0 0.0
    %2883 = vmatprep.subr.mxu0 0.0
    %2884 = vmatpush2.msra.mxu0 0.0
    %2885 = vmatprep.subr.mxu0 0.0
    %2886 = vmatpush2.msra.mxu0 0.0
    %2887 = vmatprep.subr.mxu0 0.0
    %2888 = vmatpush2.msra.mxu0 0.0
    %2889 = vmatprep.subr.mxu0 0.0
    %2890 = vmatpush2.msra.mxu0 0.0
    %2891 = vmatprep.subr.mxu0 0.0
    %2892 = vmatpush2.msra.mxu0 0.0
    %2893 = vmatprep.subr.mxu0 0.0
    %2894 = vmatpush2.msra.mxu0 0.0
    %2895 = vmatprep.subr.mxu0 0.0
    %2896 = vmatpush2.msra.mxu0 0.0
    %2897 = vmatprep.subr.mxu0 0.0
    %2898 = vmatpush2.msra.mxu0 0.0
    %2899 = vmatprep.subr.mxu0 0.0
    %2900 = vmatpush2.msra.mxu0 0.0
    %2901 = vmatprep.subr.mxu0 0.0
    %2902 = vmatpush2.msra.mxu0 0.0
    %2903 = vmatprep.subr.mxu0 0.0
    %2904 = vmatpush2.msra.mxu0 0.0
    %2905 = vmatprep.mubr.f32.mxu0 0.0
    %v2906 = vand.u32 %v2559, 4294901760
    %v2907 = vsub.f32 %v2559, %v2906
    %v2908 = vand.u32 %v2907, 4294901760
    %2909 = vmatmul.mubr.f32.gmra.mxu0 %v2908
    %v2910 = vpop.f32.mrf.mxu0
    %v2911 = vadd.f32 %v2827, %v2910
    %v2912 = vpop.f32.mrf.mxu0
    %2913 = vmatprep.mubr.f32.mxu0 0.0
    %v2914 = vand.u32 %v2562, 4294901760
    %v2915 = vsub.f32 %v2562, %v2914
    %v2916 = vand.u32 %v2915, 4294901760
    %2917 = vmatmul.mubr.f32.gmra.mxu0 %v2916
    %v2918 = vpop.f32.mrf.mxu0
    %v2919 = vadd.f32 %v2834, %v2918
    %v2920 = vpop.f32.mrf.mxu0
    %2921 = vdwg.mxu0
    %2922 = vmatprep.subr.mxu0 0.0
    %2923 = vmatpush1.msra.mxu0 0.0
    %2924 = vmatprep.subr.mxu0 0.0
    %2925 = vmatpush1.msra.mxu0 0.0
    %2926 = vmatprep.subr.mxu0 0.0
    %2927 = vmatpush1.msra.mxu0 0.0
    %2928 = vmatprep.subr.mxu0 0.0
    %2929 = vmatpush1.msra.mxu0 0.0
    %2930 = vmatprep.subr.mxu0 0.0
    %2931 = vmatpush1.msra.mxu0 0.0
    %2932 = vmatprep.subr.mxu0 0.0
    %2933 = vmatpush1.msra.mxu0 0.0
    %2934 = vmatprep.subr.mxu0 0.0
    %2935 = vmatpush1.msra.mxu0 0.0
    %2936 = vmatprep.subr.mxu0 0.0
    %2937 = vmatpush1.msra.mxu0 0.0
    %2938 = vmatprep.subr.mxu0 0.0
    %2939 = vmatpush1.msra.mxu0 0.0
    %2940 = vmatprep.subr.mxu0 0.0
    %2941 = vmatpush1.msra.mxu0 0.0
    %2942 = vmatprep.subr.mxu0 0.0
    %2943 = vmatpush1.msra.mxu0 0.0
    %2944 = vmatprep.subr.mxu0 0.0
    %2945 = vmatpush1.msra.mxu0 0.0
    %2946 = vmatprep.subr.mxu0 0.0
    %v2947 = vand.u32 %v2553, 4294901760
    %v2948 = vsub.f32 %v2553, %v2947
    %v2949 = vand.u32 %v2948, 4294901760
    %2950 = vmatpush1.msra.mxu0 %v2949
    %2951 = vmatprep.subr.mxu0 0.0
    %v2952 = vand.u32 %v2551, 4294901760
    %v2953 = vsub.f32 %v2551, %v2952
    %v2954 = vand.u32 %v2953, 4294901760
    %2955 = vmatpush1.msra.mxu0 %v2954
    %2956 = vmatprep.subr.mxu0 0.0
    %v2957 = vand.u32 %v2549, 4294901760
    %v2958 = vsub.f32 %v2549, %v2957
    %v2959 = vand.u32 %v2958, 4294901760
    %2960 = vmatpush1.msra.mxu0 %v2959
    %2961 = vmatprep.subr.mxu0 0.0
    %v2962 = vand.u32 %v2547, 4294901760
    %v2963 = vsub.f32 %v2547, %v2962
    %v2964 = vand.u32 %v2963, 4294901760
    %2965 = vmatpush1.msra.mxu0 %v2964
    %2966 = vmatprep.subr.mxu0 0.0
    %2967 = vmatpush2.msra.mxu0 0.0
    %2968 = vmatprep.subr.mxu0 0.0
    %2969 = vmatpush2.msra.mxu0 0.0
    %2970 = vmatprep.subr.mxu0 0.0
    %2971 = vmatpush2.msra.mxu0 0.0
    %2972 = vmatprep.subr.mxu0 0.0
    %2973 = vmatpush2.msra.mxu0 0.0
    %2974 = vmatprep.subr.mxu0 0.0
    %2975 = vmatpush2.msra.mxu0 0.0
    %2976 = vmatprep.subr.mxu0 0.0
    %2977 = vmatpush2.msra.mxu0 0.0
    %2978 = vmatprep.subr.mxu0 0.0
    %2979 = vmatpush2.msra.mxu0 0.0
    %2980 = vmatprep.subr.mxu0 0.0
    %2981 = vmatpush2.msra.mxu0 0.0
    %2982 = vmatprep.subr.mxu0 0.0
    %2983 = vmatpush2.msra.mxu0 0.0
    %2984 = vmatprep.subr.mxu0 0.0
    %2985 = vmatpush2.msra.mxu0 0.0
    %2986 = vmatprep.subr.mxu0 0.0
    %2987 = vmatpush2.msra.mxu0 0.0
    %2988 = vmatprep.subr.mxu0 0.0
    %2989 = vmatpush2.msra.mxu0 0.0
    %2990 = vmatprep.subr.mxu0 0.0
    %2991 = vmatpush2.msra.mxu0 0.0
    %2992 = vmatprep.subr.mxu0 0.0
    %2993 = vmatpush2.msra.mxu0 0.0
    %2994 = vmatprep.subr.mxu0 0.0
    %2995 = vmatpush2.msra.mxu0 0.0
    %2996 = vmatprep.subr.mxu0 0.0
    %2997 = vmatpush2.msra.mxu0 0.0
    %2998 = vmatprep.mubr.f32.mxu0 0.0
    %v2999 = vand.u32 %v2559, 4294901760
    %3000 = vmatmul.mubr.f32.gmra.mxu0 %v2999
    %v3001 = vpop.f32.mrf.mxu0
    %v3002 = vadd.f32 %v2911, %v3001
    %v3003 = vpop.f32.mrf.mxu0
    %3004 = vmatprep.mubr.f32.mxu0 0.0
    %v3005 = vand.u32 %v2562, 4294901760
    %3006 = vmatmul.mubr.f32.gmra.mxu0 %v3005
    %v3007 = vpop.f32.mrf.mxu0
    %v3008 = vadd.f32 %v2919, %v3007
    %v3009 = vpop.f32.mrf.mxu0
    %3010 = vdwg.mxu0
    %3011 = vmatprep.subr.mxu0 0.0
    %3012 = vmatpush1.msra.mxu0 0.0
    %3013 = vmatprep.subr.mxu0 0.0
    %3014 = vmatpush1.msra.mxu0 0.0
    %3015 = vmatprep.subr.mxu0 0.0
    %3016 = vmatpush1.msra.mxu0 0.0
    %3017 = vmatprep.subr.mxu0 0.0
    %3018 = vmatpush1.msra.mxu0 0.0
    %3019 = vmatprep.subr.mxu0 0.0
    %3020 = vmatpush1.msra.mxu0 0.0
    %3021 = vmatprep.subr.mxu0 0.0
    %3022 = vmatpush1.msra.mxu0 0.0
    %3023 = vmatprep.subr.mxu0 0.0
    %3024 = vmatpush1.msra.mxu0 0.0
    %3025 = vmatprep.subr.mxu0 0.0
    %3026 = vmatpush1.msra.mxu0 0.0
    %3027 = vmatprep.subr.mxu0 0.0
    %3028 = vmatpush1.msra.mxu0 0.0
    %3029 = vmatprep.subr.mxu0 0.0
    %3030 = vmatpush1.msra.mxu0 0.0
    %3031 = vmatprep.subr.mxu0 0.0
    %3032 = vmatpush1.msra.mxu0 0.0
    %3033 = vmatprep.subr.mxu0 0.0
    %3034 = vmatpush1.msra.mxu0 0.0
    %3035 = vmatprep.subr.mxu0 0.0
    %v3036 = vand.u32 %v2553, 4294901760
    %3037 = vmatpush1.msra.mxu0 %v3036
    %3038 = vmatprep.subr.mxu0 0.0
    %v3039 = vand.u32 %v2551, 4294901760
    %3040 = vmatpush1.msra.mxu0 %v3039
    %3041 = vmatprep.subr.mxu0 0.0
    %v3042 = vand.u32 %v2549, 4294901760
    %3043 = vmatpush1.msra.mxu0 %v3042
    %3044 = vmatprep.subr.mxu0 0.0
    %v3045 = vand.u32 %v2547, 4294901760
    %3046 = vmatpush1.msra.mxu0 %v3045
    %3047 = vmatprep.subr.mxu0 0.0
    %3048 = vmatpush2.msra.mxu0 0.0
    %3049 = vmatprep.subr.mxu0 0.0
    %3050 = vmatpush2.msra.mxu0 0.0
    %3051 = vmatprep.subr.mxu0 0.0
    %3052 = vmatpush2.msra.mxu0 0.0
    %3053 = vmatprep.subr.mxu0 0.0
    %3054 = vmatpush2.msra.mxu0 0.0
    %3055 = vmatprep.subr.mxu0 0.0
    %3056 = vmatpush2.msra.mxu0 0.0
    %3057 = vmatprep.subr.mxu0 0.0
    %3058 = vmatpush2.msra.mxu0 0.0
    %3059 = vmatprep.subr.mxu0 0.0
    %3060 = vmatpush2.msra.mxu0 0.0
    %3061 = vmatprep.subr.mxu0 0.0
    %3062 = vmatpush2.msra.mxu0 0.0
    %3063 = vmatprep.subr.mxu0 0.0
    %3064 = vmatpush2.msra.mxu0 0.0
    %3065 = vmatprep.subr.mxu0 0.0
    %3066 = vmatpush2.msra.mxu0 0.0
    %3067 = vmatprep.subr.mxu0 0.0
    %3068 = vmatpush2.msra.mxu0 0.0
    %3069 = vmatprep.subr.mxu0 0.0
    %3070 = vmatpush2.msra.mxu0 0.0
    %3071 = vmatprep.subr.mxu0 0.0
    %3072 = vmatpush2.msra.mxu0 0.0
    %3073 = vmatprep.subr.mxu0 0.0
    %3074 = vmatpush2.msra.mxu0 0.0
    %3075 = vmatprep.subr.mxu0 0.0
    %3076 = vmatpush2.msra.mxu0 0.0
    %3077 = vmatprep.subr.mxu0 0.0
    %3078 = vmatpush2.msra.mxu0 0.0
    %3079 = vmatprep.mubr.f32.mxu0 0.0
    %v3080 = vand.u32 %v2559, 4294901760
    %3081 = vmatmul.mubr.f32.gmra.mxu0 %v3080
    %v3082 = vpop.f32.mrf.mxu0
    %v3083 = vadd.f32 %v3002, %v3082
    %v3084 = vpop.f32.mrf.mxu0
    %3085 = vmatprep.mubr.f32.mxu0 0.0
    %v3086 = vand.u32 %v2562, 4294901760
    %3087 = vmatmul.mubr.f32.gmra.mxu0 %v3086
    %v3088 = vpop.f32.mrf.mxu0
    %v3089 = vadd.f32 %v3008, %v3088
    %v3090 = vpop.f32.mrf.mxu0
    %3091 = vdwg.mxu0
    %v3092 = vadd.f32 %v21, %v3083
    %v3093 = vadd.f32 %v22, %v3089
    %v3094 = vsel %vm42, %v3092, 0.0
    %3095 = vadd.xlane.f32.xlu0 %v3094
    %v3096 = vpop.xlane.xlu0 %3095
    %v3097 = vsel %vm42, %v3093, 0.0
    %3098 = vadd.xlane.f32.xlu0 %v3097
    %v3099 = vpop.xlane.xlu0 %3098
    %v3100 = vmul.f32 %v3096, %v49
    %v3101 = vmul.f32 %v3099, %v49
    %v3102 = vsub.f32 %v3092, %v3100
    %v3103 = vsub.f32 %v3093, %v3101
    %v3104 = vmul.f32 %v3102, %v3102
    %v3105 = vmul.f32 %v3103, %v3103
    %v3106 = vsel %vm42, %v3104, 0.0
    %3107 = vadd.xlane.f32.xlu0 %v3106
    %v3108 = vpop.xlane.xlu0 %3107
    %v3109 = vsel %vm42, %v3105, 0.0
    %3110 = vadd.xlane.f32.xlu0 %v3109
    %v3111 = vpop.xlane.xlu0 %3110
    %v3112 = vmul.f32 %v3108, %v62
    %v3113 = vmul.f32 %v3111, %v62
    %v3114 = vrsqrt.pop %v3112
    %v3115 = vmul.f32 %v3112, %v3114
    %vm3116 = vcmp.eq.f32.partialorder %v3112, inf
    %v3117 = vsel %vm3116, %v3112, %v3115
    %vm3118 = vcmp.eq.f32.partialorder %v3112, 0.0
    %v3119 = vand.u32 %v3112, 2147483648
    %v3120 = vsel %vm3118, %v3119, %v3117
    %v3121 = vrsqrt.pop %v3113
    %v3122 = vmul.f32 %v3113, %v3121
    %vm3123 = vcmp.eq.f32.partialorder %v3113, inf
    %v3124 = vsel %vm3123, %v3113, %v3122
    %vm3125 = vcmp.eq.f32.partialorder %v3113, 0.0
    %v3126 = vand.u32 %v3113, 2147483648
    %v3127 = vsel %vm3125, %v3126, %v3124
    %v3128 = vadd.f32 %v3120, 1e-06
    %v3129 = vadd.f32 %v3127, 1e-06
    %v3130 = vrcp.pop %v3128
    %v3131 = vmul.f32 %v3102, %v3130
    %v3132 = vrcp.pop %v3129
    %v3133 = vmul.f32 %v3103, %v3132
    %v3135 = vlaneseq
    %v3136 = vshrl.u32 %v3135, 7
    %v3137 = vsub.s32 0, %v3136
    %v3138 = vrot.slane %v41, %v3137
    %v3141 = vsel %vm42, %v3131, 0
    %v3144 = vsel %vm42, %v3133, 0
    %3146 = vmatprep.subr.mxu0 0.0
    %3147 = vmatpush1.msra.mxu0 0.0
    %3148 = vmatprep.subr.mxu0 0.0
    %3149 = vmatpush1.msra.mxu0 0.0
    %3150 = vmatprep.subr.mxu0 0.0
    %3151 = vmatpush1.msra.mxu0 0.0
    %3152 = vmatprep.subr.mxu0 0.0
    %3153 = vmatpush1.msra.mxu0 0.0
    %3154 = vmatprep.subr.mxu0 0.0
    %3155 = vmatpush1.msra.mxu0 0.0
    %3156 = vmatprep.subr.mxu0 0.0
    %3157 = vmatpush1.msra.mxu0 0.0
    %3158 = vmatprep.subr.mxu0 0.0
    %3159 = vmatpush1.msra.mxu0 0.0
    %3160 = vmatprep.subr.mxu0 0.0
    %3161 = vmatpush1.msra.mxu0 0.0
    %3162 = vmatprep.subr.mxu0 0.0
    %3163 = vmatpush1.msra.mxu0 0.0
    %3164 = vmatprep.subr.mxu0 0.0
    %3165 = vmatpush1.msra.mxu0 0.0
    %3166 = vmatprep.subr.mxu0 0.0
    %3167 = vmatpush1.msra.mxu0 0.0
    %3168 = vmatprep.subr.mxu0 0.0
    %3169 = vmatpush1.msra.mxu0 0.0
    %3170 = vmatprep.subr.mxu0 0.0
    %v3171 = vand.u32 %v32, 4294901760
    %3172 = vmatpush1.msra.mxu0 %v3171
    %3173 = vmatprep.subr.mxu0 0.0
    %v3174 = vand.u32 %v30, 4294901760
    %3175 = vmatpush1.msra.mxu0 %v3174
    %3176 = vmatprep.subr.mxu0 0.0
    %v3177 = vand.u32 %v28, 4294901760
    %3178 = vmatpush1.msra.mxu0 %v3177
    %3179 = vmatprep.subr.mxu0 0.0
    %v3180 = vand.u32 %v26, 4294901760
    %3181 = vmatpush1.msra.mxu0 %v3180
    %3182 = vmatprep.subr.mxu0 0.0
    %3183 = vmatpush2.msra.mxu0 0.0
    %3184 = vmatprep.subr.mxu0 0.0
    %3185 = vmatpush2.msra.mxu0 0.0
    %3186 = vmatprep.subr.mxu0 0.0
    %3187 = vmatpush2.msra.mxu0 0.0
    %3188 = vmatprep.subr.mxu0 0.0
    %3189 = vmatpush2.msra.mxu0 0.0
    %3190 = vmatprep.subr.mxu0 0.0
    %3191 = vmatpush2.msra.mxu0 0.0
    %3192 = vmatprep.subr.mxu0 0.0
    %3193 = vmatpush2.msra.mxu0 0.0
    %3194 = vmatprep.subr.mxu0 0.0
    %3195 = vmatpush2.msra.mxu0 0.0
    %3196 = vmatprep.subr.mxu0 0.0
    %3197 = vmatpush2.msra.mxu0 0.0
    %3198 = vmatprep.subr.mxu0 0.0
    %3199 = vmatpush2.msra.mxu0 0.0
    %3200 = vmatprep.subr.mxu0 0.0
    %3201 = vmatpush2.msra.mxu0 0.0
    %3202 = vmatprep.subr.mxu0 0.0
    %3203 = vmatpush2.msra.mxu0 0.0
    %3204 = vmatprep.subr.mxu0 0.0
    %3205 = vmatpush2.msra.mxu0 0.0
    %3206 = vmatprep.subr.mxu0 0.0
    %3207 = vmatpush2.msra.mxu0 0.0
    %3208 = vmatprep.subr.mxu0 0.0
    %3209 = vmatpush2.msra.mxu0 0.0
    %3210 = vmatprep.subr.mxu0 0.0
    %3211 = vmatpush2.msra.mxu0 0.0
    %3212 = vmatprep.subr.mxu0 0.0
    %3213 = vmatpush2.msra.mxu0 0.0
    %3214 = vmatprep.mubr.f32.mxu0 0.0
    %v3215 = vand.u32 %v3141, 4294901760
    %v3216 = vsub.f32 %v3141, %v3215
    %v3217 = vand.u32 %v3216, 4294901760
    %v3218 = vsub.f32 %v3216, %v3217
    %v3219 = vand.u32 %v3218, 4294901760
    %3220 = vmatmul.mubr.f32.gmra.mxu0 %v3219
    %v3221 = vpop.f32.mrf.mxu0
    %v3222 = vadd.f32 %v3138, %v3221
    %v3223 = vpop.f32.mrf.mxu0
    %3224 = vmatprep.mubr.f32.mxu0 0.0
    %v3225 = vand.u32 %v3144, 4294901760
    %v3226 = vsub.f32 %v3144, %v3225
    %v3227 = vand.u32 %v3226, 4294901760
    %v3228 = vsub.f32 %v3226, %v3227
    %v3229 = vand.u32 %v3228, 4294901760
    %3230 = vmatmul.mubr.f32.gmra.mxu0 %v3229
    %v3231 = vpop.f32.mrf.mxu0
    %v3232 = vadd.f32 %v3138, %v3231
    %v3233 = vpop.f32.mrf.mxu0
    %3234 = vdwg.mxu0
    %3235 = vmatprep.subr.mxu0 0.0
    %3236 = vmatpush1.msra.mxu0 0.0
    %3237 = vmatprep.subr.mxu0 0.0
    %3238 = vmatpush1.msra.mxu0 0.0
    %3239 = vmatprep.subr.mxu0 0.0
    %3240 = vmatpush1.msra.mxu0 0.0
    %3241 = vmatprep.subr.mxu0 0.0
    %3242 = vmatpush1.msra.mxu0 0.0
    %3243 = vmatprep.subr.mxu0 0.0
    %3244 = vmatpush1.msra.mxu0 0.0
    %3245 = vmatprep.subr.mxu0 0.0
    %3246 = vmatpush1.msra.mxu0 0.0
    %3247 = vmatprep.subr.mxu0 0.0
    %3248 = vmatpush1.msra.mxu0 0.0
    %3249 = vmatprep.subr.mxu0 0.0
    %3250 = vmatpush1.msra.mxu0 0.0
    %3251 = vmatprep.subr.mxu0 0.0
    %3252 = vmatpush1.msra.mxu0 0.0
    %3253 = vmatprep.subr.mxu0 0.0
    %3254 = vmatpush1.msra.mxu0 0.0
    %3255 = vmatprep.subr.mxu0 0.0
    %3256 = vmatpush1.msra.mxu0 0.0
    %3257 = vmatprep.subr.mxu0 0.0
    %3258 = vmatpush1.msra.mxu0 0.0
    %3259 = vmatprep.subr.mxu0 0.0
    %v3260 = vand.u32 %v32, 4294901760
    %v3261 = vsub.f32 %v32, %v3260
    %v3262 = vand.u32 %v3261, 4294901760
    %v3263 = vsub.f32 %v3261, %v3262
    %v3264 = vand.u32 %v3263, 4294901760
    %3265 = vmatpush1.msra.mxu0 %v3264
    %3266 = vmatprep.subr.mxu0 0.0
    %v3267 = vand.u32 %v30, 4294901760
    %v3268 = vsub.f32 %v30, %v3267
    %v3269 = vand.u32 %v3268, 4294901760
    %v3270 = vsub.f32 %v3268, %v3269
    %v3271 = vand.u32 %v3270, 4294901760
    %3272 = vmatpush1.msra.mxu0 %v3271
    %3273 = vmatprep.subr.mxu0 0.0
    %v3274 = vand.u32 %v28, 4294901760
    %v3275 = vsub.f32 %v28, %v3274
    %v3276 = vand.u32 %v3275, 4294901760
    %v3277 = vsub.f32 %v3275, %v3276
    %v3278 = vand.u32 %v3277, 4294901760
    %3279 = vmatpush1.msra.mxu0 %v3278
    %3280 = vmatprep.subr.mxu0 0.0
    %v3281 = vand.u32 %v26, 4294901760
    %v3282 = vsub.f32 %v26, %v3281
    %v3283 = vand.u32 %v3282, 4294901760
    %v3284 = vsub.f32 %v3282, %v3283
    %v3285 = vand.u32 %v3284, 4294901760
    %3286 = vmatpush1.msra.mxu0 %v3285
    %3287 = vmatprep.subr.mxu0 0.0
    %3288 = vmatpush2.msra.mxu0 0.0
    %3289 = vmatprep.subr.mxu0 0.0
    %3290 = vmatpush2.msra.mxu0 0.0
    %3291 = vmatprep.subr.mxu0 0.0
    %3292 = vmatpush2.msra.mxu0 0.0
    %3293 = vmatprep.subr.mxu0 0.0
    %3294 = vmatpush2.msra.mxu0 0.0
    %3295 = vmatprep.subr.mxu0 0.0
    %3296 = vmatpush2.msra.mxu0 0.0
    %3297 = vmatprep.subr.mxu0 0.0
    %3298 = vmatpush2.msra.mxu0 0.0
    %3299 = vmatprep.subr.mxu0 0.0
    %3300 = vmatpush2.msra.mxu0 0.0
    %3301 = vmatprep.subr.mxu0 0.0
    %3302 = vmatpush2.msra.mxu0 0.0
    %3303 = vmatprep.subr.mxu0 0.0
    %3304 = vmatpush2.msra.mxu0 0.0
    %3305 = vmatprep.subr.mxu0 0.0
    %3306 = vmatpush2.msra.mxu0 0.0
    %3307 = vmatprep.subr.mxu0 0.0
    %3308 = vmatpush2.msra.mxu0 0.0
    %3309 = vmatprep.subr.mxu0 0.0
    %3310 = vmatpush2.msra.mxu0 0.0
    %3311 = vmatprep.subr.mxu0 0.0
    %3312 = vmatpush2.msra.mxu0 0.0
    %3313 = vmatprep.subr.mxu0 0.0
    %3314 = vmatpush2.msra.mxu0 0.0
    %3315 = vmatprep.subr.mxu0 0.0
    %3316 = vmatpush2.msra.mxu0 0.0
    %3317 = vmatprep.subr.mxu0 0.0
    %3318 = vmatpush2.msra.mxu0 0.0
    %3319 = vmatprep.mubr.f32.mxu0 0.0
    %v3320 = vand.u32 %v3141, 4294901760
    %3321 = vmatmul.mubr.f32.gmra.mxu0 %v3320
    %v3322 = vpop.f32.mrf.mxu0
    %v3323 = vadd.f32 %v3222, %v3322
    %v3324 = vpop.f32.mrf.mxu0
    %3325 = vmatprep.mubr.f32.mxu0 0.0
    %v3326 = vand.u32 %v3144, 4294901760
    %3327 = vmatmul.mubr.f32.gmra.mxu0 %v3326
    %v3328 = vpop.f32.mrf.mxu0
    %v3329 = vadd.f32 %v3232, %v3328
    %v3330 = vpop.f32.mrf.mxu0
    %3331 = vdwg.mxu0
    %3332 = vmatprep.subr.mxu0 0.0
    %3333 = vmatpush1.msra.mxu0 0.0
    %3334 = vmatprep.subr.mxu0 0.0
    %3335 = vmatpush1.msra.mxu0 0.0
    %3336 = vmatprep.subr.mxu0 0.0
    %3337 = vmatpush1.msra.mxu0 0.0
    %3338 = vmatprep.subr.mxu0 0.0
    %3339 = vmatpush1.msra.mxu0 0.0
    %3340 = vmatprep.subr.mxu0 0.0
    %3341 = vmatpush1.msra.mxu0 0.0
    %3342 = vmatprep.subr.mxu0 0.0
    %3343 = vmatpush1.msra.mxu0 0.0
    %3344 = vmatprep.subr.mxu0 0.0
    %3345 = vmatpush1.msra.mxu0 0.0
    %3346 = vmatprep.subr.mxu0 0.0
    %3347 = vmatpush1.msra.mxu0 0.0
    %3348 = vmatprep.subr.mxu0 0.0
    %3349 = vmatpush1.msra.mxu0 0.0
    %3350 = vmatprep.subr.mxu0 0.0
    %3351 = vmatpush1.msra.mxu0 0.0
    %3352 = vmatprep.subr.mxu0 0.0
    %3353 = vmatpush1.msra.mxu0 0.0
    %3354 = vmatprep.subr.mxu0 0.0
    %3355 = vmatpush1.msra.mxu0 0.0
    %3356 = vmatprep.subr.mxu0 0.0
    %v3357 = vand.u32 %v32, 4294901760
    %v3358 = vsub.f32 %v32, %v3357
    %3359 = vmatpush1.msra.mxu0 %v3358
    %3360 = vmatprep.subr.mxu0 0.0
    %v3361 = vand.u32 %v30, 4294901760
    %v3362 = vsub.f32 %v30, %v3361
    %3363 = vmatpush1.msra.mxu0 %v3362
    %3364 = vmatprep.subr.mxu0 0.0
    %v3365 = vand.u32 %v28, 4294901760
    %v3366 = vsub.f32 %v28, %v3365
    %3367 = vmatpush1.msra.mxu0 %v3366
    %3368 = vmatprep.subr.mxu0 0.0
    %v3369 = vand.u32 %v26, 4294901760
    %v3370 = vsub.f32 %v26, %v3369
    %3371 = vmatpush1.msra.mxu0 %v3370
    %3372 = vmatprep.subr.mxu0 0.0
    %3373 = vmatpush2.msra.mxu0 0.0
    %3374 = vmatprep.subr.mxu0 0.0
    %3375 = vmatpush2.msra.mxu0 0.0
    %3376 = vmatprep.subr.mxu0 0.0
    %3377 = vmatpush2.msra.mxu0 0.0
    %3378 = vmatprep.subr.mxu0 0.0
    %3379 = vmatpush2.msra.mxu0 0.0
    %3380 = vmatprep.subr.mxu0 0.0
    %3381 = vmatpush2.msra.mxu0 0.0
    %3382 = vmatprep.subr.mxu0 0.0
    %3383 = vmatpush2.msra.mxu0 0.0
    %3384 = vmatprep.subr.mxu0 0.0
    %3385 = vmatpush2.msra.mxu0 0.0
    %3386 = vmatprep.subr.mxu0 0.0
    %3387 = vmatpush2.msra.mxu0 0.0
    %3388 = vmatprep.subr.mxu0 0.0
    %3389 = vmatpush2.msra.mxu0 0.0
    %3390 = vmatprep.subr.mxu0 0.0
    %3391 = vmatpush2.msra.mxu0 0.0
    %3392 = vmatprep.subr.mxu0 0.0
    %3393 = vmatpush2.msra.mxu0 0.0
    %3394 = vmatprep.subr.mxu0 0.0
    %3395 = vmatpush2.msra.mxu0 0.0
    %3396 = vmatprep.subr.mxu0 0.0
    %3397 = vmatpush2.msra.mxu0 0.0
    %3398 = vmatprep.subr.mxu0 0.0
    %3399 = vmatpush2.msra.mxu0 0.0
    %3400 = vmatprep.subr.mxu0 0.0
    %3401 = vmatpush2.msra.mxu0 0.0
    %3402 = vmatprep.subr.mxu0 0.0
    %3403 = vmatpush2.msra.mxu0 0.0
    %3404 = vmatprep.mubr.f32.mxu0 0.0
    %v3405 = vand.u32 %v3141, 4294901760
    %v3406 = vsub.f32 %v3141, %v3405
    %3407 = vmatmul.mubr.f32.gmra.mxu0 %v3406
    %v3408 = vpop.f32.mrf.mxu0
    %v3409 = vadd.f32 %v3323, %v3408
    %v3410 = vpop.f32.mrf.mxu0
    %3411 = vmatprep.mubr.f32.mxu0 0.0
    %v3412 = vand.u32 %v3144, 4294901760
    %v3413 = vsub.f32 %v3144, %v3412
    %3414 = vmatmul.mubr.f32.gmra.mxu0 %v3413
    %v3415 = vpop.f32.mrf.mxu0
    %v3416 = vadd.f32 %v3329, %v3415
    %v3417 = vpop.f32.mrf.mxu0
    %3418 = vdwg.mxu0
    %3419 = vmatprep.subr.mxu0 0.0
    %3420 = vmatpush1.msra.mxu0 0.0
    %3421 = vmatprep.subr.mxu0 0.0
    %3422 = vmatpush1.msra.mxu0 0.0
    %3423 = vmatprep.subr.mxu0 0.0
    %3424 = vmatpush1.msra.mxu0 0.0
    %3425 = vmatprep.subr.mxu0 0.0
    %3426 = vmatpush1.msra.mxu0 0.0
    %3427 = vmatprep.subr.mxu0 0.0
    %3428 = vmatpush1.msra.mxu0 0.0
    %3429 = vmatprep.subr.mxu0 0.0
    %3430 = vmatpush1.msra.mxu0 0.0
    %3431 = vmatprep.subr.mxu0 0.0
    %3432 = vmatpush1.msra.mxu0 0.0
    %3433 = vmatprep.subr.mxu0 0.0
    %3434 = vmatpush1.msra.mxu0 0.0
    %3435 = vmatprep.subr.mxu0 0.0
    %3436 = vmatpush1.msra.mxu0 0.0
    %3437 = vmatprep.subr.mxu0 0.0
    %3438 = vmatpush1.msra.mxu0 0.0
    %3439 = vmatprep.subr.mxu0 0.0
    %3440 = vmatpush1.msra.mxu0 0.0
    %3441 = vmatprep.subr.mxu0 0.0
    %3442 = vmatpush1.msra.mxu0 0.0
    %3443 = vmatprep.subr.mxu0 0.0
    %v3444 = vand.u32 %v32, 4294901760
    %3445 = vmatpush1.msra.mxu0 %v3444
    %3446 = vmatprep.subr.mxu0 0.0
    %v3447 = vand.u32 %v30, 4294901760
    %3448 = vmatpush1.msra.mxu0 %v3447
    %3449 = vmatprep.subr.mxu0 0.0
    %v3450 = vand.u32 %v28, 4294901760
    %3451 = vmatpush1.msra.mxu0 %v3450
    %3452 = vmatprep.subr.mxu0 0.0
    %v3453 = vand.u32 %v26, 4294901760
    %3454 = vmatpush1.msra.mxu0 %v3453
    %3455 = vmatprep.subr.mxu0 0.0
    %3456 = vmatpush2.msra.mxu0 0.0
    %3457 = vmatprep.subr.mxu0 0.0
    %3458 = vmatpush2.msra.mxu0 0.0
    %3459 = vmatprep.subr.mxu0 0.0
    %3460 = vmatpush2.msra.mxu0 0.0
    %3461 = vmatprep.subr.mxu0 0.0
    %3462 = vmatpush2.msra.mxu0 0.0
    %3463 = vmatprep.subr.mxu0 0.0
    %3464 = vmatpush2.msra.mxu0 0.0
    %3465 = vmatprep.subr.mxu0 0.0
    %3466 = vmatpush2.msra.mxu0 0.0
    %3467 = vmatprep.subr.mxu0 0.0
    %3468 = vmatpush2.msra.mxu0 0.0
    %3469 = vmatprep.subr.mxu0 0.0
    %3470 = vmatpush2.msra.mxu0 0.0
    %3471 = vmatprep.subr.mxu0 0.0
    %3472 = vmatpush2.msra.mxu0 0.0
    %3473 = vmatprep.subr.mxu0 0.0
    %3474 = vmatpush2.msra.mxu0 0.0
    %3475 = vmatprep.subr.mxu0 0.0
    %3476 = vmatpush2.msra.mxu0 0.0
    %3477 = vmatprep.subr.mxu0 0.0
    %3478 = vmatpush2.msra.mxu0 0.0
    %3479 = vmatprep.subr.mxu0 0.0
    %3480 = vmatpush2.msra.mxu0 0.0
    %3481 = vmatprep.subr.mxu0 0.0
    %3482 = vmatpush2.msra.mxu0 0.0
    %3483 = vmatprep.subr.mxu0 0.0
    %3484 = vmatpush2.msra.mxu0 0.0
    %3485 = vmatprep.subr.mxu0 0.0
    %3486 = vmatpush2.msra.mxu0 0.0
    %3487 = vmatprep.mubr.f32.mxu0 0.0
    %v3488 = vand.u32 %v3141, 4294901760
    %v3489 = vsub.f32 %v3141, %v3488
    %v3490 = vand.u32 %v3489, 4294901760
    %3491 = vmatmul.mubr.f32.gmra.mxu0 %v3490
    %v3492 = vpop.f32.mrf.mxu0
    %v3493 = vadd.f32 %v3409, %v3492
    %v3494 = vpop.f32.mrf.mxu0
    %3495 = vmatprep.mubr.f32.mxu0 0.0
    %v3496 = vand.u32 %v3144, 4294901760
    %v3497 = vsub.f32 %v3144, %v3496
    %v3498 = vand.u32 %v3497, 4294901760
    %3499 = vmatmul.mubr.f32.gmra.mxu0 %v3498
    %v3500 = vpop.f32.mrf.mxu0
    %v3501 = vadd.f32 %v3416, %v3500
    %v3502 = vpop.f32.mrf.mxu0
    %3503 = vdwg.mxu0
    %3504 = vmatprep.subr.mxu0 0.0
    %3505 = vmatpush1.msra.mxu0 0.0
    %3506 = vmatprep.subr.mxu0 0.0
    %3507 = vmatpush1.msra.mxu0 0.0
    %3508 = vmatprep.subr.mxu0 0.0
    %3509 = vmatpush1.msra.mxu0 0.0
    %3510 = vmatprep.subr.mxu0 0.0
    %3511 = vmatpush1.msra.mxu0 0.0
    %3512 = vmatprep.subr.mxu0 0.0
    %3513 = vmatpush1.msra.mxu0 0.0
    %3514 = vmatprep.subr.mxu0 0.0
    %3515 = vmatpush1.msra.mxu0 0.0
    %3516 = vmatprep.subr.mxu0 0.0
    %3517 = vmatpush1.msra.mxu0 0.0
    %3518 = vmatprep.subr.mxu0 0.0
    %3519 = vmatpush1.msra.mxu0 0.0
    %3520 = vmatprep.subr.mxu0 0.0
    %3521 = vmatpush1.msra.mxu0 0.0
    %3522 = vmatprep.subr.mxu0 0.0
    %3523 = vmatpush1.msra.mxu0 0.0
    %3524 = vmatprep.subr.mxu0 0.0
    %3525 = vmatpush1.msra.mxu0 0.0
    %3526 = vmatprep.subr.mxu0 0.0
    %3527 = vmatpush1.msra.mxu0 0.0
    %3528 = vmatprep.subr.mxu0 0.0
    %v3529 = vand.u32 %v32, 4294901760
    %v3530 = vsub.f32 %v32, %v3529
    %v3531 = vand.u32 %v3530, 4294901760
    %3532 = vmatpush1.msra.mxu0 %v3531
    %3533 = vmatprep.subr.mxu0 0.0
    %v3534 = vand.u32 %v30, 4294901760
    %v3535 = vsub.f32 %v30, %v3534
    %v3536 = vand.u32 %v3535, 4294901760
    %3537 = vmatpush1.msra.mxu0 %v3536
    %3538 = vmatprep.subr.mxu0 0.0
    %v3539 = vand.u32 %v28, 4294901760
    %v3540 = vsub.f32 %v28, %v3539
    %v3541 = vand.u32 %v3540, 4294901760
    %3542 = vmatpush1.msra.mxu0 %v3541
    %3543 = vmatprep.subr.mxu0 0.0
    %v3544 = vand.u32 %v26, 4294901760
    %v3545 = vsub.f32 %v26, %v3544
    %v3546 = vand.u32 %v3545, 4294901760
    %3547 = vmatpush1.msra.mxu0 %v3546
    %3548 = vmatprep.subr.mxu0 0.0
    %3549 = vmatpush2.msra.mxu0 0.0
    %3550 = vmatprep.subr.mxu0 0.0
    %3551 = vmatpush2.msra.mxu0 0.0
    %3552 = vmatprep.subr.mxu0 0.0
    %3553 = vmatpush2.msra.mxu0 0.0
    %3554 = vmatprep.subr.mxu0 0.0
    %3555 = vmatpush2.msra.mxu0 0.0
    %3556 = vmatprep.subr.mxu0 0.0
    %3557 = vmatpush2.msra.mxu0 0.0
    %3558 = vmatprep.subr.mxu0 0.0
    %3559 = vmatpush2.msra.mxu0 0.0
    %3560 = vmatprep.subr.mxu0 0.0
    %3561 = vmatpush2.msra.mxu0 0.0
    %3562 = vmatprep.subr.mxu0 0.0
    %3563 = vmatpush2.msra.mxu0 0.0
    %3564 = vmatprep.subr.mxu0 0.0
    %3565 = vmatpush2.msra.mxu0 0.0
    %3566 = vmatprep.subr.mxu0 0.0
    %3567 = vmatpush2.msra.mxu0 0.0
    %3568 = vmatprep.subr.mxu0 0.0
    %3569 = vmatpush2.msra.mxu0 0.0
    %3570 = vmatprep.subr.mxu0 0.0
    %3571 = vmatpush2.msra.mxu0 0.0
    %3572 = vmatprep.subr.mxu0 0.0
    %3573 = vmatpush2.msra.mxu0 0.0
    %3574 = vmatprep.subr.mxu0 0.0
    %3575 = vmatpush2.msra.mxu0 0.0
    %3576 = vmatprep.subr.mxu0 0.0
    %3577 = vmatpush2.msra.mxu0 0.0
    %3578 = vmatprep.subr.mxu0 0.0
    %3579 = vmatpush2.msra.mxu0 0.0
    %3580 = vmatprep.mubr.f32.mxu0 0.0
    %v3581 = vand.u32 %v3141, 4294901760
    %3582 = vmatmul.mubr.f32.gmra.mxu0 %v3581
    %v3583 = vpop.f32.mrf.mxu0
    %v3584 = vadd.f32 %v3493, %v3583
    %v3585 = vpop.f32.mrf.mxu0
    %3586 = vmatprep.mubr.f32.mxu0 0.0
    %v3587 = vand.u32 %v3144, 4294901760
    %3588 = vmatmul.mubr.f32.gmra.mxu0 %v3587
    %v3589 = vpop.f32.mrf.mxu0
    %v3590 = vadd.f32 %v3501, %v3589
    %v3591 = vpop.f32.mrf.mxu0
    %3592 = vdwg.mxu0
    %3593 = vmatprep.subr.mxu0 0.0
    %3594 = vmatpush1.msra.mxu0 0.0
    %3595 = vmatprep.subr.mxu0 0.0
    %3596 = vmatpush1.msra.mxu0 0.0
    %3597 = vmatprep.subr.mxu0 0.0
    %3598 = vmatpush1.msra.mxu0 0.0
    %3599 = vmatprep.subr.mxu0 0.0
    %3600 = vmatpush1.msra.mxu0 0.0
    %3601 = vmatprep.subr.mxu0 0.0
    %3602 = vmatpush1.msra.mxu0 0.0
    %3603 = vmatprep.subr.mxu0 0.0
    %3604 = vmatpush1.msra.mxu0 0.0
    %3605 = vmatprep.subr.mxu0 0.0
    %3606 = vmatpush1.msra.mxu0 0.0
    %3607 = vmatprep.subr.mxu0 0.0
    %3608 = vmatpush1.msra.mxu0 0.0
    %3609 = vmatprep.subr.mxu0 0.0
    %3610 = vmatpush1.msra.mxu0 0.0
    %3611 = vmatprep.subr.mxu0 0.0
    %3612 = vmatpush1.msra.mxu0 0.0
    %3613 = vmatprep.subr.mxu0 0.0
    %3614 = vmatpush1.msra.mxu0 0.0
    %3615 = vmatprep.subr.mxu0 0.0
    %3616 = vmatpush1.msra.mxu0 0.0
    %3617 = vmatprep.subr.mxu0 0.0
    %v3618 = vand.u32 %v32, 4294901760
    %3619 = vmatpush1.msra.mxu0 %v3618
    %3620 = vmatprep.subr.mxu0 0.0
    %v3621 = vand.u32 %v30, 4294901760
    %3622 = vmatpush1.msra.mxu0 %v3621
    %3623 = vmatprep.subr.mxu0 0.0
    %v3624 = vand.u32 %v28, 4294901760
    %3625 = vmatpush1.msra.mxu0 %v3624
    %3626 = vmatprep.subr.mxu0 0.0
    %v3627 = vand.u32 %v26, 4294901760
    %3628 = vmatpush1.msra.mxu0 %v3627
    %3629 = vmatprep.subr.mxu0 0.0
    %3630 = vmatpush2.msra.mxu0 0.0
    %3631 = vmatprep.subr.mxu0 0.0
    %3632 = vmatpush2.msra.mxu0 0.0
    %3633 = vmatprep.subr.mxu0 0.0
    %3634 = vmatpush2.msra.mxu0 0.0
    %3635 = vmatprep.subr.mxu0 0.0
    %3636 = vmatpush2.msra.mxu0 0.0
    %3637 = vmatprep.subr.mxu0 0.0
    %3638 = vmatpush2.msra.mxu0 0.0
    %3639 = vmatprep.subr.mxu0 0.0
    %3640 = vmatpush2.msra.mxu0 0.0
    %3641 = vmatprep.subr.mxu0 0.0
    %3642 = vmatpush2.msra.mxu0 0.0
    %3643 = vmatprep.subr.mxu0 0.0
    %3644 = vmatpush2.msra.mxu0 0.0
    %3645 = vmatprep.subr.mxu0 0.0
    %3646 = vmatpush2.msra.mxu0 0.0
    %3647 = vmatprep.subr.mxu0 0.0
    %3648 = vmatpush2.msra.mxu0 0.0
    %3649 = vmatprep.subr.mxu0 0.0
    %3650 = vmatpush2.msra.mxu0 0.0
    %3651 = vmatprep.subr.mxu0 0.0
    %3652 = vmatpush2.msra.mxu0 0.0
    %3653 = vmatprep.subr.mxu0 0.0
    %3654 = vmatpush2.msra.mxu0 0.0
    %3655 = vmatprep.subr.mxu0 0.0
    %3656 = vmatpush2.msra.mxu0 0.0
    %3657 = vmatprep.subr.mxu0 0.0
    %3658 = vmatpush2.msra.mxu0 0.0
    %3659 = vmatprep.subr.mxu0 0.0
    %3660 = vmatpush2.msra.mxu0 0.0
    %3661 = vmatprep.mubr.f32.mxu0 0.0
    %v3662 = vand.u32 %v3141, 4294901760
    %3663 = vmatmul.mubr.f32.gmra.mxu0 %v3662
    %v3664 = vpop.f32.mrf.mxu0
    %v3665 = vadd.f32 %v3584, %v3664
    %v3666 = vpop.f32.mrf.mxu0
    %3667 = vmatprep.mubr.f32.mxu0 0.0
    %v3668 = vand.u32 %v3144, 4294901760
    %3669 = vmatmul.mubr.f32.gmra.mxu0 %v3668
    %v3670 = vpop.f32.mrf.mxu0
    %v3671 = vadd.f32 %v3590, %v3670
    %v3672 = vpop.f32.mrf.mxu0
    %3673 = vdwg.mxu0
    %v3674 = vmax.f32 %v3665, 0.0
    %v3675 = vmax.f32 %v3671, 0.0
    %v3677 = vsel %vm1297, %v3674, 0
    %v3680 = vsel %vm1297, %v3675, 0
    %3682 = vmatprep.subr.mxu0 0.0
    %3683 = vmatpush1.msra.mxu0 0.0
    %3684 = vmatprep.subr.mxu0 0.0
    %3685 = vmatpush1.msra.mxu0 0.0
    %3686 = vmatprep.subr.mxu0 0.0
    %3687 = vmatpush1.msra.mxu0 0.0
    %3688 = vmatprep.subr.mxu0 0.0
    %3689 = vmatpush1.msra.mxu0 0.0
    %3690 = vmatprep.subr.mxu0 0.0
    %3691 = vmatpush1.msra.mxu0 0.0
    %3692 = vmatprep.subr.mxu0 0.0
    %3693 = vmatpush1.msra.mxu0 0.0
    %3694 = vmatprep.subr.mxu0 0.0
    %3695 = vmatpush1.msra.mxu0 0.0
    %3696 = vmatprep.subr.mxu0 0.0
    %3697 = vmatpush1.msra.mxu0 0.0
    %3698 = vmatprep.subr.mxu0 0.0
    %v3699 = vand.u32 %v40, 4294901760
    %3700 = vmatpush1.msra.mxu0 %v3699
    %3701 = vmatprep.subr.mxu0 0.0
    %v3702 = vand.u32 %v39, 4294901760
    %3703 = vmatpush1.msra.mxu0 %v3702
    %3704 = vmatprep.subr.mxu0 0.0
    %v3705 = vand.u32 %v38, 4294901760
    %3706 = vmatpush1.msra.mxu0 %v3705
    %3707 = vmatprep.subr.mxu0 0.0
    %v3708 = vand.u32 %v37, 4294901760
    %3709 = vmatpush1.msra.mxu0 %v3708
    %3710 = vmatprep.subr.mxu0 0.0
    %v3711 = vand.u32 %v36, 4294901760
    %3712 = vmatpush1.msra.mxu0 %v3711
    %3713 = vmatprep.subr.mxu0 0.0
    %v3714 = vand.u32 %v35, 4294901760
    %3715 = vmatpush1.msra.mxu0 %v3714
    %3716 = vmatprep.subr.mxu0 0.0
    %v3717 = vand.u32 %v34, 4294901760
    %3718 = vmatpush1.msra.mxu0 %v3717
    %3719 = vmatprep.subr.mxu0 0.0
    %v3720 = vand.u32 %v33, 4294901760
    %3721 = vmatpush1.msra.mxu0 %v3720
    %3722 = vmatprep.subr.mxu0 0.0
    %3723 = vmatpush2.msra.mxu0 0.0
    %3724 = vmatprep.subr.mxu0 0.0
    %3725 = vmatpush2.msra.mxu0 0.0
    %3726 = vmatprep.subr.mxu0 0.0
    %3727 = vmatpush2.msra.mxu0 0.0
    %3728 = vmatprep.subr.mxu0 0.0
    %3729 = vmatpush2.msra.mxu0 0.0
    %3730 = vmatprep.subr.mxu0 0.0
    %3731 = vmatpush2.msra.mxu0 0.0
    %3732 = vmatprep.subr.mxu0 0.0
    %3733 = vmatpush2.msra.mxu0 0.0
    %3734 = vmatprep.subr.mxu0 0.0
    %3735 = vmatpush2.msra.mxu0 0.0
    %3736 = vmatprep.subr.mxu0 0.0
    %3737 = vmatpush2.msra.mxu0 0.0
    %3738 = vmatprep.subr.mxu0 0.0
    %3739 = vmatpush2.msra.mxu0 0.0
    %3740 = vmatprep.subr.mxu0 0.0
    %3741 = vmatpush2.msra.mxu0 0.0
    %3742 = vmatprep.subr.mxu0 0.0
    %3743 = vmatpush2.msra.mxu0 0.0
    %3744 = vmatprep.subr.mxu0 0.0
    %3745 = vmatpush2.msra.mxu0 0.0
    %3746 = vmatprep.subr.mxu0 0.0
    %3747 = vmatpush2.msra.mxu0 0.0
    %3748 = vmatprep.subr.mxu0 0.0
    %3749 = vmatpush2.msra.mxu0 0.0
    %3750 = vmatprep.subr.mxu0 0.0
    %3751 = vmatpush2.msra.mxu0 0.0
    %3752 = vmatprep.subr.mxu0 0.0
    %3753 = vmatpush2.msra.mxu0 0.0
    %3754 = vmatprep.mubr.f32.mxu0 0.0
    %v3755 = vand.u32 %v3677, 4294901760
    %v3756 = vsub.f32 %v3677, %v3755
    %v3757 = vand.u32 %v3756, 4294901760
    %v3758 = vsub.f32 %v3756, %v3757
    %v3759 = vand.u32 %v3758, 4294901760
    %3760 = vmatmul.mubr.f32.gmra.mxu0 %v3759
    %v3761 = vpop.f32.mrf.mxu0
    %v3762 = vadd.f32 0.0, %v3761
    %v3763 = vpop.f32.mrf.mxu0
    %3764 = vmatprep.mubr.f32.mxu0 0.0
    %v3765 = vand.u32 %v3680, 4294901760
    %v3766 = vsub.f32 %v3680, %v3765
    %v3767 = vand.u32 %v3766, 4294901760
    %v3768 = vsub.f32 %v3766, %v3767
    %v3769 = vand.u32 %v3768, 4294901760
    %3770 = vmatmul.mubr.f32.gmra.mxu0 %v3769
    %v3771 = vpop.f32.mrf.mxu0
    %v3772 = vadd.f32 0.0, %v3771
    %v3773 = vpop.f32.mrf.mxu0
    %3774 = vdwg.mxu0
    %3775 = vmatprep.subr.mxu0 0.0
    %3776 = vmatpush1.msra.mxu0 0.0
    %3777 = vmatprep.subr.mxu0 0.0
    %3778 = vmatpush1.msra.mxu0 0.0
    %3779 = vmatprep.subr.mxu0 0.0
    %3780 = vmatpush1.msra.mxu0 0.0
    %3781 = vmatprep.subr.mxu0 0.0
    %3782 = vmatpush1.msra.mxu0 0.0
    %3783 = vmatprep.subr.mxu0 0.0
    %3784 = vmatpush1.msra.mxu0 0.0
    %3785 = vmatprep.subr.mxu0 0.0
    %3786 = vmatpush1.msra.mxu0 0.0
    %3787 = vmatprep.subr.mxu0 0.0
    %3788 = vmatpush1.msra.mxu0 0.0
    %3789 = vmatprep.subr.mxu0 0.0
    %3790 = vmatpush1.msra.mxu0 0.0
    %3791 = vmatprep.subr.mxu0 0.0
    %v3792 = vand.u32 %v40, 4294901760
    %v3793 = vsub.f32 %v40, %v3792
    %v3794 = vand.u32 %v3793, 4294901760
    %v3795 = vsub.f32 %v3793, %v3794
    %v3796 = vand.u32 %v3795, 4294901760
    %3797 = vmatpush1.msra.mxu0 %v3796
    %3798 = vmatprep.subr.mxu0 0.0
    %v3799 = vand.u32 %v39, 4294901760
    %v3800 = vsub.f32 %v39, %v3799
    %v3801 = vand.u32 %v3800, 4294901760
    %v3802 = vsub.f32 %v3800, %v3801
    %v3803 = vand.u32 %v3802, 4294901760
    %3804 = vmatpush1.msra.mxu0 %v3803
    %3805 = vmatprep.subr.mxu0 0.0
    %v3806 = vand.u32 %v38, 4294901760
    %v3807 = vsub.f32 %v38, %v3806
    %v3808 = vand.u32 %v3807, 4294901760
    %v3809 = vsub.f32 %v3807, %v3808
    %v3810 = vand.u32 %v3809, 4294901760
    %3811 = vmatpush1.msra.mxu0 %v3810
    %3812 = vmatprep.subr.mxu0 0.0
    %v3813 = vand.u32 %v37, 4294901760
    %v3814 = vsub.f32 %v37, %v3813
    %v3815 = vand.u32 %v3814, 4294901760
    %v3816 = vsub.f32 %v3814, %v3815
    %v3817 = vand.u32 %v3816, 4294901760
    %3818 = vmatpush1.msra.mxu0 %v3817
    %3819 = vmatprep.subr.mxu0 0.0
    %v3820 = vand.u32 %v36, 4294901760
    %v3821 = vsub.f32 %v36, %v3820
    %v3822 = vand.u32 %v3821, 4294901760
    %v3823 = vsub.f32 %v3821, %v3822
    %v3824 = vand.u32 %v3823, 4294901760
    %3825 = vmatpush1.msra.mxu0 %v3824
    %3826 = vmatprep.subr.mxu0 0.0
    %v3827 = vand.u32 %v35, 4294901760
    %v3828 = vsub.f32 %v35, %v3827
    %v3829 = vand.u32 %v3828, 4294901760
    %v3830 = vsub.f32 %v3828, %v3829
    %v3831 = vand.u32 %v3830, 4294901760
    %3832 = vmatpush1.msra.mxu0 %v3831
    %3833 = vmatprep.subr.mxu0 0.0
    %v3834 = vand.u32 %v34, 4294901760
    %v3835 = vsub.f32 %v34, %v3834
    %v3836 = vand.u32 %v3835, 4294901760
    %v3837 = vsub.f32 %v3835, %v3836
    %v3838 = vand.u32 %v3837, 4294901760
    %3839 = vmatpush1.msra.mxu0 %v3838
    %3840 = vmatprep.subr.mxu0 0.0
    %v3841 = vand.u32 %v33, 4294901760
    %v3842 = vsub.f32 %v33, %v3841
    %v3843 = vand.u32 %v3842, 4294901760
    %v3844 = vsub.f32 %v3842, %v3843
    %v3845 = vand.u32 %v3844, 4294901760
    %3846 = vmatpush1.msra.mxu0 %v3845
    %3847 = vmatprep.subr.mxu0 0.0
    %3848 = vmatpush2.msra.mxu0 0.0
    %3849 = vmatprep.subr.mxu0 0.0
    %3850 = vmatpush2.msra.mxu0 0.0
    %3851 = vmatprep.subr.mxu0 0.0
    %3852 = vmatpush2.msra.mxu0 0.0
    %3853 = vmatprep.subr.mxu0 0.0
    %3854 = vmatpush2.msra.mxu0 0.0
    %3855 = vmatprep.subr.mxu0 0.0
    %3856 = vmatpush2.msra.mxu0 0.0
    %3857 = vmatprep.subr.mxu0 0.0
    %3858 = vmatpush2.msra.mxu0 0.0
    %3859 = vmatprep.subr.mxu0 0.0
    %3860 = vmatpush2.msra.mxu0 0.0
    %3861 = vmatprep.subr.mxu0 0.0
    %3862 = vmatpush2.msra.mxu0 0.0
    %3863 = vmatprep.subr.mxu0 0.0
    %3864 = vmatpush2.msra.mxu0 0.0
    %3865 = vmatprep.subr.mxu0 0.0
    %3866 = vmatpush2.msra.mxu0 0.0
    %3867 = vmatprep.subr.mxu0 0.0
    %3868 = vmatpush2.msra.mxu0 0.0
    %3869 = vmatprep.subr.mxu0 0.0
    %3870 = vmatpush2.msra.mxu0 0.0
    %3871 = vmatprep.subr.mxu0 0.0
    %3872 = vmatpush2.msra.mxu0 0.0
    %3873 = vmatprep.subr.mxu0 0.0
    %3874 = vmatpush2.msra.mxu0 0.0
    %3875 = vmatprep.subr.mxu0 0.0
    %3876 = vmatpush2.msra.mxu0 0.0
    %3877 = vmatprep.subr.mxu0 0.0
    %3878 = vmatpush2.msra.mxu0 0.0
    %3879 = vmatprep.mubr.f32.mxu0 0.0
    %v3880 = vand.u32 %v3677, 4294901760
    %3881 = vmatmul.mubr.f32.gmra.mxu0 %v3880
    %v3882 = vpop.f32.mrf.mxu0
    %v3883 = vadd.f32 %v3762, %v3882
    %v3884 = vpop.f32.mrf.mxu0
    %3885 = vmatprep.mubr.f32.mxu0 0.0
    %v3886 = vand.u32 %v3680, 4294901760
    %3887 = vmatmul.mubr.f32.gmra.mxu0 %v3886
    %v3888 = vpop.f32.mrf.mxu0
    %v3889 = vadd.f32 %v3772, %v3888
    %v3890 = vpop.f32.mrf.mxu0
    %3891 = vdwg.mxu0
    %3892 = vmatprep.subr.mxu0 0.0
    %3893 = vmatpush1.msra.mxu0 0.0
    %3894 = vmatprep.subr.mxu0 0.0
    %3895 = vmatpush1.msra.mxu0 0.0
    %3896 = vmatprep.subr.mxu0 0.0
    %3897 = vmatpush1.msra.mxu0 0.0
    %3898 = vmatprep.subr.mxu0 0.0
    %3899 = vmatpush1.msra.mxu0 0.0
    %3900 = vmatprep.subr.mxu0 0.0
    %3901 = vmatpush1.msra.mxu0 0.0
    %3902 = vmatprep.subr.mxu0 0.0
    %3903 = vmatpush1.msra.mxu0 0.0
    %3904 = vmatprep.subr.mxu0 0.0
    %3905 = vmatpush1.msra.mxu0 0.0
    %3906 = vmatprep.subr.mxu0 0.0
    %3907 = vmatpush1.msra.mxu0 0.0
    %3908 = vmatprep.subr.mxu0 0.0
    %v3909 = vand.u32 %v40, 4294901760
    %v3910 = vsub.f32 %v40, %v3909
    %3911 = vmatpush1.msra.mxu0 %v3910
    %3912 = vmatprep.subr.mxu0 0.0
    %v3913 = vand.u32 %v39, 4294901760
    %v3914 = vsub.f32 %v39, %v3913
    %3915 = vmatpush1.msra.mxu0 %v3914
    %3916 = vmatprep.subr.mxu0 0.0
    %v3917 = vand.u32 %v38, 4294901760
    %v3918 = vsub.f32 %v38, %v3917
    %3919 = vmatpush1.msra.mxu0 %v3918
    %3920 = vmatprep.subr.mxu0 0.0
    %v3921 = vand.u32 %v37, 4294901760
    %v3922 = vsub.f32 %v37, %v3921
    %3923 = vmatpush1.msra.mxu0 %v3922
    %3924 = vmatprep.subr.mxu0 0.0
    %v3925 = vand.u32 %v36, 4294901760
    %v3926 = vsub.f32 %v36, %v3925
    %3927 = vmatpush1.msra.mxu0 %v3926
    %3928 = vmatprep.subr.mxu0 0.0
    %v3929 = vand.u32 %v35, 4294901760
    %v3930 = vsub.f32 %v35, %v3929
    %3931 = vmatpush1.msra.mxu0 %v3930
    %3932 = vmatprep.subr.mxu0 0.0
    %v3933 = vand.u32 %v34, 4294901760
    %v3934 = vsub.f32 %v34, %v3933
    %3935 = vmatpush1.msra.mxu0 %v3934
    %3936 = vmatprep.subr.mxu0 0.0
    %v3937 = vand.u32 %v33, 4294901760
    %v3938 = vsub.f32 %v33, %v3937
    %3939 = vmatpush1.msra.mxu0 %v3938
    %3940 = vmatprep.subr.mxu0 0.0
    %3941 = vmatpush2.msra.mxu0 0.0
    %3942 = vmatprep.subr.mxu0 0.0
    %3943 = vmatpush2.msra.mxu0 0.0
    %3944 = vmatprep.subr.mxu0 0.0
    %3945 = vmatpush2.msra.mxu0 0.0
    %3946 = vmatprep.subr.mxu0 0.0
    %3947 = vmatpush2.msra.mxu0 0.0
    %3948 = vmatprep.subr.mxu0 0.0
    %3949 = vmatpush2.msra.mxu0 0.0
    %3950 = vmatprep.subr.mxu0 0.0
    %3951 = vmatpush2.msra.mxu0 0.0
    %3952 = vmatprep.subr.mxu0 0.0
    %3953 = vmatpush2.msra.mxu0 0.0
    %3954 = vmatprep.subr.mxu0 0.0
    %3955 = vmatpush2.msra.mxu0 0.0
    %3956 = vmatprep.subr.mxu0 0.0
    %3957 = vmatpush2.msra.mxu0 0.0
    %3958 = vmatprep.subr.mxu0 0.0
    %3959 = vmatpush2.msra.mxu0 0.0
    %3960 = vmatprep.subr.mxu0 0.0
    %3961 = vmatpush2.msra.mxu0 0.0
    %3962 = vmatprep.subr.mxu0 0.0
    %3963 = vmatpush2.msra.mxu0 0.0
    %3964 = vmatprep.subr.mxu0 0.0
    %3965 = vmatpush2.msra.mxu0 0.0
    %3966 = vmatprep.subr.mxu0 0.0
    %3967 = vmatpush2.msra.mxu0 0.0
    %3968 = vmatprep.subr.mxu0 0.0
    %3969 = vmatpush2.msra.mxu0 0.0
    %3970 = vmatprep.subr.mxu0 0.0
    %3971 = vmatpush2.msra.mxu0 0.0
    %3972 = vmatprep.mubr.f32.mxu0 0.0
    %v3973 = vand.u32 %v3677, 4294901760
    %v3974 = vsub.f32 %v3677, %v3973
    %3975 = vmatmul.mubr.f32.gmra.mxu0 %v3974
    %v3976 = vpop.f32.mrf.mxu0
    %v3977 = vadd.f32 %v3883, %v3976
    %v3978 = vpop.f32.mrf.mxu0
    %3979 = vmatprep.mubr.f32.mxu0 0.0
    %v3980 = vand.u32 %v3680, 4294901760
    %v3981 = vsub.f32 %v3680, %v3980
    %3982 = vmatmul.mubr.f32.gmra.mxu0 %v3981
    %v3983 = vpop.f32.mrf.mxu0
    %v3984 = vadd.f32 %v3889, %v3983
    %v3985 = vpop.f32.mrf.mxu0
    %3986 = vdwg.mxu0
    %3987 = vmatprep.subr.mxu0 0.0
    %3988 = vmatpush1.msra.mxu0 0.0
    %3989 = vmatprep.subr.mxu0 0.0
    %3990 = vmatpush1.msra.mxu0 0.0
    %3991 = vmatprep.subr.mxu0 0.0
    %3992 = vmatpush1.msra.mxu0 0.0
    %3993 = vmatprep.subr.mxu0 0.0
    %3994 = vmatpush1.msra.mxu0 0.0
    %3995 = vmatprep.subr.mxu0 0.0
    %3996 = vmatpush1.msra.mxu0 0.0
    %3997 = vmatprep.subr.mxu0 0.0
    %3998 = vmatpush1.msra.mxu0 0.0
    %3999 = vmatprep.subr.mxu0 0.0
    %4000 = vmatpush1.msra.mxu0 0.0
    %4001 = vmatprep.subr.mxu0 0.0
    %4002 = vmatpush1.msra.mxu0 0.0
    %4003 = vmatprep.subr.mxu0 0.0
    %v4004 = vand.u32 %v40, 4294901760
    %4005 = vmatpush1.msra.mxu0 %v4004
    %4006 = vmatprep.subr.mxu0 0.0
    %v4007 = vand.u32 %v39, 4294901760
    %4008 = vmatpush1.msra.mxu0 %v4007
    %4009 = vmatprep.subr.mxu0 0.0
    %v4010 = vand.u32 %v38, 4294901760
    %4011 = vmatpush1.msra.mxu0 %v4010
    %4012 = vmatprep.subr.mxu0 0.0
    %v4013 = vand.u32 %v37, 4294901760
    %4014 = vmatpush1.msra.mxu0 %v4013
    %4015 = vmatprep.subr.mxu0 0.0
    %v4016 = vand.u32 %v36, 4294901760
    %4017 = vmatpush1.msra.mxu0 %v4016
    %4018 = vmatprep.subr.mxu0 0.0
    %v4019 = vand.u32 %v35, 4294901760
    %4020 = vmatpush1.msra.mxu0 %v4019
    %4021 = vmatprep.subr.mxu0 0.0
    %v4022 = vand.u32 %v34, 4294901760
    %4023 = vmatpush1.msra.mxu0 %v4022
    %4024 = vmatprep.subr.mxu0 0.0
    %v4025 = vand.u32 %v33, 4294901760
    %4026 = vmatpush1.msra.mxu0 %v4025
    %4027 = vmatprep.subr.mxu0 0.0
    %4028 = vmatpush2.msra.mxu0 0.0
    %4029 = vmatprep.subr.mxu0 0.0
    %4030 = vmatpush2.msra.mxu0 0.0
    %4031 = vmatprep.subr.mxu0 0.0
    %4032 = vmatpush2.msra.mxu0 0.0
    %4033 = vmatprep.subr.mxu0 0.0
    %4034 = vmatpush2.msra.mxu0 0.0
    %4035 = vmatprep.subr.mxu0 0.0
    %4036 = vmatpush2.msra.mxu0 0.0
    %4037 = vmatprep.subr.mxu0 0.0
    %4038 = vmatpush2.msra.mxu0 0.0
    %4039 = vmatprep.subr.mxu0 0.0
    %4040 = vmatpush2.msra.mxu0 0.0
    %4041 = vmatprep.subr.mxu0 0.0
    %4042 = vmatpush2.msra.mxu0 0.0
    %4043 = vmatprep.subr.mxu0 0.0
    %4044 = vmatpush2.msra.mxu0 0.0
    %4045 = vmatprep.subr.mxu0 0.0
    %4046 = vmatpush2.msra.mxu0 0.0
    %4047 = vmatprep.subr.mxu0 0.0
    %4048 = vmatpush2.msra.mxu0 0.0
    %4049 = vmatprep.subr.mxu0 0.0
    %4050 = vmatpush2.msra.mxu0 0.0
    %4051 = vmatprep.subr.mxu0 0.0
    %4052 = vmatpush2.msra.mxu0 0.0
    %4053 = vmatprep.subr.mxu0 0.0
    %4054 = vmatpush2.msra.mxu0 0.0
    %4055 = vmatprep.subr.mxu0 0.0
    %4056 = vmatpush2.msra.mxu0 0.0
    %4057 = vmatprep.subr.mxu0 0.0
    %4058 = vmatpush2.msra.mxu0 0.0
    %4059 = vmatprep.mubr.f32.mxu0 0.0
    %v4060 = vand.u32 %v3677, 4294901760
    %v4061 = vsub.f32 %v3677, %v4060
    %v4062 = vand.u32 %v4061, 4294901760
    %4063 = vmatmul.mubr.f32.gmra.mxu0 %v4062
    %v4064 = vpop.f32.mrf.mxu0
    %v4065 = vadd.f32 %v3977, %v4064
    %v4066 = vpop.f32.mrf.mxu0
    %4067 = vmatprep.mubr.f32.mxu0 0.0
    %v4068 = vand.u32 %v3680, 4294901760
    %v4069 = vsub.f32 %v3680, %v4068
    %v4070 = vand.u32 %v4069, 4294901760
    %4071 = vmatmul.mubr.f32.gmra.mxu0 %v4070
    %v4072 = vpop.f32.mrf.mxu0
    %v4073 = vadd.f32 %v3984, %v4072
    %v4074 = vpop.f32.mrf.mxu0
    %4075 = vdwg.mxu0
    %4076 = vmatprep.subr.mxu0 0.0
    %4077 = vmatpush1.msra.mxu0 0.0
    %4078 = vmatprep.subr.mxu0 0.0
    %4079 = vmatpush1.msra.mxu0 0.0
    %4080 = vmatprep.subr.mxu0 0.0
    %4081 = vmatpush1.msra.mxu0 0.0
    %4082 = vmatprep.subr.mxu0 0.0
    %4083 = vmatpush1.msra.mxu0 0.0
    %4084 = vmatprep.subr.mxu0 0.0
    %4085 = vmatpush1.msra.mxu0 0.0
    %4086 = vmatprep.subr.mxu0 0.0
    %4087 = vmatpush1.msra.mxu0 0.0
    %4088 = vmatprep.subr.mxu0 0.0
    %4089 = vmatpush1.msra.mxu0 0.0
    %4090 = vmatprep.subr.mxu0 0.0
    %4091 = vmatpush1.msra.mxu0 0.0
    %4092 = vmatprep.subr.mxu0 0.0
    %v4093 = vand.u32 %v40, 4294901760
    %v4094 = vsub.f32 %v40, %v4093
    %v4095 = vand.u32 %v4094, 4294901760
    %4096 = vmatpush1.msra.mxu0 %v4095
    %4097 = vmatprep.subr.mxu0 0.0
    %v4098 = vand.u32 %v39, 4294901760
    %v4099 = vsub.f32 %v39, %v4098
    %v4100 = vand.u32 %v4099, 4294901760
    %4101 = vmatpush1.msra.mxu0 %v4100
    %4102 = vmatprep.subr.mxu0 0.0
    %v4103 = vand.u32 %v38, 4294901760
    %v4104 = vsub.f32 %v38, %v4103
    %v4105 = vand.u32 %v4104, 4294901760
    %4106 = vmatpush1.msra.mxu0 %v4105
    %4107 = vmatprep.subr.mxu0 0.0
    %v4108 = vand.u32 %v37, 4294901760
    %v4109 = vsub.f32 %v37, %v4108
    %v4110 = vand.u32 %v4109, 4294901760
    %4111 = vmatpush1.msra.mxu0 %v4110
    %4112 = vmatprep.subr.mxu0 0.0
    %v4113 = vand.u32 %v36, 4294901760
    %v4114 = vsub.f32 %v36, %v4113
    %v4115 = vand.u32 %v4114, 4294901760
    %4116 = vmatpush1.msra.mxu0 %v4115
    %4117 = vmatprep.subr.mxu0 0.0
    %v4118 = vand.u32 %v35, 4294901760
    %v4119 = vsub.f32 %v35, %v4118
    %v4120 = vand.u32 %v4119, 4294901760
    %4121 = vmatpush1.msra.mxu0 %v4120
    %4122 = vmatprep.subr.mxu0 0.0
    %v4123 = vand.u32 %v34, 4294901760
    %v4124 = vsub.f32 %v34, %v4123
    %v4125 = vand.u32 %v4124, 4294901760
    %4126 = vmatpush1.msra.mxu0 %v4125
    %4127 = vmatprep.subr.mxu0 0.0
    %v4128 = vand.u32 %v33, 4294901760
    %v4129 = vsub.f32 %v33, %v4128
    %v4130 = vand.u32 %v4129, 4294901760
    %4131 = vmatpush1.msra.mxu0 %v4130
    %4132 = vmatprep.subr.mxu0 0.0
    %4133 = vmatpush2.msra.mxu0 0.0
    %4134 = vmatprep.subr.mxu0 0.0
    %4135 = vmatpush2.msra.mxu0 0.0
    %4136 = vmatprep.subr.mxu0 0.0
    %4137 = vmatpush2.msra.mxu0 0.0
    %4138 = vmatprep.subr.mxu0 0.0
    %4139 = vmatpush2.msra.mxu0 0.0
    %4140 = vmatprep.subr.mxu0 0.0
    %4141 = vmatpush2.msra.mxu0 0.0
    %4142 = vmatprep.subr.mxu0 0.0
    %4143 = vmatpush2.msra.mxu0 0.0
    %4144 = vmatprep.subr.mxu0 0.0
    %4145 = vmatpush2.msra.mxu0 0.0
    %4146 = vmatprep.subr.mxu0 0.0
    %4147 = vmatpush2.msra.mxu0 0.0
    %4148 = vmatprep.subr.mxu0 0.0
    %4149 = vmatpush2.msra.mxu0 0.0
    %4150 = vmatprep.subr.mxu0 0.0
    %4151 = vmatpush2.msra.mxu0 0.0
    %4152 = vmatprep.subr.mxu0 0.0
    %4153 = vmatpush2.msra.mxu0 0.0
    %4154 = vmatprep.subr.mxu0 0.0
    %4155 = vmatpush2.msra.mxu0 0.0
    %4156 = vmatprep.subr.mxu0 0.0
    %4157 = vmatpush2.msra.mxu0 0.0
    %4158 = vmatprep.subr.mxu0 0.0
    %4159 = vmatpush2.msra.mxu0 0.0
    %4160 = vmatprep.subr.mxu0 0.0
    %4161 = vmatpush2.msra.mxu0 0.0
    %4162 = vmatprep.subr.mxu0 0.0
    %4163 = vmatpush2.msra.mxu0 0.0
    %4164 = vmatprep.mubr.f32.mxu0 0.0
    %v4165 = vand.u32 %v3677, 4294901760
    %4166 = vmatmul.mubr.f32.gmra.mxu0 %v4165
    %v4167 = vpop.f32.mrf.mxu0
    %v4168 = vadd.f32 %v4065, %v4167
    %v4169 = vpop.f32.mrf.mxu0
    %4170 = vmatprep.mubr.f32.mxu0 0.0
    %v4171 = vand.u32 %v3680, 4294901760
    %4172 = vmatmul.mubr.f32.gmra.mxu0 %v4171
    %v4173 = vpop.f32.mrf.mxu0
    %v4174 = vadd.f32 %v4073, %v4173
    %v4175 = vpop.f32.mrf.mxu0
    %4176 = vdwg.mxu0
    %4177 = vmatprep.subr.mxu0 0.0
    %4178 = vmatpush1.msra.mxu0 0.0
    %4179 = vmatprep.subr.mxu0 0.0
    %4180 = vmatpush1.msra.mxu0 0.0
    %4181 = vmatprep.subr.mxu0 0.0
    %4182 = vmatpush1.msra.mxu0 0.0
    %4183 = vmatprep.subr.mxu0 0.0
    %4184 = vmatpush1.msra.mxu0 0.0
    %4185 = vmatprep.subr.mxu0 0.0
    %4186 = vmatpush1.msra.mxu0 0.0
    %4187 = vmatprep.subr.mxu0 0.0
    %4188 = vmatpush1.msra.mxu0 0.0
    %4189 = vmatprep.subr.mxu0 0.0
    %4190 = vmatpush1.msra.mxu0 0.0
    %4191 = vmatprep.subr.mxu0 0.0
    %4192 = vmatpush1.msra.mxu0 0.0
    %4193 = vmatprep.subr.mxu0 0.0
    %v4194 = vand.u32 %v40, 4294901760
    %4195 = vmatpush1.msra.mxu0 %v4194
    %4196 = vmatprep.subr.mxu0 0.0
    %v4197 = vand.u32 %v39, 4294901760
    %4198 = vmatpush1.msra.mxu0 %v4197
    %4199 = vmatprep.subr.mxu0 0.0
    %v4200 = vand.u32 %v38, 4294901760
    %4201 = vmatpush1.msra.mxu0 %v4200
    %4202 = vmatprep.subr.mxu0 0.0
    %v4203 = vand.u32 %v37, 4294901760
    %4204 = vmatpush1.msra.mxu0 %v4203
    %4205 = vmatprep.subr.mxu0 0.0
    %v4206 = vand.u32 %v36, 4294901760
    %4207 = vmatpush1.msra.mxu0 %v4206
    %4208 = vmatprep.subr.mxu0 0.0
    %v4209 = vand.u32 %v35, 4294901760
    %4210 = vmatpush1.msra.mxu0 %v4209
    %4211 = vmatprep.subr.mxu0 0.0
    %v4212 = vand.u32 %v34, 4294901760
    %4213 = vmatpush1.msra.mxu0 %v4212
    %4214 = vmatprep.subr.mxu0 0.0
    %v4215 = vand.u32 %v33, 4294901760
    %4216 = vmatpush1.msra.mxu0 %v4215
    %4217 = vmatprep.subr.mxu0 0.0
    %4218 = vmatpush2.msra.mxu0 0.0
    %4219 = vmatprep.subr.mxu0 0.0
    %4220 = vmatpush2.msra.mxu0 0.0
    %4221 = vmatprep.subr.mxu0 0.0
    %4222 = vmatpush2.msra.mxu0 0.0
    %4223 = vmatprep.subr.mxu0 0.0
    %4224 = vmatpush2.msra.mxu0 0.0
    %4225 = vmatprep.subr.mxu0 0.0
    %4226 = vmatpush2.msra.mxu0 0.0
    %4227 = vmatprep.subr.mxu0 0.0
    %4228 = vmatpush2.msra.mxu0 0.0
    %4229 = vmatprep.subr.mxu0 0.0
    %4230 = vmatpush2.msra.mxu0 0.0
    %4231 = vmatprep.subr.mxu0 0.0
    %4232 = vmatpush2.msra.mxu0 0.0
    %4233 = vmatprep.subr.mxu0 0.0
    %4234 = vmatpush2.msra.mxu0 0.0
    %4235 = vmatprep.subr.mxu0 0.0
    %4236 = vmatpush2.msra.mxu0 0.0
    %4237 = vmatprep.subr.mxu0 0.0
    %4238 = vmatpush2.msra.mxu0 0.0
    %4239 = vmatprep.subr.mxu0 0.0
    %4240 = vmatpush2.msra.mxu0 0.0
    %4241 = vmatprep.subr.mxu0 0.0
    %4242 = vmatpush2.msra.mxu0 0.0
    %4243 = vmatprep.subr.mxu0 0.0
    %4244 = vmatpush2.msra.mxu0 0.0
    %4245 = vmatprep.subr.mxu0 0.0
    %4246 = vmatpush2.msra.mxu0 0.0
    %4247 = vmatprep.subr.mxu0 0.0
    %4248 = vmatpush2.msra.mxu0 0.0
    %4249 = vmatprep.mubr.f32.mxu0 0.0
    %v4250 = vand.u32 %v3677, 4294901760
    %4251 = vmatmul.mubr.f32.gmra.mxu0 %v4250
    %v4252 = vpop.f32.mrf.mxu0
    %v4253 = vadd.f32 %v4168, %v4252
    %v4254 = vpop.f32.mrf.mxu0
    %4255 = vmatprep.mubr.f32.mxu0 0.0
    %v4256 = vand.u32 %v3680, 4294901760
    %4257 = vmatmul.mubr.f32.gmra.mxu0 %v4256
    %v4258 = vpop.f32.mrf.mxu0
    %v4259 = vadd.f32 %v4174, %v4258
    %v4260 = vpop.f32.mrf.mxu0
    %4261 = vdwg.mxu0
    %v4262 = vadd.f32 %v3092, %v4253
    %v4263 = vadd.f32 %v3093, %v4259
    %4264 = vrot.lane.b32.xlu0 %v3138, 64
    %v4265 = vpop.permute.xlu0 %4264
    %v4267 = vadd.f32 %v4262, %v4265
    %v4268 = vadd.f32 %v4263, %v4265
    %4269 = vst.msk [vmem:[#allocation2] sm:$0xff] %vm42, %v4267
    %4270 = vst.msk [vmem:[#allocation2 + $0x8] sm:$0xff] %vm42, %v4268
    // Predicated region
    $region22: #{encoder_block.1} parent=1 // pred_check
      _
    $region23: #{encoder_block.1} parent=1 // pred_check_branch
      %4272 = sbr.rel (0) target = $region25
    $region24: #{encoder_block.1} parent=1 // pred_region
      %s4274 = ssub.s32 256, 256
      %4275 = vsyncadd [#allocation3], %s4274
      %s4276 = sshll.u32 [#allocation2], 4
      %s4277 = int_to_ptr.vmem [resolvable:$true] %s4276
      %4282 = dma.vmem_to_hbm [thread:$0]  %s4277, 256, %s5, [#allocation3], 128, 128, 8
    $region25: #{encoder_block.1} parent=1 // pred_fallthru
      _
    // Predicated region
    $region26: #{encoder_block.1} parent=1 // pred_check
      _
    $region27: #{encoder_block.1} parent=1 // pred_check_branch
      %4284 = sbr.rel (0) target = $region29
    $region28: #{encoder_block.1} parent=1 // pred_region
      %4285 = dma.done [#allocation3], 256
    $region29: #{encoder_block.1} parent=1 // pred_fallthru
      _
    %4286 = vsyncpa [#allocation3], 1

</llo_original>
